<compile_context>
chip_gen: v7x
topology: tpu7x:2x2x1
jax: 0.10.0
libtpu: 0.0.40
codegen_flags: <defaults>
</compile_context>

<pallas_src>
import jax
import jax.numpy as jnp
from jax.experimental import pallas as pl
from jax.experimental.pallas import tpu as pltpu


def _round_up(x, m):
    return ((x + m - 1) // m) * m


# --------------------------------------------------------------------------
# Fused kernel: one grid step = one batch element.
#   refs = (x_ref, w_ref_0 ... w_ref_{n-1}, o_ref, pad_ref)
#   x_ref  : (1, H, W, Cin)        NHWC input tile
#   w_ref_l: (9*Cpad, Cpad)        im2col weight matrix (zero-padded channels)
#   o_ref  : (1, H//2, W//2, Cpad) pooled output (lane-dense, channel-padded)
#   pad_ref: (H+2, W+2, Cpad)      VMEM halo scratch reused across layers
# --------------------------------------------------------------------------
def _make_vgg_block_kernel(n_convs, H, W, Cin, Cpad):
    Ho, Wo = H // 2, W // 2

    def kernel(*refs):
        x_ref = refs[0]
        w_refs = refs[1:1 + n_convs]
        o_ref = refs[1 + n_convs]
        pad_ref = refs[2 + n_convs]

        # Fresh zeroed halo scratch each grid step (spatial border + channel tail).
        pad_ref[...] = jnp.zeros(pad_ref.shape, pad_ref.dtype)
        pad_ref[1:H + 1, 1:W + 1, 0:Cin] = x_ref[0].astype(jnp.float32)

        for li in range(n_convs):
            # im2col: 9 shifted (H, W, Cpad) views -> (H*W, 9*Cpad) patch matrix.
            cols = []
            for kh in range(3):
                for kw in range(3):
                    cols.append(
                        pad_ref[kh:kh + H, kw:kw + W, :].reshape(H * W, Cpad))
            patches = jnp.concatenate(cols, axis=1)            # (H*W, 9*Cpad)

            # Single MXU matmul (K = 9*Cpad) + fused ReLU.
            act = jnp.maximum(
                jnp.dot(patches, w_refs[li][...],
                        preferred_element_type=jnp.float32),
                0.0)                                            # (H*W, Cpad)

            if li + 1 < n_convs:
                # Keep activation resident in VMEM for the next layer.
                pad_ref[1:H + 1, 1:W + 1, :] = act.reshape(H, W, Cpad)
            else:
                # Fused 2x2 / stride-2 max-pool epilogue (no strided loads).
                t = act.reshape(H, Wo, 2, Cpad)
                t = jnp.maximum(t[:, :, 0, :], t[:, :, 1, :])   # pool along W
                t = t.reshape(Ho, 2, Wo, Cpad)
                t = jnp.maximum(t[:, 0, :, :], t[:, 1, :, :])   # pool along H
                o_ref[0] = t.astype(o_ref.dtype)                # (Ho, Wo, Cpad)

    return kernel


# --------------------------------------------------------------------------
# VGG_Block forward (use_batch_norm=False): [conv3x3+ReLU] * n_convs -> maxpool
# --------------------------------------------------------------------------
@jax.jit
def vgg_block_forward(x_nchw, weights):
    # weights: tuple of HWIO (3, 3, Cin_l, Cout) arrays, one per conv layer.
    n_convs = len(weights)
    N, Cin, H, W = x_nchw.shape
    Cout = weights[-1].shape[-1]
    assert H % 2 == 0 and W % 2 == 0
    Ho, Wo = H // 2, W // 2

    # Lane-dense channel width shared by every layer.
    Cpad = _round_up(max([Cin] + [int(w.shape[-1]) for w in weights]), 128)

    # Pack weights once (XLA): HWIO -> zero-padded (9*Cpad, Cpad) im2col layout.
    w_mats = []
    for w in weights:
        _, _, ci, co = w.shape
        wp = jnp.zeros((3, 3, Cpad, Cpad), jnp.float32).at[:, :, :ci, :co].set(
            w.astype(jnp.float32))
        w_mats.append(wp.reshape(9 * Cpad, Cpad))

    x_nhwc = jnp.transpose(x_nchw, (0, 2, 3, 1))               # NCHW -> NHWC

    kernel = _make_vgg_block_kernel(n_convs, H, W, Cin, Cpad)

    out = pl.pallas_call(
        kernel,
        out_shape=jax.ShapeDtypeStruct((N, Ho, Wo, Cpad), x_nchw.dtype),
        grid=(N,),
        in_specs=[pl.BlockSpec((1, H, W, Cin), lambda n: (n, 0, 0, 0))]
        + [pl.BlockSpec((9 * Cpad, Cpad), lambda n: (0, 0))] * n_convs,
        out_specs=pl.BlockSpec((1, Ho, Wo, Cpad), lambda n: (n, 0, 0, 0)),
        scratch_shapes=[pltpu.VMEM((H + 2, W + 2, Cpad), jnp.float32)],
        compiler_params=pltpu.CompilerParams(
            dimension_semantics=("parallel",)),
    )(x_nhwc, *w_mats)

    out = out[..., :Cout]                                      # drop lane padding
    return jnp.transpose(out, (0, 3, 1, 2))                    # NHWC -> NCHW


def make_weights(key, in_channels, out_channels, n_convs, dtype=jnp.float32):
    """Deterministic Kaiming-style init; returns tuple of HWIO weights."""
    weights = []
    cin = in_channels
    for _ in range(n_convs):
        key, sub = jax.random.split(key)
        fan_in = cin * 3 * 3
        w = jax.random.normal(sub, (3, 3, cin, out_channels), dtype) * (2.0 / fan_in) ** 0.5
        weights.append(w)
        cin = out_channels
    return tuple(weights)


def _reference_forward(x_nchw, weights):
    """Pure-JAX reference (lax conv + reduce_window) for verification."""
    x = x_nchw
    for w in weights:
        x = jax.lax.conv_general_dilated(
            x, w, window_strides=(1, 1), padding=((1, 1), (1, 1)),
            dimension_numbers=("NCHW", "HWIO", "NCHW"),
            precision=jax.lax.Precision.HIGHEST)
        x = jnp.maximum(x, 0.0)
    x = jax.lax.reduce_window(x, -jnp.inf, jax.lax.max,
                              (1, 1, 2, 2), (1, 1, 2, 2), "VALID")
    return x


if __name__ == "__main__":
    key = jax.random.PRNGKey(0)
    k_x, k_w = jax.random.split(key)

    # VGG_Block(in_channels=4, out_channels=8, n_convs=2)
    N, Cin, H, W = 2, 4, 16, 16
    Cout, n_convs = 8, 2

    x = jax.random.normal(k_x, (N, Cin, H, W), jnp.float32)
    weights = make_weights(k_w, Cin, Cout, n_convs)

    out = jax.block_until_ready(vgg_block_forward(x, weights))

    ref = _reference_forward(x, weights)
    assert out.shape == (N, Cout, H // 2, W // 2), out.shape
    max_err = float(jnp.max(jnp.abs(out - ref)))
    assert jnp.allclose(out, ref, atol=2e-3, rtol=2e-3), f"mismatch vs reference, max_err={max_err}"

    print("KERNEL_OK")
</pallas_src>

<mosaic_0001>
module attributes {stable_mosaic.version = 11 : i64} {
  func.func @kernel(%arg0: i32, %arg1: memref<1x16x16x4xf32, #tpu.memory_space<vmem>>, %arg2: memref<1152x128xf32, #tpu.memory_space<vmem>>, %arg3: memref<1152x128xf32, #tpu.memory_space<vmem>>, %arg4: memref<1x8x8x128xf32, #tpu.memory_space<vmem>>, %arg5: memref<18x18x128xf32, #tpu.memory_space<vmem>>) attributes {dimension_semantics = [#tpu.dimension_semantics<parallel>], iteration_bounds = array<i64: 2>, scalar_prefetch = 0 : i64, scratch_operands = 1 : i64, tpu.core_type = #tpu.core_type<tc>, window_params = [{transform_indices = @transform_0, window_bounds = array<i64: 1, 16, 16, 4>}, {pipeline_mode = #tpu.pipeline_mode<synchronous>, transform_indices = @transform_1, window_bounds = array<i64: 1152, 128>}, {pipeline_mode = #tpu.pipeline_mode<synchronous>, transform_indices = @transform_2, window_bounds = array<i64: 1152, 128>}, {transform_indices = @transform_3, window_bounds = array<i64: 1, 8, 8, 128>}]} {
    %cst = arith.constant 0.000000e+00 : f32
    %0 = vector.broadcast %cst : f32 to vector<18x18x128xf32>
    %c0 = arith.constant 0 : index
    %c0_0 = arith.constant 0 : index
    %c0_1 = arith.constant 0 : index
    %1 = vector.load %arg5[%c0, %c0_0, %c0_1] : memref<18x18x128xf32, #tpu.memory_space<vmem>>, vector<18x18x128xf32>
    tpu.vector_store %arg5[%c0, %c0_0, %c0_1], %0 {strides = array<i32>} : memref<18x18x128xf32, #tpu.memory_space<vmem>>, vector<18x18x128xf32>,
    %c0_2 = arith.constant 0 : index
    %c0_3 = arith.constant 0 : index
    %c0_4 = arith.constant 0 : index
    %c0_5 = arith.constant 0 : index
    %2 = vector.load %arg1[%c0_2, %c0_3, %c0_4, %c0_5] : memref<1x16x16x4xf32, #tpu.memory_space<vmem>>, vector<1x16x16x4xf32>
    %3 = vector.shape_cast %2 : vector<1x16x16x4xf32> to vector<16x16x4xf32>
    %c1 = arith.constant 1 : index
    %c1_6 = arith.constant 1 : index
    %c0_7 = arith.constant 0 : index
    %4 = vector.load %arg5[%c1, %c1_6, %c0_7] : memref<18x18x128xf32, #tpu.memory_space<vmem>>, vector<16x16x4xf32>
    tpu.vector_store %arg5[%c1, %c1_6, %c0_7], %3 {strides = array<i32>} : memref<18x18x128xf32, #tpu.memory_space<vmem>>, vector<16x16x4xf32>,
    %c0_8 = arith.constant 0 : index
    %c0_9 = arith.constant 0 : index
    %c0_10 = arith.constant 0 : index
    %5 = vector.load %arg5[%c0_8, %c0_9, %c0_10] : memref<18x18x128xf32, #tpu.memory_space<vmem>>, vector<16x16x128xf32>
    %6 = vector.shape_cast %5 : vector<16x16x128xf32> to vector<256x128xf32>
    %c0_11 = arith.constant 0 : index
    %c1_12 = arith.constant 1 : index
    %c0_13 = arith.constant 0 : index
    %7 = vector.load %arg5[%c0_11, %c1_12, %c0_13] : memref<18x18x128xf32, #tpu.memory_space<vmem>>, vector<16x16x128xf32>
    %8 = vector.shape_cast %7 : vector<16x16x128xf32> to vector<256x128xf32>
    %c0_14 = arith.constant 0 : index
    %c2 = arith.constant 2 : index
    %c0_15 = arith.constant 0 : index
    %9 = vector.load %arg5[%c0_14, %c2, %c0_15] : memref<18x18x128xf32, #tpu.memory_space<vmem>>, vector<16x16x128xf32>
    %10 = vector.shape_cast %9 : vector<16x16x128xf32> to vector<256x128xf32>
    %c1_16 = arith.constant 1 : index
    %c0_17 = arith.constant 0 : index
    %c0_18 = arith.constant 0 : index
    %11 = vector.load %arg5[%c1_16, %c0_17, %c0_18] : memref<18x18x128xf32, #tpu.memory_space<vmem>>, vector<16x16x128xf32>
    %12 = vector.shape_cast %11 : vector<16x16x128xf32> to vector<256x128xf32>
    %c1_19 = arith.constant 1 : index
    %c1_20 = arith.constant 1 : index
    %c0_21 = arith.constant 0 : index
    %13 = vector.load %arg5[%c1_19, %c1_20, %c0_21] : memref<18x18x128xf32, #tpu.memory_space<vmem>>, vector<16x16x128xf32>
    %14 = vector.shape_cast %13 : vector<16x16x128xf32> to vector<256x128xf32>
    %c1_22 = arith.constant 1 : index
    %c2_23 = arith.constant 2 : index
    %c0_24 = arith.constant 0 : index
    %15 = vector.load %arg5[%c1_22, %c2_23, %c0_24] : memref<18x18x128xf32, #tpu.memory_space<vmem>>, vector<16x16x128xf32>
    %16 = vector.shape_cast %15 : vector<16x16x128xf32> to vector<256x128xf32>
    %c2_25 = arith.constant 2 : index
    %c0_26 = arith.constant 0 : index
    %c0_27 = arith.constant 0 : index
    %17 = vector.load %arg5[%c2_25, %c0_26, %c0_27] : memref<18x18x128xf32, #tpu.memory_space<vmem>>, vector<16x16x128xf32>
    %18 = vector.shape_cast %17 : vector<16x16x128xf32> to vector<256x128xf32>
    %c2_28 = arith.constant 2 : index
    %c1_29 = arith.constant 1 : index
    %c0_30 = arith.constant 0 : index
    %19 = vector.load %arg5[%c2_28, %c1_29, %c0_30] : memref<18x18x128xf32, #tpu.memory_space<vmem>>, vector<16x16x128xf32>
    %20 = vector.shape_cast %19 : vector<16x16x128xf32> to vector<256x128xf32>
    %c2_31 = arith.constant 2 : index
    %c2_32 = arith.constant 2 : index
    %c0_33 = arith.constant 0 : index
    %21 = vector.load %arg5[%c2_31, %c2_32, %c0_33] : memref<18x18x128xf32, #tpu.memory_space<vmem>>, vector<16x16x128xf32>
    %22 = vector.shape_cast %21 : vector<16x16x128xf32> to vector<256x128xf32>
    %23 = tpu.concatenate %6, %8, %10, %12, %14, %16, %18, %20, %22 in 1 : vector<256x128xf32>, vector<256x128xf32>, vector<256x128xf32>, vector<256x128xf32>, vector<256x128xf32>, vector<256x128xf32>, vector<256x128xf32>, vector<256x128xf32>, vector<256x128xf32> -> vector<256x1152xf32>
    %c0_34 = arith.constant 0 : index
    %c0_35 = arith.constant 0 : index
    %24 = vector.load %arg2[%c0_34, %c0_35] : memref<1152x128xf32, #tpu.memory_space<vmem>>, vector<1152x128xf32>
    %cst_36 = arith.constant dense<0.000000e+00> : vector<256x128xf32>
    %25 = tpu.matmul %23, %24, %cst_36 {dimension_numbers = #tpu.dot_dimension_numbers<[1], [0], [0], [1], [0, 0, 1, 1], [], []>} : vector<256x1152xf32>, vector<1152x128xf32>, vector<256x128xf32> -> vector<256x128xf32>
    %cst_37 = arith.constant 0.000000e+00 : f32
    %26 = vector.broadcast %cst_37 : f32 to vector<256x128xf32>
    %27 = arith.maximumf %25, %26 : vector<256x128xf32>
    %28 = vector.shape_cast %27 : vector<256x128xf32> to vector<16x16x128xf32>
    %c1_38 = arith.constant 1 : index
    %c1_39 = arith.constant 1 : index
    %c0_40 = arith.constant 0 : index
    %29 = vector.load %arg5[%c1_38, %c1_39, %c0_40] : memref<18x18x128xf32, #tpu.memory_space<vmem>>, vector<16x16x128xf32>
    tpu.vector_store %arg5[%c1_38, %c1_39, %c0_40], %28 {strides = array<i32>} : memref<18x18x128xf32, #tpu.memory_space<vmem>>, vector<16x16x128xf32>,
    %c0_41 = arith.constant 0 : index
    %c0_42 = arith.constant 0 : index
    %c0_43 = arith.constant 0 : index
    %30 = vector.load %arg5[%c0_41, %c0_42, %c0_43] : memref<18x18x128xf32, #tpu.memory_space<vmem>>, vector<16x16x128xf32>
    %31 = vector.shape_cast %30 : vector<16x16x128xf32> to vector<256x128xf32>
    %c0_44 = arith.constant 0 : index
    %c1_45 = arith.constant 1 : index
    %c0_46 = arith.constant 0 : index
    %32 = vector.load %arg5[%c0_44, %c1_45, %c0_46] : memref<18x18x128xf32, #tpu.memory_space<vmem>>, vector<16x16x128xf32>
    %33 = vector.shape_cast %32 : vector<16x16x128xf32> to vector<256x128xf32>
    %c0_47 = arith.constant 0 : index
    %c2_48 = arith.constant 2 : index
    %c0_49 = arith.constant 0 : index
    %34 = vector.load %arg5[%c0_47, %c2_48, %c0_49] : memref<18x18x128xf32, #tpu.memory_space<vmem>>, vector<16x16x128xf32>
    %35 = vector.shape_cast %34 : vector<16x16x128xf32> to vector<256x128xf32>
    %c1_50 = arith.constant 1 : index
    %c0_51 = arith.constant 0 : index
    %c0_52 = arith.constant 0 : index
    %36 = vector.load %arg5[%c1_50, %c0_51, %c0_52] : memref<18x18x128xf32, #tpu.memory_space<vmem>>, vector<16x16x128xf32>
    %37 = vector.shape_cast %36 : vector<16x16x128xf32> to vector<256x128xf32>
    %c1_53 = arith.constant 1 : index
    %c1_54 = arith.constant 1 : index
    %c0_55 = arith.constant 0 : index
    %38 = vector.load %arg5[%c1_53, %c1_54, %c0_55] : memref<18x18x128xf32, #tpu.memory_space<vmem>>, vector<16x16x128xf32>
    %39 = vector.shape_cast %38 : vector<16x16x128xf32> to vector<256x128xf32>
    %c1_56 = arith.constant 1 : index
    %c2_57 = arith.constant 2 : index
    %c0_58 = arith.constant 0 : index
    %40 = vector.load %arg5[%c1_56, %c2_57, %c0_58] : memref<18x18x128xf32, #tpu.memory_space<vmem>>, vector<16x16x128xf32>
    %41 = vector.shape_cast %40 : vector<16x16x128xf32> to vector<256x128xf32>
    %c2_59 = arith.constant 2 : index
    %c0_60 = arith.constant 0 : index
    %c0_61 = arith.constant 0 : index
    %42 = vector.load %arg5[%c2_59, %c0_60, %c0_61] : memref<18x18x128xf32, #tpu.memory_space<vmem>>, vector<16x16x128xf32>
    %43 = vector.shape_cast %42 : vector<16x16x128xf32> to vector<256x128xf32>
    %c2_62 = arith.constant 2 : index
    %c1_63 = arith.constant 1 : index
    %c0_64 = arith.constant 0 : index
    %44 = vector.load %arg5[%c2_62, %c1_63, %c0_64] : memref<18x18x128xf32, #tpu.memory_space<vmem>>, vector<16x16x128xf32>
    %45 = vector.shape_cast %44 : vector<16x16x128xf32> to vector<256x128xf32>
    %c2_65 = arith.constant 2 : index
    %c2_66 = arith.constant 2 : index
    %c0_67 = arith.constant 0 : index
    %46 = vector.load %arg5[%c2_65, %c2_66, %c0_67] : memref<18x18x128xf32, #tpu.memory_space<vmem>>, vector<16x16x128xf32>
    %47 = vector.shape_cast %46 : vector<16x16x128xf32> to vector<256x128xf32>
    %48 = tpu.concatenate %31, %33, %35, %37, %39, %41, %43, %45, %47 in 1 : vector<256x128xf32>, vector<256x128xf32>, vector<256x128xf32>, vector<256x128xf32>, vector<256x128xf32>, vector<256x128xf32>, vector<256x128xf32>, vector<256x128xf32>, vector<256x128xf32> -> vector<256x1152xf32>
    %c0_68 = arith.constant 0 : index
    %c0_69 = arith.constant 0 : index
    %49 = vector.load %arg3[%c0_68, %c0_69] : memref<1152x128xf32, #tpu.memory_space<vmem>>, vector<1152x128xf32>
    %cst_70 = arith.constant dense<0.000000e+00> : vector<256x128xf32>
    %50 = tpu.matmul %48, %49, %cst_70 {dimension_numbers = #tpu.dot_dimension_numbers<[1], [0], [0], [1], [0, 0, 1, 1], [], []>} : vector<256x1152xf32>, vector<1152x128xf32>, vector<256x128xf32> -> vector<256x128xf32>
    %cst_71 = arith.constant 0.000000e+00 : f32
    %51 = vector.broadcast %cst_71 : f32 to vector<256x128xf32>
    %52 = arith.maximumf %50, %51 : vector<256x128xf32>
    %53 = vector.shape_cast %52 : vector<256x128xf32> to vector<16x8x2x128xf32>
    %54 = vector.extract_strided_slice %53 {offsets = [0, 0, 0, 0], sizes = [16, 8, 1, 128], strides = [1, 1, 1, 1]} : vector<16x8x2x128xf32> to vector<16x8x1x128xf32>
    %55 = vector.shape_cast %54 : vector<16x8x1x128xf32> to vector<16x8x128xf32>
    %56 = vector.extract_strided_slice %53 {offsets = [0, 0, 1, 0], sizes = [16, 8, 1, 128], strides = [1, 1, 1, 1]} : vector<16x8x2x128xf32> to vector<16x8x1x128xf32>
    %57 = vector.shape_cast %56 : vector<16x8x1x128xf32> to vector<16x8x128xf32>
    %58 = arith.maximumf %55, %57 : vector<16x8x128xf32>
    %59 = vector.shape_cast %58 : vector<16x8x128xf32> to vector<8x2x8x128xf32>
    %60 = vector.extract_strided_slice %59 {offsets = [0, 0, 0, 0], sizes = [8, 1, 8, 128], strides = [1, 1, 1, 1]} : vector<8x2x8x128xf32> to vector<8x1x8x128xf32>
    %61 = vector.shape_cast %60 : vector<8x1x8x128xf32> to vector<8x8x128xf32>
    %62 = vector.extract_strided_slice %59 {offsets = [0, 1, 0, 0], sizes = [8, 1, 8, 128], strides = [1, 1, 1, 1]} : vector<8x2x8x128xf32> to vector<8x1x8x128xf32>
    %63 = vector.shape_cast %62 : vector<8x1x8x128xf32> to vector<8x8x128xf32>
    %64 = arith.maximumf %61, %63 : vector<8x8x128xf32>
    %c0_72 = arith.constant 0 : index
    %c0_73 = arith.constant 0 : index
    %c0_74 = arith.constant 0 : index
    %c0_75 = arith.constant 0 : index
    %65 = vector.load %arg4[%c0_72, %c0_73, %c0_74, %c0_75] : memref<1x8x8x128xf32, #tpu.memory_space<vmem>>, vector<1x8x8x128xf32>
    %66 = vector.shape_cast %65 : vector<1x8x8x128xf32> to vector<8x8x128xf32>
    %67 = vector.shape_cast %64 : vector<8x8x128xf32> to vector<1x8x8x128xf32>
    tpu.vector_store %arg4[%c0_72, %c0_73, %c0_74, %c0_75], %67 {strides = array<i32>} : memref<1x8x8x128xf32, #tpu.memory_space<vmem>>, vector<1x8x8x128xf32>,
    return
  }
  func.func @transform_0(%arg0: i32) -> (i32, i32, i32, i32) {
    %c0_i32 = arith.constant 0 : i32
    %c0_i32_0 = arith.constant 0 : i32
    %c0_i32_1 = arith.constant 0 : i32
    %c0_i32_2 = arith.constant 0 : i32
    return %arg0, %c0_i32, %c0_i32_0, %c0_i32_1 : i32, i32, i32, i32
  }
  func.func @transform_1(%arg0: i32) -> (i32, i32) {
    %c0_i32 = arith.constant 0 : i32
    %c0_i32_0 = arith.constant 0 : i32
    %c0_i32_1 = arith.constant 0 : i32
    return %c0_i32, %c0_i32_0 : i32, i32
  }
  func.func @transform_2(%arg0: i32) -> (i32, i32) {
    %c0_i32 = arith.constant 0 : i32
    %c0_i32_0 = arith.constant 0 : i32
    %c0_i32_1 = arith.constant 0 : i32
    return %c0_i32, %c0_i32_0 : i32, i32
  }
  func.func @transform_3(%arg0: i32) -> (i32, i32, i32, i32) {
    %c0_i32 = arith.constant 0 : i32
    %c0_i32_0 = arith.constant 0 : i32
    %c0_i32_1 = arith.constant 0 : i32
    %c0_i32_2 = arith.constant 0 : i32
    return %arg0, %c0_i32, %c0_i32_0, %c0_i32_1 : i32, i32, i32, i32
  }
}

</mosaic_0001>

<llo_original>
// kernel: vgg_block_forward.1
$region0: #{vgg_block_forward.1}
  #allocation0 [shape = 'u32[]', space=smem, size = 0x4, offset = 0x4, fixed_abs, tag = 'smem constant byte address 0x4 - core index']
  #allocation1 [shape = 'u32[144,128]{1,0:T(1,128)}', space=vmem, size = 0x12000, scoped, tag = 'internal scratch']
  #allocation2 [shape = 'f32[18,18,128]{2,1,0:T(8,128)}', space=vmem, size = 0x36000, scoped, tag = 'scratch operand']
  %s0 = inlined_call_operand.vmem [shape: f32[2,16,16,4], index: 0, kind: input, shape index: {}]
  %s1 = inlined_call_operand.vmem [shape: f32[1152,128], index: 1, kind: input, shape index: {}]
  %s2 = inlined_call_operand.vmem [shape: f32[1152,128], index: 2, kind: input, shape index: {}]
  %s3 = inlined_call_operand.vmem [shape: f32[2,8,8,128], index: 3, kind: output, shape index: {}]
  %s4 = sld [smem:[#allocation0]]
  $region45: #{vgg_block_forward.1} parent=0
    _
  %s6 = ssub.s32 1, %s4
  %s7 = scalar_select 0, %s6, %s4
  loop: start=0, step=1, limit=4
  $region2: #{vgg_block_forward.1} parent=0 // loop_pre_header
    _
  $region3: #{vgg_block_forward.1} parent=0 // loop_header
    %s9 = sphi 0, %s13
    %p10 = scmp.ge.s32.totalorder %s9, 4
    %s19 = sphi 0, %s21
    %s22 = sphi 0, %s19
    %s23 = sphi 0, %s22
    %s39 = sphi 0, %s23
    %s43 = sphi 0, %s43
    %s45 = sphi 0, %s43
    %s46 = sphi 0, %s45
    %s60 = sphi 0, %s46
    %s64 = sphi 0, %s64
    %s66 = sphi 0, %s64
    %s67 = sphi 0, %s66
    %s81 = sphi 0, %s67
    %s87 = sphi 0, %s89
    %s90 = sphi 0, %s87
    %s91 = sphi 0, %s90
    %s107 = sphi 0, %s91
  $region4: #{vgg_block_forward.1} parent=0 // loop_header_branch
    %12 = sbr.rel (%p10) target = $region8
  $region5: #{vgg_block_forward.1} parent=0 // loop_body
    %s14 = ssub.s32 %s9, 1
    %s15 = ssub.s32 %s9, 2
    %s16 = sadd.s32 %s9, 1
    %s17 = ssub.s32 %s9, %s16
    %p18 = scmp.eq.s32.totalorder %s17, 0
    %s20 = sadd.s32 %s19, 1
    %s21 = scalar_select %p18, %s19, %s20
    %p24 = pneg %p18
    %p25 = scmp.eq.s32.totalorder %s9, 1
    %p26 = por %p24, %p25
    %p27 = scmp.ne.s32.totalorder %s19, %s22
    %p28 = scmp.eq.s32.totalorder %s9, 0
    %p29 = por %p27, %p28
    %p30 = scmp.ne.s32.totalorder %s19, %s22
    %p31 = scmp.eq.s32.totalorder %s14, 1
    %p32 = por %p30, %p31
    %p33 = scmp.ne.s32.totalorder %s22, %s23
    %p34 = scmp.eq.s32.totalorder %s14, 0
    %p35 = por %p33, %p34
    %p36 = scmp.ne.s32.totalorder %s22, %s23
    %p37 = scmp.eq.s32.totalorder %s15, 1
    %p38 = por %p36, %p37
    %p40 = scmp.ne.s32.totalorder %s23, %s39
    %p41 = scmp.eq.s32.totalorder %s15, 0
    %p42 = por %p40, %p41
    %s44 = sadd.s32 %s43, 1
    %p47 = scmp.eq.s32.totalorder %s9, 1
    %p48 = scmp.ne.s32.totalorder %s43, %s45
    %p49 = scmp.eq.s32.totalorder %s9, 0
    %p50 = por %p48, %p49
    %p51 = scmp.ne.s32.totalorder %s43, %s45
    %p52 = scmp.eq.s32.totalorder %s14, 1
    %p53 = por %p51, %p52
    %p54 = scmp.ne.s32.totalorder %s45, %s46
    %p55 = scmp.eq.s32.totalorder %s14, 0
    %p56 = por %p54, %p55
    %p57 = scmp.ne.s32.totalorder %s45, %s46
    %p58 = scmp.eq.s32.totalorder %s15, 1
    %p59 = por %p57, %p58
    %p61 = scmp.ne.s32.totalorder %s46, %s60
    %p62 = scmp.eq.s32.totalorder %s15, 0
    %p63 = por %p61, %p62
    %s65 = sadd.s32 %s64, 1
    %p68 = scmp.eq.s32.totalorder %s9, 1
    %p69 = scmp.ne.s32.totalorder %s64, %s66
    %p70 = scmp.eq.s32.totalorder %s9, 0
    %p71 = por %p69, %p70
    %p72 = scmp.ne.s32.totalorder %s64, %s66
    %p73 = scmp.eq.s32.totalorder %s14, 1
    %p74 = por %p72, %p73
    %p75 = scmp.ne.s32.totalorder %s66, %s67
    %p76 = scmp.eq.s32.totalorder %s14, 0
    %p77 = por %p75, %p76
    %p78 = scmp.ne.s32.totalorder %s66, %s67
    %p79 = scmp.eq.s32.totalorder %s15, 1
    %p80 = por %p78, %p79
    %p82 = scmp.ne.s32.totalorder %s67, %s81
    %p83 = scmp.eq.s32.totalorder %s15, 0
    %p84 = por %p82, %p83
    %s85 = ssub.s32 %s9, %s16
    %p86 = scmp.eq.s32.totalorder %s85, 0
    %s88 = sadd.s32 %s87, 1
    %s89 = scalar_select %p86, %s87, %s88
    %p92 = pneg %p86
    %p93 = scmp.eq.s32.totalorder %s9, 1
    %p94 = por %p92, %p93
    %p95 = scmp.ne.s32.totalorder %s87, %s90
    %p96 = scmp.eq.s32.totalorder %s9, 0
    %p97 = por %p95, %p96
    %p98 = scmp.ne.s32.totalorder %s87, %s90
    %p99 = scmp.eq.s32.totalorder %s14, 1
    %p100 = por %p98, %p99
    %p101 = scmp.ne.s32.totalorder %s90, %s91
    %p102 = scmp.eq.s32.totalorder %s14, 0
    %p103 = por %p101, %p102
    %p104 = scmp.ne.s32.totalorder %s90, %s91
    %p105 = scmp.eq.s32.totalorder %s15, 1
    %p106 = por %p104, %p105
    %p108 = scmp.ne.s32.totalorder %s91, %s107
    %p109 = scmp.eq.s32.totalorder %s15, 0
    %p110 = por %p108, %p109
    %p111 = scmp.le.s32.totalorder 1, %s9
    %p112 = scmp.lt.s32.totalorder %s9, 3
    %p113 = pnand %p111, %p112
    %p114 = pneg %p113
    // Predicated region
    $region9: #{vgg_block_forward.1} parent=5 // pred_check
      _
    $region10: #{vgg_block_forward.1} parent=5 // pred_check_branch
      %116 = sbr.rel (%p113) target = $region12
    $region11: #{vgg_block_forward.1} parent=5 // pred_region
      %s117 = ssub.s32 %s9, 1
      // Predicated region
      $region13: #{vgg_block_forward.1} parent=11 // pred_check
        %p118 = pneg %p56
      $region14: #{vgg_block_forward.1} parent=11 // pred_check_branch
        %120 = sbr.rel (%p118) target = $region16
      $region15: #{vgg_block_forward.1} parent=11 // pred_region
        _
      $region16: #{vgg_block_forward.1} parent=11 // pred_fallthru
        _
      // Predicated region
      $region17: #{vgg_block_forward.1} parent=11 // pred_check
        %p121 = pneg %p77
      $region18: #{vgg_block_forward.1} parent=11 // pred_check_branch
        %123 = sbr.rel (%p121) target = $region20
      $region19: #{vgg_block_forward.1} parent=11 // pred_region
        _
      $region20: #{vgg_block_forward.1} parent=11 // pred_fallthru
        _
    $region12: #{vgg_block_forward.1} parent=5 // pred_fallthru
      _
    %p124 = scmp.lt.s32.totalorder %s9, 2
    // Predicated region
    $region21: #{vgg_block_forward.1} parent=5 // pred_check
      %p125 = pneg %p124
    $region22: #{vgg_block_forward.1} parent=5 // pred_check_branch
      %127 = sbr.rel (%p125) target = $region24
    $region23: #{vgg_block_forward.1} parent=5 // pred_region
      // Predicated region
      $region25: #{vgg_block_forward.1} parent=23 // pred_check
        %p128 = pneg %p29
      $region26: #{vgg_block_forward.1} parent=23 // pred_check_branch
        %130 = sbr.rel (%p128) target = $region28
      $region27: #{vgg_block_forward.1} parent=23 // pred_region
        %p131 = scmp.lt.s32.totalorder %s9, 1
        %s132 = scalar_select %p131, %s9, 1
        %s133 = smul.addr %s132, 32
        %s134 = smul.addr %s133, 8
        %s135 = scalar_lea.vmem %s0, %s134
      $region28: #{vgg_block_forward.1} parent=23 // pred_fallthru
        _
    $region24: #{vgg_block_forward.1} parent=5 // pred_fallthru
      _
    %p136 = scmp.le.s32.totalorder 1, %s9
    %p137 = scmp.lt.s32.totalorder %s9, 3
    %p138 = pnand %p136, %p137
    %p139 = pneg %p138
    // Predicated region
    $region29: #{vgg_block_forward.1} parent=5 // pred_check
      _
    $region30: #{vgg_block_forward.1} parent=5 // pred_check_branch
      %141 = sbr.rel (%p138) target = $region32
    $region31: #{vgg_block_forward.1} parent=5 // pred_region
      %s142 = ssub.s32 %s9, 1
      %p143 = scmp.lt.s32.totalorder %s14, 1
      %s144 = scalar_select %p143, %s14, 1
      %s145 = smul.addr %s144, 32
      %s146 = smul.addr %s145, 8
      %s147 = scalar_lea.vmem %s0, %s146
      %p148 = pneg %p35
      %p149 = pneg %p32
      %p150 = pneg %p56
      %p151 = pneg %p53
      %p152 = pneg %p77
      %p153 = pneg %p74
      %p154 = pneg %p103
      %p155 = pneg %p100
      %p156 = scmp.lt.s32.totalorder %s14, 1
      %s157 = scalar_select %p156, %s14, 1
      %s158 = smul.addr %s157, 8
      %s159 = smul.addr %s158, 8
      %s160 = scalar_lea.vmem %s3, %s159
      %p161 = scmp.lt.s32.totalorder %s14, 1
      %s162 = scalar_select %p161, %s14, 1
      %s163 = smul.addr %s162, 32
      %s164 = smul.addr %s163, 8
      %s165 = scalar_lea.vmem %s0, %s164
      %p166 = scmp.lt.s32.totalorder %s14, 1
      %s167 = scalar_select %p166, %s14, 1
      %s168 = smul.addr %s167, 8
      %s169 = smul.addr %s168, 8
      %s170 = scalar_lea.vmem %s3, %s169
      %171 = vst [vmem:[#allocation2] sm:$0xff] 0.0
      %172 = vst [vmem:[#allocation2 + $0x8] sm:$0xff] 0.0
      %173 = vst [vmem:[#allocation2 + $0x10] sm:$0x3] 0.0
      %174 = vst [vmem:[#allocation2 + $0x18] sm:$0xff] 0.0
      %175 = vst [vmem:[#allocation2 + $0x20] sm:$0xff] 0.0
      %176 = vst [vmem:[#allocation2 + $0x28] sm:$0x3] 0.0
      %177 = vst [vmem:[#allocation2 + $0x30] sm:$0xff] 0.0
      %178 = vst [vmem:[#allocation2 + $0x38] sm:$0xff] 0.0
      %179 = vst [vmem:[#allocation2 + $0x40] sm:$0x3] 0.0
      %180 = vst [vmem:[#allocation2 + $0x48] sm:$0xff] 0.0
      %181 = vst [vmem:[#allocation2 + $0x50] sm:$0xff] 0.0
      %182 = vst [vmem:[#allocation2 + $0x58] sm:$0x3] 0.0
      %183 = vst [vmem:[#allocation2 + $0x60] sm:$0xff] 0.0
      %184 = vst [vmem:[#allocation2 + $0x68] sm:$0xff] 0.0
      %185 = vst [vmem:[#allocation2 + $0x70] sm:$0x3] 0.0
      %186 = vst [vmem:[#allocation2 + $0x78] sm:$0xff] 0.0
      %187 = vst [vmem:[#allocation2 + $0x80] sm:$0xff] 0.0
      %188 = vst [vmem:[#allocation2 + $0x88] sm:$0x3] 0.0
      %189 = vst [vmem:[#allocation2 + $0x90] sm:$0xff] 0.0
      %190 = vst [vmem:[#allocation2 + $0x98] sm:$0xff] 0.0
      %191 = vst [vmem:[#allocation2 + $0xa0] sm:$0x3] 0.0
      %192 = vst [vmem:[#allocation2 + $0xa8] sm:$0xff] 0.0
      %193 = vst [vmem:[#allocation2 + $0xb0] sm:$0xff] 0.0
      %194 = vst [vmem:[#allocation2 + $0xb8] sm:$0x3] 0.0
      %195 = vst [vmem:[#allocation2 + $0xc0] sm:$0xff] 0.0
      %196 = vst [vmem:[#allocation2 + $0xc8] sm:$0xff] 0.0
      %197 = vst [vmem:[#allocation2 + $0xd0] sm:$0x3] 0.0
      %198 = vst [vmem:[#allocation2 + $0xd8] sm:$0xff] 0.0
      %199 = vst [vmem:[#allocation2 + $0xe0] sm:$0xff] 0.0
      %200 = vst [vmem:[#allocation2 + $0xe8] sm:$0x3] 0.0
      %201 = vst [vmem:[#allocation2 + $0xf0] sm:$0xff] 0.0
      %202 = vst [vmem:[#allocation2 + $0xf8] sm:$0xff] 0.0
      %203 = vst [vmem:[#allocation2 + $0x100] sm:$0x3] 0.0
      %204 = vst [vmem:[#allocation2 + $0x108] sm:$0xff] 0.0
      %205 = vst [vmem:[#allocation2 + $0x110] sm:$0xff] 0.0
      %206 = vst [vmem:[#allocation2 + $0x118] sm:$0x3] 0.0
      %207 = vst [vmem:[#allocation2 + $0x120] sm:$0xff] 0.0
      %208 = vst [vmem:[#allocation2 + $0x128] sm:$0xff] 0.0
      %209 = vst [vmem:[#allocation2 + $0x130] sm:$0x3] 0.0
      %210 = vst [vmem:[#allocation2 + $0x138] sm:$0xff] 0.0
      %211 = vst [vmem:[#allocation2 + $0x140] sm:$0xff] 0.0
      %212 = vst [vmem:[#allocation2 + $0x148] sm:$0x3] 0.0
      %213 = vst [vmem:[#allocation2 + $0x150] sm:$0xff] 0.0
      %214 = vst [vmem:[#allocation2 + $0x158] sm:$0xff] 0.0
      %215 = vst [vmem:[#allocation2 + $0x160] sm:$0x3] 0.0
      %216 = vst [vmem:[#allocation2 + $0x168] sm:$0xff] 0.0
      %217 = vst [vmem:[#allocation2 + $0x170] sm:$0xff] 0.0
      %218 = vst [vmem:[#allocation2 + $0x178] sm:$0x3] 0.0
      %219 = vst [vmem:[#allocation2 + $0x180] sm:$0xff] 0.0
      %220 = vst [vmem:[#allocation2 + $0x188] sm:$0xff] 0.0
      %221 = vst [vmem:[#allocation2 + $0x190] sm:$0x3] 0.0
      %222 = vst [vmem:[#allocation2 + $0x198] sm:$0xff] 0.0
      %223 = vst [vmem:[#allocation2 + $0x1a0] sm:$0xff] 0.0
      %224 = vst [vmem:[#allocation2 + $0x1a8] sm:$0x3] 0.0
      %v225 = vld [vmem:[%s165] sm:$0xff]
      %v226 = vld [vmem:[%s165 + $0x8] sm:$0xff]
      %v227 = vld [vmem:[%s165 + $0x10] sm:$0xff]
      %v228 = vld [vmem:[%s165 + $0x18] sm:$0xff]
      %v229 = vld [vmem:[%s165 + $0x20] sm:$0xff]
      %v230 = vld [vmem:[%s165 + $0x28] sm:$0xff]
      %v231 = vld [vmem:[%s165 + $0x30] sm:$0xff]
      %v232 = vld [vmem:[%s165 + $0x38] sm:$0xff]
      %v233 = vld [vmem:[%s165 + $0x40] sm:$0xff]
      %v234 = vld [vmem:[%s165 + $0x48] sm:$0xff]
      %v235 = vld [vmem:[%s165 + $0x50] sm:$0xff]
      %v236 = vld [vmem:[%s165 + $0x58] sm:$0xff]
      %v237 = vld [vmem:[%s165 + $0x60] sm:$0xff]
      %v238 = vld [vmem:[%s165 + $0x68] sm:$0xff]
      %v239 = vld [vmem:[%s165 + $0x70] sm:$0xff]
      %v240 = vld [vmem:[%s165 + $0x78] sm:$0xff]
      %v241 = vld [vmem:[%s165 + $0x80] sm:$0xff]
      %v242 = vld [vmem:[%s165 + $0x88] sm:$0xff]
      %v243 = vld [vmem:[%s165 + $0x90] sm:$0xff]
      %v244 = vld [vmem:[%s165 + $0x98] sm:$0xff]
      %v245 = vld [vmem:[%s165 + $0xa0] sm:$0xff]
      %v246 = vld [vmem:[%s165 + $0xa8] sm:$0xff]
      %v247 = vld [vmem:[%s165 + $0xb0] sm:$0xff]
      %v248 = vld [vmem:[%s165 + $0xb8] sm:$0xff]
      %v249 = vld [vmem:[%s165 + $0xc0] sm:$0xff]
      %v250 = vld [vmem:[%s165 + $0xc8] sm:$0xff]
      %v251 = vld [vmem:[%s165 + $0xd0] sm:$0xff]
      %v252 = vld [vmem:[%s165 + $0xd8] sm:$0xff]
      %v253 = vld [vmem:[%s165 + $0xe0] sm:$0xff]
      %v254 = vld [vmem:[%s165 + $0xe8] sm:$0xff]
      %v255 = vld [vmem:[%s165 + $0xf0] sm:$0xff]
      %v256 = vld [vmem:[%s165 + $0xf8] sm:$0xff]
      %s257 = scalar_lea.vmem [#allocation2], 24
      %vm258 = vcmask 31744
      %259 = vst.msk [vmem:[%s257 + $0x1] sm:$0xff] %vm258, %v225
      %260 = vst.msk [vmem:[%s257 + $0x9] sm:$0xff] %vm258, %v226
      %261 = vst.msk [vmem:[%s257 + $0x19] sm:$0xff] %vm258, %v227
      %262 = vst.msk [vmem:[%s257 + $0x21] sm:$0xff] %vm258, %v228
      %263 = vst.msk [vmem:[%s257 + $0x31] sm:$0xff] %vm258, %v229
      %264 = vst.msk [vmem:[%s257 + $0x39] sm:$0xff] %vm258, %v230
      %265 = vst.msk [vmem:[%s257 + $0x49] sm:$0xff] %vm258, %v231
      %266 = vst.msk [vmem:[%s257 + $0x51] sm:$0xff] %vm258, %v232
      %267 = vst.msk [vmem:[%s257 + $0x61] sm:$0xff] %vm258, %v233
      %268 = vst.msk [vmem:[%s257 + $0x69] sm:$0xff] %vm258, %v234
      %269 = vst.msk [vmem:[%s257 + $0x79] sm:$0xff] %vm258, %v235
      %270 = vst.msk [vmem:[%s257 + $0x81] sm:$0xff] %vm258, %v236
      %271 = vst.msk [vmem:[%s257 + $0x91] sm:$0xff] %vm258, %v237
      %272 = vst.msk [vmem:[%s257 + $0x99] sm:$0xff] %vm258, %v238
      %273 = vst.msk [vmem:[%s257 + $0xa9] sm:$0xff] %vm258, %v239
      %274 = vst.msk [vmem:[%s257 + $0xb1] sm:$0xff] %vm258, %v240
      %275 = vst.msk [vmem:[%s257 + $0xc1] sm:$0xff] %vm258, %v241
      %276 = vst.msk [vmem:[%s257 + $0xc9] sm:$0xff] %vm258, %v242
      %277 = vst.msk [vmem:[%s257 + $0xd9] sm:$0xff] %vm258, %v243
      %278 = vst.msk [vmem:[%s257 + $0xe1] sm:$0xff] %vm258, %v244
      %279 = vst.msk [vmem:[%s257 + $0xf1] sm:$0xff] %vm258, %v245
      %280 = vst.msk [vmem:[%s257 + $0xf9] sm:$0xff] %vm258, %v246
      %281 = vst.msk [vmem:[%s257 + $0x109] sm:$0xff] %vm258, %v247
      %282 = vst.msk [vmem:[%s257 + $0x111] sm:$0xff] %vm258, %v248
      %283 = vst.msk [vmem:[%s257 + $0x121] sm:$0xff] %vm258, %v249
      %284 = vst.msk [vmem:[%s257 + $0x129] sm:$0xff] %vm258, %v250
      %285 = vst.msk [vmem:[%s257 + $0x139] sm:$0xff] %vm258, %v251
      %286 = vst.msk [vmem:[%s257 + $0x141] sm:$0xff] %vm258, %v252
      %287 = vst.msk [vmem:[%s257 + $0x151] sm:$0xff] %vm258, %v253
      %288 = vst.msk [vmem:[%s257 + $0x159] sm:$0xff] %vm258, %v254
      %289 = vst.msk [vmem:[%s257 + $0x169] sm:$0xff] %vm258, %v255
      %290 = vst.msk [vmem:[%s257 + $0x171] sm:$0xff] %vm258, %v256
      %v291 = vld [vmem:[#allocation2] sm:$0xff]
      %v292 = vld [vmem:[#allocation2 + $0x8] sm:$0xff]
      %v293 = vld [vmem:[#allocation2 + $0x18] sm:$0xff]
      %v294 = vld [vmem:[#allocation2 + $0x20] sm:$0xff]
      %v295 = vld [vmem:[#allocation2 + $0x30] sm:$0xff]
      %v296 = vld [vmem:[#allocation2 + $0x38] sm:$0xff]
      %v297 = vld [vmem:[#allocation2 + $0x48] sm:$0xff]
      %v298 = vld [vmem:[#allocation2 + $0x50] sm:$0xff]
      %v299 = vld [vmem:[#allocation2 + $0x60] sm:$0xff]
      %v300 = vld [vmem:[#allocation2 + $0x68] sm:$0xff]
      %v301 = vld [vmem:[#allocation2 + $0x78] sm:$0xff]
      %v302 = vld [vmem:[#allocation2 + $0x80] sm:$0xff]
      %v303 = vld [vmem:[#allocation2 + $0x90] sm:$0xff]
      %v304 = vld [vmem:[#allocation2 + $0x98] sm:$0xff]
      %v305 = vld [vmem:[#allocation2 + $0xa8] sm:$0xff]
      %v306 = vld [vmem:[#allocation2 + $0xb0] sm:$0xff]
      %v307 = vld [vmem:[#allocation2 + $0xc0] sm:$0xff]
      %v308 = vld [vmem:[#allocation2 + $0xc8] sm:$0xff]
      %v309 = vld [vmem:[#allocation2 + $0xd8] sm:$0xff]
      %v310 = vld [vmem:[#allocation2 + $0xe0] sm:$0xff]
      %v311 = vld [vmem:[#allocation2 + $0xf0] sm:$0xff]
      %v312 = vld [vmem:[#allocation2 + $0xf8] sm:$0xff]
      %v313 = vld [vmem:[#allocation2 + $0x108] sm:$0xff]
      %v314 = vld [vmem:[#allocation2 + $0x110] sm:$0xff]
      %v315 = vld [vmem:[#allocation2 + $0x120] sm:$0xff]
      %v316 = vld [vmem:[#allocation2 + $0x128] sm:$0xff]
      %v317 = vld [vmem:[#allocation2 + $0x138] sm:$0xff]
      %v318 = vld [vmem:[#allocation2 + $0x140] sm:$0xff]
      %v319 = vld [vmem:[#allocation2 + $0x150] sm:$0xff]
      %v320 = vld [vmem:[#allocation2 + $0x158] sm:$0xff]
      %v321 = vld [vmem:[#allocation2 + $0x168] sm:$0xff]
      %v322 = vld [vmem:[#allocation2 + $0x170] sm:$0xff]
      %v323 = vld [vmem:[#allocation2 + $0x1] sm:$0xff]
      %v324 = vld [vmem:[#allocation2 + $0x9] sm:$0xff]
      %v325 = vld [vmem:[#allocation2 + $0x19] sm:$0xff]
      %v326 = vld [vmem:[#allocation2 + $0x21] sm:$0xff]
      %v327 = vld [vmem:[#allocation2 + $0x31] sm:$0xff]
      %v328 = vld [vmem:[#allocation2 + $0x39] sm:$0xff]
      %v329 = vld [vmem:[#allocation2 + $0x49] sm:$0xff]
      %v330 = vld [vmem:[#allocation2 + $0x51] sm:$0xff]
      %v331 = vld [vmem:[#allocation2 + $0x61] sm:$0xff]
      %v332 = vld [vmem:[#allocation2 + $0x69] sm:$0xff]
      %v333 = vld [vmem:[#allocation2 + $0x79] sm:$0xff]
      %v334 = vld [vmem:[#allocation2 + $0x81] sm:$0xff]
      %v335 = vld [vmem:[#allocation2 + $0x91] sm:$0xff]
      %v336 = vld [vmem:[#allocation2 + $0x99] sm:$0xff]
      %v337 = vld [vmem:[#allocation2 + $0xa9] sm:$0xff]
      %v338 = vld [vmem:[#allocation2 + $0xb1] sm:$0xff]
      %v339 = vld [vmem:[#allocation2 + $0xc1] sm:$0xff]
      %v340 = vld [vmem:[#allocation2 + $0xc9] sm:$0xff]
      %v341 = vld [vmem:[#allocation2 + $0xd9] sm:$0xff]
      %v342 = vld [vmem:[#allocation2 + $0xe1] sm:$0xff]
      %v343 = vld [vmem:[#allocation2 + $0xf1] sm:$0xff]
      %v344 = vld [vmem:[#allocation2 + $0xf9] sm:$0xff]
      %v345 = vld [vmem:[#allocation2 + $0x109] sm:$0xff]
      %v346 = vld [vmem:[#allocation2 + $0x111] sm:$0xff]
      %v347 = vld [vmem:[#allocation2 + $0x121] sm:$0xff]
      %v348 = vld [vmem:[#allocation2 + $0x129] sm:$0xff]
      %v349 = vld [vmem:[#allocation2 + $0x139] sm:$0xff]
      %v350 = vld [vmem:[#allocation2 + $0x141] sm:$0xff]
      %v351 = vld [vmem:[#allocation2 + $0x151] sm:$0xff]
      %v352 = vld [vmem:[#allocation2 + $0x159] sm:$0xff]
      %v353 = vld [vmem:[#allocation2 + $0x169] sm:$0xff]
      %v354 = vld [vmem:[#allocation2 + $0x171] sm:$0xff]
      %v355 = vld [vmem:[#allocation2 + $0x2] sm:$0xff]
      %v356 = vld [vmem:[#allocation2 + $0xa] sm:$0xff]
      %v357 = vld [vmem:[#allocation2 + $0x1a] sm:$0xff]
      %v358 = vld [vmem:[#allocation2 + $0x22] sm:$0xff]
      %v359 = vld [vmem:[#allocation2 + $0x32] sm:$0xff]
      %v360 = vld [vmem:[#allocation2 + $0x3a] sm:$0xff]
      %v361 = vld [vmem:[#allocation2 + $0x4a] sm:$0xff]
      %v362 = vld [vmem:[#allocation2 + $0x52] sm:$0xff]
      %v363 = vld [vmem:[#allocation2 + $0x62] sm:$0xff]
      %v364 = vld [vmem:[#allocation2 + $0x6a] sm:$0xff]
      %v365 = vld [vmem:[#allocation2 + $0x7a] sm:$0xff]
      %v366 = vld [vmem:[#allocation2 + $0x82] sm:$0xff]
      %v367 = vld [vmem:[#allocation2 + $0x92] sm:$0xff]
      %v368 = vld [vmem:[#allocation2 + $0x9a] sm:$0xff]
      %v369 = vld [vmem:[#allocation2 + $0xaa] sm:$0xff]
      %v370 = vld [vmem:[#allocation2 + $0xb2] sm:$0xff]
      %v371 = vld [vmem:[#allocation2 + $0xc2] sm:$0xff]
      %v372 = vld [vmem:[#allocation2 + $0xca] sm:$0xff]
      %v373 = vld [vmem:[#allocation2 + $0xda] sm:$0xff]
      %v374 = vld [vmem:[#allocation2 + $0xe2] sm:$0xff]
      %v375 = vld [vmem:[#allocation2 + $0xf2] sm:$0xff]
      %v376 = vld [vmem:[#allocation2 + $0xfa] sm:$0xff]
      %v377 = vld [vmem:[#allocation2 + $0x10a] sm:$0xff]
      %v378 = vld [vmem:[#allocation2 + $0x112] sm:$0xff]
      %v379 = vld [vmem:[#allocation2 + $0x122] sm:$0xff]
      %v380 = vld [vmem:[#allocation2 + $0x12a] sm:$0xff]
      %v381 = vld [vmem:[#allocation2 + $0x13a] sm:$0xff]
      %v382 = vld [vmem:[#allocation2 + $0x142] sm:$0xff]
      %v383 = vld [vmem:[#allocation2 + $0x152] sm:$0xff]
      %v384 = vld [vmem:[#allocation2 + $0x15a] sm:$0xff]
      %v385 = vld [vmem:[#allocation2 + $0x16a] sm:$0xff]
      %v386 = vld [vmem:[#allocation2 + $0x172] sm:$0xff]
      %v387 = vld [vmem:[%s257] sm:$0xff]
      %v388 = vld [vmem:[%s257 + $0x8] sm:$0xff]
      %v389 = vld [vmem:[%s257 + $0x18] sm:$0xff]
      %v390 = vld [vmem:[%s257 + $0x20] sm:$0xff]
      %v391 = vld [vmem:[%s257 + $0x30] sm:$0xff]
      %v392 = vld [vmem:[%s257 + $0x38] sm:$0xff]
      %v393 = vld [vmem:[%s257 + $0x48] sm:$0xff]
      %v394 = vld [vmem:[%s257 + $0x50] sm:$0xff]
      %v395 = vld [vmem:[%s257 + $0x60] sm:$0xff]
      %v396 = vld [vmem:[%s257 + $0x68] sm:$0xff]
      %v397 = vld [vmem:[%s257 + $0x78] sm:$0xff]
      %v398 = vld [vmem:[%s257 + $0x80] sm:$0xff]
      %v399 = vld [vmem:[%s257 + $0x90] sm:$0xff]
      %v400 = vld [vmem:[%s257 + $0x98] sm:$0xff]
      %v401 = vld [vmem:[%s257 + $0xa8] sm:$0xff]
      %v402 = vld [vmem:[%s257 + $0xb0] sm:$0xff]
      %v403 = vld [vmem:[%s257 + $0xc0] sm:$0xff]
      %v404 = vld [vmem:[%s257 + $0xc8] sm:$0xff]
      %v405 = vld [vmem:[%s257 + $0xd8] sm:$0xff]
      %v406 = vld [vmem:[%s257 + $0xe0] sm:$0xff]
      %v407 = vld [vmem:[%s257 + $0xf0] sm:$0xff]
      %v408 = vld [vmem:[%s257 + $0xf8] sm:$0xff]
      %v409 = vld [vmem:[%s257 + $0x108] sm:$0xff]
      %v410 = vld [vmem:[%s257 + $0x110] sm:$0xff]
      %v411 = vld [vmem:[%s257 + $0x120] sm:$0xff]
      %v412 = vld [vmem:[%s257 + $0x128] sm:$0xff]
      %v413 = vld [vmem:[%s257 + $0x138] sm:$0xff]
      %v414 = vld [vmem:[%s257 + $0x140] sm:$0xff]
      %v415 = vld [vmem:[%s257 + $0x150] sm:$0xff]
      %v416 = vld [vmem:[%s257 + $0x158] sm:$0xff]
      %v417 = vld [vmem:[%s257 + $0x168] sm:$0xff]
      %v418 = vld [vmem:[%s257 + $0x170] sm:$0xff]
      %v419 = vld [vmem:[%s257 + $0x1] sm:$0xff]
      %v420 = vld [vmem:[%s257 + $0x9] sm:$0xff]
      %v421 = vld [vmem:[%s257 + $0x19] sm:$0xff]
      %v422 = vld [vmem:[%s257 + $0x21] sm:$0xff]
      %v423 = vld [vmem:[%s257 + $0x31] sm:$0xff]
      %v424 = vld [vmem:[%s257 + $0x39] sm:$0xff]
      %v425 = vld [vmem:[%s257 + $0x49] sm:$0xff]
      %v426 = vld [vmem:[%s257 + $0x51] sm:$0xff]
      %v427 = vld [vmem:[%s257 + $0x61] sm:$0xff]
      %v428 = vld [vmem:[%s257 + $0x69] sm:$0xff]
      %v429 = vld [vmem:[%s257 + $0x79] sm:$0xff]
      %v430 = vld [vmem:[%s257 + $0x81] sm:$0xff]
      %v431 = vld [vmem:[%s257 + $0x91] sm:$0xff]
      %v432 = vld [vmem:[%s257 + $0x99] sm:$0xff]
      %v433 = vld [vmem:[%s257 + $0xa9] sm:$0xff]
      %v434 = vld [vmem:[%s257 + $0xb1] sm:$0xff]
      %v435 = vld [vmem:[%s257 + $0xc1] sm:$0xff]
      %v436 = vld [vmem:[%s257 + $0xc9] sm:$0xff]
      %v437 = vld [vmem:[%s257 + $0xd9] sm:$0xff]
      %v438 = vld [vmem:[%s257 + $0xe1] sm:$0xff]
      %v439 = vld [vmem:[%s257 + $0xf1] sm:$0xff]
      %v440 = vld [vmem:[%s257 + $0xf9] sm:$0xff]
      %v441 = vld [vmem:[%s257 + $0x109] sm:$0xff]
      %v442 = vld [vmem:[%s257 + $0x111] sm:$0xff]
      %v443 = vld [vmem:[%s257 + $0x121] sm:$0xff]
      %v444 = vld [vmem:[%s257 + $0x129] sm:$0xff]
      %v445 = vld [vmem:[%s257 + $0x139] sm:$0xff]
      %v446 = vld [vmem:[%s257 + $0x141] sm:$0xff]
      %v447 = vld [vmem:[%s257 + $0x151] sm:$0xff]
      %v448 = vld [vmem:[%s257 + $0x159] sm:$0xff]
      %v449 = vld [vmem:[%s257 + $0x169] sm:$0xff]
      %v450 = vld [vmem:[%s257 + $0x171] sm:$0xff]
      %v451 = vld [vmem:[%s257 + $0x2] sm:$0xff]
      %v452 = vld [vmem:[%s257 + $0xa] sm:$0xff]
      %v453 = vld [vmem:[%s257 + $0x1a] sm:$0xff]
      %v454 = vld [vmem:[%s257 + $0x22] sm:$0xff]
      %v455 = vld [vmem:[%s257 + $0x32] sm:$0xff]
      %v456 = vld [vmem:[%s257 + $0x3a] sm:$0xff]
      %v457 = vld [vmem:[%s257 + $0x4a] sm:$0xff]
      %v458 = vld [vmem:[%s257 + $0x52] sm:$0xff]
      %v459 = vld [vmem:[%s257 + $0x62] sm:$0xff]
      %v460 = vld [vmem:[%s257 + $0x6a] sm:$0xff]
      %v461 = vld [vmem:[%s257 + $0x7a] sm:$0xff]
      %v462 = vld [vmem:[%s257 + $0x82] sm:$0xff]
      %v463 = vld [vmem:[%s257 + $0x92] sm:$0xff]
      %v464 = vld [vmem:[%s257 + $0x9a] sm:$0xff]
      %v465 = vld [vmem:[%s257 + $0xaa] sm:$0xff]
      %v466 = vld [vmem:[%s257 + $0xb2] sm:$0xff]
      %v467 = vld [vmem:[%s257 + $0xc2] sm:$0xff]
      %v468 = vld [vmem:[%s257 + $0xca] sm:$0xff]
      %v469 = vld [vmem:[%s257 + $0xda] sm:$0xff]
      %v470 = vld [vmem:[%s257 + $0xe2] sm:$0xff]
      %v471 = vld [vmem:[%s257 + $0xf2] sm:$0xff]
      %v472 = vld [vmem:[%s257 + $0xfa] sm:$0xff]
      %v473 = vld [vmem:[%s257 + $0x10a] sm:$0xff]
      %v474 = vld [vmem:[%s257 + $0x112] sm:$0xff]
      %v475 = vld [vmem:[%s257 + $0x122] sm:$0xff]
      %v476 = vld [vmem:[%s257 + $0x12a] sm:$0xff]
      %v477 = vld [vmem:[%s257 + $0x13a] sm:$0xff]
      %v478 = vld [vmem:[%s257 + $0x142] sm:$0xff]
      %v479 = vld [vmem:[%s257 + $0x152] sm:$0xff]
      %v480 = vld [vmem:[%s257 + $0x15a] sm:$0xff]
      %v481 = vld [vmem:[%s257 + $0x16a] sm:$0xff]
      %v482 = vld [vmem:[%s257 + $0x172] sm:$0xff]
      %s483 = scalar_lea.vmem [#allocation2], 48
      %v484 = vld [vmem:[%s483] sm:$0xff]
      %v485 = vld [vmem:[%s483 + $0x8] sm:$0xff]
      %v486 = vld [vmem:[%s483 + $0x18] sm:$0xff]
      %v487 = vld [vmem:[%s483 + $0x20] sm:$0xff]
      %v488 = vld [vmem:[%s483 + $0x30] sm:$0xff]
      %v489 = vld [vmem:[%s483 + $0x38] sm:$0xff]
      %v490 = vld [vmem:[%s483 + $0x48] sm:$0xff]
      %v491 = vld [vmem:[%s483 + $0x50] sm:$0xff]
      %v492 = vld [vmem:[%s483 + $0x60] sm:$0xff]
      %v493 = vld [vmem:[%s483 + $0x68] sm:$0xff]
      %v494 = vld [vmem:[%s483 + $0x78] sm:$0xff]
      %v495 = vld [vmem:[%s483 + $0x80] sm:$0xff]
      %v496 = vld [vmem:[%s483 + $0x90] sm:$0xff]
      %v497 = vld [vmem:[%s483 + $0x98] sm:$0xff]
      %v498 = vld [vmem:[%s483 + $0xa8] sm:$0xff]
      %v499 = vld [vmem:[%s483 + $0xb0] sm:$0xff]
      %v500 = vld [vmem:[%s483 + $0xc0] sm:$0xff]
      %v501 = vld [vmem:[%s483 + $0xc8] sm:$0xff]
      %v502 = vld [vmem:[%s483 + $0xd8] sm:$0xff]
      %v503 = vld [vmem:[%s483 + $0xe0] sm:$0xff]
      %v504 = vld [vmem:[%s483 + $0xf0] sm:$0xff]
      %v505 = vld [vmem:[%s483 + $0xf8] sm:$0xff]
      %v506 = vld [vmem:[%s483 + $0x108] sm:$0xff]
      %v507 = vld [vmem:[%s483 + $0x110] sm:$0xff]
      %v508 = vld [vmem:[%s483 + $0x120] sm:$0xff]
      %v509 = vld [vmem:[%s483 + $0x128] sm:$0xff]
      %v510 = vld [vmem:[%s483 + $0x138] sm:$0xff]
      %v511 = vld [vmem:[%s483 + $0x140] sm:$0xff]
      %v512 = vld [vmem:[%s483 + $0x150] sm:$0xff]
      %v513 = vld [vmem:[%s483 + $0x158] sm:$0xff]
      %v514 = vld [vmem:[%s483 + $0x168] sm:$0xff]
      %v515 = vld [vmem:[%s483 + $0x170] sm:$0xff]
      %v516 = vld [vmem:[%s483 + $0x1] sm:$0xff]
      %v517 = vld [vmem:[%s483 + $0x9] sm:$0xff]
      %v518 = vld [vmem:[%s483 + $0x19] sm:$0xff]
      %v519 = vld [vmem:[%s483 + $0x21] sm:$0xff]
      %v520 = vld [vmem:[%s483 + $0x31] sm:$0xff]
      %v521 = vld [vmem:[%s483 + $0x39] sm:$0xff]
      %v522 = vld [vmem:[%s483 + $0x49] sm:$0xff]
      %v523 = vld [vmem:[%s483 + $0x51] sm:$0xff]
      %v524 = vld [vmem:[%s483 + $0x61] sm:$0xff]
      %v525 = vld [vmem:[%s483 + $0x69] sm:$0xff]
      %v526 = vld [vmem:[%s483 + $0x79] sm:$0xff]
      %v527 = vld [vmem:[%s483 + $0x81] sm:$0xff]
      %v528 = vld [vmem:[%s483 + $0x91] sm:$0xff]
      %v529 = vld [vmem:[%s483 + $0x99] sm:$0xff]
      %v530 = vld [vmem:[%s483 + $0xa9] sm:$0xff]
      %v531 = vld [vmem:[%s483 + $0xb1] sm:$0xff]
      %v532 = vld [vmem:[%s483 + $0xc1] sm:$0xff]
      %v533 = vld [vmem:[%s483 + $0xc9] sm:$0xff]
      %v534 = vld [vmem:[%s483 + $0xd9] sm:$0xff]
      %v535 = vld [vmem:[%s483 + $0xe1] sm:$0xff]
      %v536 = vld [vmem:[%s483 + $0xf1] sm:$0xff]
      %v537 = vld [vmem:[%s483 + $0xf9] sm:$0xff]
      %v538 = vld [vmem:[%s483 + $0x109] sm:$0xff]
      %v539 = vld [vmem:[%s483 + $0x111] sm:$0xff]
      %v540 = vld [vmem:[%s483 + $0x121] sm:$0xff]
      %v541 = vld [vmem:[%s483 + $0x129] sm:$0xff]
      %v542 = vld [vmem:[%s483 + $0x139] sm:$0xff]
      %v543 = vld [vmem:[%s483 + $0x141] sm:$0xff]
      %v544 = vld [vmem:[%s483 + $0x151] sm:$0xff]
      %v545 = vld [vmem:[%s483 + $0x159] sm:$0xff]
      %v546 = vld [vmem:[%s483 + $0x169] sm:$0xff]
      %v547 = vld [vmem:[%s483 + $0x171] sm:$0xff]
      %v548 = vld [vmem:[%s483 + $0x2] sm:$0xff]
      %v549 = vld [vmem:[%s483 + $0xa] sm:$0xff]
      %v550 = vld [vmem:[%s483 + $0x1a] sm:$0xff]
      %v551 = vld [vmem:[%s483 + $0x22] sm:$0xff]
      %v552 = vld [vmem:[%s483 + $0x32] sm:$0xff]
      %v553 = vld [vmem:[%s483 + $0x3a] sm:$0xff]
      %v554 = vld [vmem:[%s483 + $0x4a] sm:$0xff]
      %v555 = vld [vmem:[%s483 + $0x52] sm:$0xff]
      %v556 = vld [vmem:[%s483 + $0x62] sm:$0xff]
      %v557 = vld [vmem:[%s483 + $0x6a] sm:$0xff]
      %v558 = vld [vmem:[%s483 + $0x7a] sm:$0xff]
      %v559 = vld [vmem:[%s483 + $0x82] sm:$0xff]
      %v560 = vld [vmem:[%s483 + $0x92] sm:$0xff]
      %v561 = vld [vmem:[%s483 + $0x9a] sm:$0xff]
      %v562 = vld [vmem:[%s483 + $0xaa] sm:$0xff]
      %v563 = vld [vmem:[%s483 + $0xb2] sm:$0xff]
      %v564 = vld [vmem:[%s483 + $0xc2] sm:$0xff]
      %v565 = vld [vmem:[%s483 + $0xca] sm:$0xff]
      %v566 = vld [vmem:[%s483 + $0xda] sm:$0xff]
      %v567 = vld [vmem:[%s483 + $0xe2] sm:$0xff]
      %v568 = vld [vmem:[%s483 + $0xf2] sm:$0xff]
      %v569 = vld [vmem:[%s483 + $0xfa] sm:$0xff]
      %v570 = vld [vmem:[%s483 + $0x10a] sm:$0xff]
      %v571 = vld [vmem:[%s483 + $0x112] sm:$0xff]
      %v572 = vld [vmem:[%s483 + $0x122] sm:$0xff]
      %v573 = vld [vmem:[%s483 + $0x12a] sm:$0xff]
      %v574 = vld [vmem:[%s483 + $0x13a] sm:$0xff]
      %v575 = vld [vmem:[%s483 + $0x142] sm:$0xff]
      %v576 = vld [vmem:[%s483 + $0x152] sm:$0xff]
      %v577 = vld [vmem:[%s483 + $0x15a] sm:$0xff]
      %v578 = vld [vmem:[%s483 + $0x16a] sm:$0xff]
      %v579 = vld [vmem:[%s483 + $0x172] sm:$0xff]
      %v580 = vld [vmem:[%s1] sm:$0xff]
      %v581 = vld [vmem:[%s1 + $0x8] sm:$0xff]
      %v582 = vld [vmem:[%s1 + $0x10] sm:$0xff]
      %v583 = vld [vmem:[%s1 + $0x18] sm:$0xff]
      %v584 = vld [vmem:[%s1 + $0x20] sm:$0xff]
      %v585 = vld [vmem:[%s1 + $0x28] sm:$0xff]
      %v586 = vld [vmem:[%s1 + $0x30] sm:$0xff]
      %v587 = vld [vmem:[%s1 + $0x38] sm:$0xff]
      %v588 = vld [vmem:[%s1 + $0x40] sm:$0xff]
      %v589 = vld [vmem:[%s1 + $0x48] sm:$0xff]
      %v590 = vld [vmem:[%s1 + $0x50] sm:$0xff]
      %v591 = vld [vmem:[%s1 + $0x58] sm:$0xff]
      %v592 = vld [vmem:[%s1 + $0x60] sm:$0xff]
      %v593 = vld [vmem:[%s1 + $0x68] sm:$0xff]
      %v594 = vld [vmem:[%s1 + $0x70] sm:$0xff]
      %v595 = vld [vmem:[%s1 + $0x78] sm:$0xff]
      %v596 = vld [vmem:[%s1 + $0x80] sm:$0xff]
      %v597 = vld [vmem:[%s1 + $0x88] sm:$0xff]
      %v598 = vld [vmem:[%s1 + $0x90] sm:$0xff]
      %v599 = vld [vmem:[%s1 + $0x98] sm:$0xff]
      %v600 = vld [vmem:[%s1 + $0xa0] sm:$0xff]
      %v601 = vld [vmem:[%s1 + $0xa8] sm:$0xff]
      %v602 = vld [vmem:[%s1 + $0xb0] sm:$0xff]
      %v603 = vld [vmem:[%s1 + $0xb8] sm:$0xff]
      %v604 = vld [vmem:[%s1 + $0xc0] sm:$0xff]
      %v605 = vld [vmem:[%s1 + $0xc8] sm:$0xff]
      %v606 = vld [vmem:[%s1 + $0xd0] sm:$0xff]
      %v607 = vld [vmem:[%s1 + $0xd8] sm:$0xff]
      %v608 = vld [vmem:[%s1 + $0xe0] sm:$0xff]
      %v609 = vld [vmem:[%s1 + $0xe8] sm:$0xff]
      %v610 = vld [vmem:[%s1 + $0xf0] sm:$0xff]
      %v611 = vld [vmem:[%s1 + $0xf8] sm:$0xff]
      %v612 = vld [vmem:[%s1 + $0x100] sm:$0xff]
      %v613 = vld [vmem:[%s1 + $0x108] sm:$0xff]
      %v614 = vld [vmem:[%s1 + $0x110] sm:$0xff]
      %v615 = vld [vmem:[%s1 + $0x118] sm:$0xff]
      %v616 = vld [vmem:[%s1 + $0x120] sm:$0xff]
      %v617 = vld [vmem:[%s1 + $0x128] sm:$0xff]
      %v618 = vld [vmem:[%s1 + $0x130] sm:$0xff]
      %v619 = vld [vmem:[%s1 + $0x138] sm:$0xff]
      %v620 = vld [vmem:[%s1 + $0x140] sm:$0xff]
      %v621 = vld [vmem:[%s1 + $0x148] sm:$0xff]
      %v622 = vld [vmem:[%s1 + $0x150] sm:$0xff]
      %v623 = vld [vmem:[%s1 + $0x158] sm:$0xff]
      %v624 = vld [vmem:[%s1 + $0x160] sm:$0xff]
      %v625 = vld [vmem:[%s1 + $0x168] sm:$0xff]
      %v626 = vld [vmem:[%s1 + $0x170] sm:$0xff]
      %v627 = vld [vmem:[%s1 + $0x178] sm:$0xff]
      %v628 = vld [vmem:[%s1 + $0x180] sm:$0xff]
      %v629 = vld [vmem:[%s1 + $0x188] sm:$0xff]
      %v630 = vld [vmem:[%s1 + $0x190] sm:$0xff]
      %v631 = vld [vmem:[%s1 + $0x198] sm:$0xff]
      %v632 = vld [vmem:[%s1 + $0x1a0] sm:$0xff]
      %v633 = vld [vmem:[%s1 + $0x1a8] sm:$0xff]
      %v634 = vld [vmem:[%s1 + $0x1b0] sm:$0xff]
      %v635 = vld [vmem:[%s1 + $0x1b8] sm:$0xff]
      %v636 = vld [vmem:[%s1 + $0x1c0] sm:$0xff]
      %v637 = vld [vmem:[%s1 + $0x1c8] sm:$0xff]
      %v638 = vld [vmem:[%s1 + $0x1d0] sm:$0xff]
      %v639 = vld [vmem:[%s1 + $0x1d8] sm:$0xff]
      %v640 = vld [vmem:[%s1 + $0x1e0] sm:$0xff]
      %v641 = vld [vmem:[%s1 + $0x1e8] sm:$0xff]
      %v642 = vld [vmem:[%s1 + $0x1f0] sm:$0xff]
      %v643 = vld [vmem:[%s1 + $0x1f8] sm:$0xff]
      %v644 = vld [vmem:[%s1 + $0x200] sm:$0xff]
      %v645 = vld [vmem:[%s1 + $0x208] sm:$0xff]
      %v646 = vld [vmem:[%s1 + $0x210] sm:$0xff]
      %v647 = vld [vmem:[%s1 + $0x218] sm:$0xff]
      %v648 = vld [vmem:[%s1 + $0x220] sm:$0xff]
      %v649 = vld [vmem:[%s1 + $0x228] sm:$0xff]
      %v650 = vld [vmem:[%s1 + $0x230] sm:$0xff]
      %v651 = vld [vmem:[%s1 + $0x238] sm:$0xff]
      %v652 = vld [vmem:[%s1 + $0x240] sm:$0xff]
      %v653 = vld [vmem:[%s1 + $0x248] sm:$0xff]
      %v654 = vld [vmem:[%s1 + $0x250] sm:$0xff]
      %v655 = vld [vmem:[%s1 + $0x258] sm:$0xff]
      %v656 = vld [vmem:[%s1 + $0x260] sm:$0xff]
      %v657 = vld [vmem:[%s1 + $0x268] sm:$0xff]
      %v658 = vld [vmem:[%s1 + $0x270] sm:$0xff]
      %v659 = vld [vmem:[%s1 + $0x278] sm:$0xff]
      %v660 = vld [vmem:[%s1 + $0x280] sm:$0xff]
      %v661 = vld [vmem:[%s1 + $0x288] sm:$0xff]
      %v662 = vld [vmem:[%s1 + $0x290] sm:$0xff]
      %v663 = vld [vmem:[%s1 + $0x298] sm:$0xff]
      %v664 = vld [vmem:[%s1 + $0x2a0] sm:$0xff]
      %v665 = vld [vmem:[%s1 + $0x2a8] sm:$0xff]
      %v666 = vld [vmem:[%s1 + $0x2b0] sm:$0xff]
      %v667 = vld [vmem:[%s1 + $0x2b8] sm:$0xff]
      %v668 = vld [vmem:[%s1 + $0x2c0] sm:$0xff]
      %v669 = vld [vmem:[%s1 + $0x2c8] sm:$0xff]
      %v670 = vld [vmem:[%s1 + $0x2d0] sm:$0xff]
      %v671 = vld [vmem:[%s1 + $0x2d8] sm:$0xff]
      %v672 = vld [vmem:[%s1 + $0x2e0] sm:$0xff]
      %v673 = vld [vmem:[%s1 + $0x2e8] sm:$0xff]
      %v674 = vld [vmem:[%s1 + $0x2f0] sm:$0xff]
      %v675 = vld [vmem:[%s1 + $0x2f8] sm:$0xff]
      %v676 = vld [vmem:[%s1 + $0x300] sm:$0xff]
      %v677 = vld [vmem:[%s1 + $0x308] sm:$0xff]
      %v678 = vld [vmem:[%s1 + $0x310] sm:$0xff]
      %v679 = vld [vmem:[%s1 + $0x318] sm:$0xff]
      %v680 = vld [vmem:[%s1 + $0x320] sm:$0xff]
      %v681 = vld [vmem:[%s1 + $0x328] sm:$0xff]
      %v682 = vld [vmem:[%s1 + $0x330] sm:$0xff]
      %v683 = vld [vmem:[%s1 + $0x338] sm:$0xff]
      %v684 = vld [vmem:[%s1 + $0x340] sm:$0xff]
      %v685 = vld [vmem:[%s1 + $0x348] sm:$0xff]
      %v686 = vld [vmem:[%s1 + $0x350] sm:$0xff]
      %v687 = vld [vmem:[%s1 + $0x358] sm:$0xff]
      %v688 = vld [vmem:[%s1 + $0x360] sm:$0xff]
      %v689 = vld [vmem:[%s1 + $0x368] sm:$0xff]
      %v690 = vld [vmem:[%s1 + $0x370] sm:$0xff]
      %v691 = vld [vmem:[%s1 + $0x378] sm:$0xff]
      %v692 = vld [vmem:[%s1 + $0x380] sm:$0xff]
      %v693 = vld [vmem:[%s1 + $0x388] sm:$0xff]
      %v694 = vld [vmem:[%s1 + $0x390] sm:$0xff]
      %v695 = vld [vmem:[%s1 + $0x398] sm:$0xff]
      %v696 = vld [vmem:[%s1 + $0x3a0] sm:$0xff]
      %v697 = vld [vmem:[%s1 + $0x3a8] sm:$0xff]
      %v698 = vld [vmem:[%s1 + $0x3b0] sm:$0xff]
      %v699 = vld [vmem:[%s1 + $0x3b8] sm:$0xff]
      %v700 = vld [vmem:[%s1 + $0x3c0] sm:$0xff]
      %v701 = vld [vmem:[%s1 + $0x3c8] sm:$0xff]
      %v702 = vld [vmem:[%s1 + $0x3d0] sm:$0xff]
      %v703 = vld [vmem:[%s1 + $0x3d8] sm:$0xff]
      %v704 = vld [vmem:[%s1 + $0x3e0] sm:$0xff]
      %v705 = vld [vmem:[%s1 + $0x3e8] sm:$0xff]
      %v706 = vld [vmem:[%s1 + $0x3f0] sm:$0xff]
      %v707 = vld [vmem:[%s1 + $0x3f8] sm:$0xff]
      %v708 = vld [vmem:[%s1 + $0x400] sm:$0xff]
      %v709 = vld [vmem:[%s1 + $0x408] sm:$0xff]
      %v710 = vld [vmem:[%s1 + $0x410] sm:$0xff]
      %v711 = vld [vmem:[%s1 + $0x418] sm:$0xff]
      %v712 = vld [vmem:[%s1 + $0x420] sm:$0xff]
      %v713 = vld [vmem:[%s1 + $0x428] sm:$0xff]
      %v714 = vld [vmem:[%s1 + $0x430] sm:$0xff]
      %v715 = vld [vmem:[%s1 + $0x438] sm:$0xff]
      %v716 = vld [vmem:[%s1 + $0x440] sm:$0xff]
      %v717 = vld [vmem:[%s1 + $0x448] sm:$0xff]
      %v718 = vld [vmem:[%s1 + $0x450] sm:$0xff]
      %v719 = vld [vmem:[%s1 + $0x458] sm:$0xff]
      %v720 = vld [vmem:[%s1 + $0x460] sm:$0xff]
      %v721 = vld [vmem:[%s1 + $0x468] sm:$0xff]
      %v722 = vld [vmem:[%s1 + $0x470] sm:$0xff]
      %v723 = vld [vmem:[%s1 + $0x478] sm:$0xff]
      %724 = vmatprep.subr.mxu0 0.0
      %725 = vmatpush1.msra.mxu0 %v580
      %726 = vmatprep.subr.mxu0 0.0
      %727 = vmatpush1.msra.mxu0 %v581
      %728 = vmatprep.subr.mxu0 0.0
      %729 = vmatpush1.msra.mxu0 %v582
      %730 = vmatprep.subr.mxu0 0.0
      %731 = vmatpush1.msra.mxu0 %v583
      %732 = vmatprep.subr.mxu0 0.0
      %733 = vmatpush1.msra.mxu0 %v584
      %734 = vmatprep.subr.mxu0 0.0
      %735 = vmatpush1.msra.mxu0 %v585
      %736 = vmatprep.subr.mxu0 0.0
      %737 = vmatpush1.msra.mxu0 %v586
      %738 = vmatprep.subr.mxu0 0.0
      %739 = vmatpush1.msra.mxu0 %v587
      %740 = vmatprep.subr.mxu0 0.0
      %741 = vmatpush1.msra.mxu0 %v588
      %742 = vmatprep.subr.mxu0 0.0
      %743 = vmatpush1.msra.mxu0 %v589
      %744 = vmatprep.subr.mxu0 0.0
      %745 = vmatpush1.msra.mxu0 %v590
      %746 = vmatprep.subr.mxu0 0.0
      %747 = vmatpush1.msra.mxu0 %v591
      %748 = vmatprep.subr.mxu0 0.0
      %749 = vmatpush1.msra.mxu0 %v592
      %750 = vmatprep.subr.mxu0 0.0
      %751 = vmatpush1.msra.mxu0 %v593
      %752 = vmatprep.subr.mxu0 0.0
      %753 = vmatpush1.msra.mxu0 %v594
      %754 = vmatprep.subr.mxu0 0.0
      %755 = vmatpush1.msra.mxu0 %v595
      %756 = vmatprep.subr.mxu0 0.0
      %757 = vmatpush1.msra.mxu0 %v596
      %758 = vmatprep.subr.mxu0 0.0
      %759 = vmatpush1.msra.mxu0 %v597
      %760 = vmatprep.subr.mxu0 0.0
      %761 = vmatpush1.msra.mxu0 %v598
      %762 = vmatprep.subr.mxu0 0.0
      %763 = vmatpush1.msra.mxu0 %v599
      %764 = vmatprep.subr.mxu0 0.0
      %765 = vmatpush1.msra.mxu0 %v600
      %766 = vmatprep.subr.mxu0 0.0
      %767 = vmatpush1.msra.mxu0 %v601
      %768 = vmatprep.subr.mxu0 0.0
      %769 = vmatpush1.msra.mxu0 %v602
      %770 = vmatprep.subr.mxu0 0.0
      %771 = vmatpush1.msra.mxu0 %v603
      %772 = vmatprep.subr.mxu0 0.0
      %773 = vmatpush1.msra.mxu0 %v604
      %774 = vmatprep.subr.mxu0 0.0
      %775 = vmatpush1.msra.mxu0 %v605
      %776 = vmatprep.subr.mxu0 0.0
      %777 = vmatpush1.msra.mxu0 %v606
      %778 = vmatprep.subr.mxu0 0.0
      %779 = vmatpush1.msra.mxu0 %v607
      %780 = vmatprep.subr.mxu0 0.0
      %781 = vmatpush1.msra.mxu0 %v608
      %782 = vmatprep.subr.mxu0 0.0
      %783 = vmatpush1.msra.mxu0 %v609
      %784 = vmatprep.subr.mxu0 0.0
      %785 = vmatpush1.msra.mxu0 %v610
      %786 = vmatprep.subr.mxu0 0.0
      %787 = vmatpush1.msra.mxu0 %v611
      %788 = vmatprep.mubr.f32.mxu0 %v323
      %789 = vmatmul.mubr.f32.gmra.mrb[0].mxu0 %v291
      %v790 = vpop.f32.mrb[0].mxu0
      %v791 = vadd.f32 0.0, %v790
      %v792 = vpop.f32.mrb[0].mxu0
      %793 = vmatprep.mubr.f32.mxu0 %v324
      %794 = vmatmul.mubr.f32.gmra.mrb[0].mxu0 %v292
      %v795 = vpop.f32.mrb[0].mxu0
      %v796 = vadd.f32 0.0, %v795
      %v797 = vpop.f32.mrb[0].mxu0
      %798 = vmatprep.mubr.f32.mxu0 %v325
      %799 = vmatmul.mubr.f32.gmra.mrb[0].mxu0 %v293
      %v800 = vpop.f32.mrb[0].mxu0
      %v801 = vadd.f32 0.0, %v800
      %v802 = vpop.f32.mrb[0].mxu0
      %803 = vmatprep.mubr.f32.mxu0 %v326
      %804 = vmatmul.mubr.f32.gmra.mrb[0].mxu0 %v294
      %v805 = vpop.f32.mrb[0].mxu0
      %v806 = vadd.f32 0.0, %v805
      %v807 = vpop.f32.mrb[0].mxu0
      %808 = vmatprep.mubr.f32.mxu0 %v327
      %809 = vmatmul.mubr.f32.gmra.mrb[0].mxu0 %v295
      %v810 = vpop.f32.mrb[0].mxu0
      %v811 = vadd.f32 0.0, %v810
      %v812 = vpop.f32.mrb[0].mxu0
      %813 = vmatprep.mubr.f32.mxu0 %v328
      %814 = vmatmul.mubr.f32.gmra.mrb[0].mxu0 %v296
      %v815 = vpop.f32.mrb[0].mxu0
      %v816 = vadd.f32 0.0, %v815
      %v817 = vpop.f32.mrb[0].mxu0
      %818 = vmatprep.mubr.f32.mxu0 %v329
      %819 = vmatmul.mubr.f32.gmra.mrb[0].mxu0 %v297
      %v820 = vpop.f32.mrb[0].mxu0
      %v821 = vadd.f32 0.0, %v820
      %v822 = vpop.f32.mrb[0].mxu0
      %823 = vmatprep.mubr.f32.mxu0 %v330
      %824 = vmatmul.mubr.f32.gmra.mrb[0].mxu0 %v298
      %v825 = vpop.f32.mrb[0].mxu0
      %v826 = vadd.f32 0.0, %v825
      %v827 = vpop.f32.mrb[0].mxu0
      %828 = vmatprep.mubr.f32.mxu0 %v331
      %829 = vmatmul.mubr.f32.gmra.mrb[0].mxu0 %v299
      %v830 = vpop.f32.mrb[0].mxu0
      %v831 = vadd.f32 0.0, %v830
      %v832 = vpop.f32.mrb[0].mxu0
      %833 = vmatprep.mubr.f32.mxu0 %v332
      %834 = vmatmul.mubr.f32.gmra.mrb[0].mxu0 %v300
      %v835 = vpop.f32.mrb[0].mxu0
      %v836 = vadd.f32 0.0, %v835
      %v837 = vpop.f32.mrb[0].mxu0
      %838 = vmatprep.mubr.f32.mxu0 %v333
      %839 = vmatmul.mubr.f32.gmra.mrb[0].mxu0 %v301
      %v840 = vpop.f32.mrb[0].mxu0
      %v841 = vadd.f32 0.0, %v840
      %v842 = vpop.f32.mrb[0].mxu0
      %843 = vmatprep.mubr.f32.mxu0 %v334
      %844 = vmatmul.mubr.f32.gmra.mrb[0].mxu0 %v302
      %v845 = vpop.f32.mrb[0].mxu0
      %v846 = vadd.f32 0.0, %v845
      %v847 = vpop.f32.mrb[0].mxu0
      %848 = vmatprep.mubr.f32.mxu0 %v335
      %849 = vmatmul.mubr.f32.gmra.mrb[0].mxu0 %v303
      %v850 = vpop.f32.mrb[0].mxu0
      %v851 = vadd.f32 0.0, %v850
      %v852 = vpop.f32.mrb[0].mxu0
      %853 = vmatprep.mubr.f32.mxu0 %v336
      %854 = vmatmul.mubr.f32.gmra.mrb[0].mxu0 %v304
      %v855 = vpop.f32.mrb[0].mxu0
      %v856 = vadd.f32 0.0, %v855
      %v857 = vpop.f32.mrb[0].mxu0
      %858 = vmatprep.mubr.f32.mxu0 %v337
      %859 = vmatmul.mubr.f32.gmra.mrb[0].mxu0 %v305
      %v860 = vpop.f32.mrb[0].mxu0
      %v861 = vadd.f32 0.0, %v860
      %v862 = vpop.f32.mrb[0].mxu0
      %863 = vmatprep.mubr.f32.mxu0 %v338
      %864 = vmatmul.mubr.f32.gmra.mrb[0].mxu0 %v306
      %v865 = vpop.f32.mrb[0].mxu0
      %v866 = vadd.f32 0.0, %v865
      %v867 = vpop.f32.mrb[0].mxu0
      %868 = vmatprep.mubr.f32.mxu0 %v339
      %869 = vmatmul.mubr.f32.gmra.mrb[0].mxu0 %v307
      %v870 = vpop.f32.mrb[0].mxu0
      %v871 = vadd.f32 0.0, %v870
      %v872 = vpop.f32.mrb[0].mxu0
      %873 = vmatprep.mubr.f32.mxu0 %v340
      %874 = vmatmul.mubr.f32.gmra.mrb[0].mxu0 %v308
      %v875 = vpop.f32.mrb[0].mxu0
      %v876 = vadd.f32 0.0, %v875
      %v877 = vpop.f32.mrb[0].mxu0
      %878 = vmatprep.mubr.f32.mxu0 %v341
      %879 = vmatmul.mubr.f32.gmra.mrb[0].mxu0 %v309
      %v880 = vpop.f32.mrb[0].mxu0
      %v881 = vadd.f32 0.0, %v880
      %v882 = vpop.f32.mrb[0].mxu0
      %883 = vmatprep.mubr.f32.mxu0 %v342
      %884 = vmatmul.mubr.f32.gmra.mrb[0].mxu0 %v310
      %v885 = vpop.f32.mrb[0].mxu0
      %v886 = vadd.f32 0.0, %v885
      %v887 = vpop.f32.mrb[0].mxu0
      %888 = vmatprep.mubr.f32.mxu0 %v343
      %889 = vmatmul.mubr.f32.gmra.mrb[0].mxu0 %v311
      %v890 = vpop.f32.mrb[0].mxu0
      %v891 = vadd.f32 0.0, %v890
      %v892 = vpop.f32.mrb[0].mxu0
      %893 = vmatprep.mubr.f32.mxu0 %v344
      %894 = vmatmul.mubr.f32.gmra.mrb[0].mxu0 %v312
      %v895 = vpop.f32.mrb[0].mxu0
      %v896 = vadd.f32 0.0, %v895
      %v897 = vpop.f32.mrb[0].mxu0
      %898 = vmatprep.mubr.f32.mxu0 %v345
      %899 = vmatmul.mubr.f32.gmra.mrb[0].mxu0 %v313
      %v900 = vpop.f32.mrb[0].mxu0
      %v901 = vadd.f32 0.0, %v900
      %v902 = vpop.f32.mrb[0].mxu0
      %903 = vmatprep.mubr.f32.mxu0 %v346
      %904 = vmatmul.mubr.f32.gmra.mrb[0].mxu0 %v314
      %v905 = vpop.f32.mrb[0].mxu0
      %v906 = vadd.f32 0.0, %v905
      %v907 = vpop.f32.mrb[0].mxu0
      %908 = vmatprep.mubr.f32.mxu0 %v347
      %909 = vmatmul.mubr.f32.gmra.mrb[0].mxu0 %v315
      %v910 = vpop.f32.mrb[0].mxu0
      %v911 = vadd.f32 0.0, %v910
      %v912 = vpop.f32.mrb[0].mxu0
      %913 = vmatprep.mubr.f32.mxu0 %v348
      %914 = vmatmul.mubr.f32.gmra.mrb[0].mxu0 %v316
      %v915 = vpop.f32.mrb[0].mxu0
      %v916 = vadd.f32 0.0, %v915
      %v917 = vpop.f32.mrb[0].mxu0
      %918 = vmatprep.mubr.f32.mxu0 %v349
      %919 = vmatmul.mubr.f32.gmra.mrb[0].mxu0 %v317
      %v920 = vpop.f32.mrb[0].mxu0
      %v921 = vadd.f32 0.0, %v920
      %v922 = vpop.f32.mrb[0].mxu0
      %923 = vmatprep.mubr.f32.mxu0 %v350
      %924 = vmatmul.mubr.f32.gmra.mrb[0].mxu0 %v318
      %v925 = vpop.f32.mrb[0].mxu0
      %v926 = vadd.f32 0.0, %v925
      %v927 = vpop.f32.mrb[0].mxu0
      %928 = vmatprep.mubr.f32.mxu0 %v351
      %929 = vmatmul.mubr.f32.gmra.mrb[0].mxu0 %v319
      %v930 = vpop.f32.mrb[0].mxu0
      %v931 = vadd.f32 0.0, %v930
      %v932 = vpop.f32.mrb[0].mxu0
      %933 = vmatprep.mubr.f32.mxu0 %v352
      %934 = vmatmul.mubr.f32.gmra.mrb[0].mxu0 %v320
      %v935 = vpop.f32.mrb[0].mxu0
      %v936 = vadd.f32 0.0, %v935
      %v937 = vpop.f32.mrb[0].mxu0
      %938 = vmatprep.mubr.f32.mxu0 %v353
      %939 = vmatmul.mubr.f32.gmra.mrb[0].mxu0 %v321
      %v940 = vpop.f32.mrb[0].mxu0
      %v941 = vadd.f32 0.0, %v940
      %v942 = vpop.f32.mrb[0].mxu0
      %943 = vmatprep.mubr.f32.mxu0 %v354
      %944 = vmatmul.mubr.f32.gmra.mrb[0].mxu0 %v322
      %v945 = vpop.f32.mrb[0].mxu0
      %v946 = vadd.f32 0.0, %v945
      %v947 = vpop.f32.mrb[0].mxu0
      %948 = vdwg.mxu0
      %949 = vmatprep.subr.mxu0 0.0
      %950 = vmatpush1.msra.mxu0 %v612
      %951 = vmatprep.subr.mxu0 0.0
      %952 = vmatpush1.msra.mxu0 %v613
      %953 = vmatprep.subr.mxu0 0.0
      %954 = vmatpush1.msra.mxu0 %v614
      %955 = vmatprep.subr.mxu0 0.0
      %956 = vmatpush1.msra.mxu0 %v615
      %957 = vmatprep.subr.mxu0 0.0
      %958 = vmatpush1.msra.mxu0 %v616
      %959 = vmatprep.subr.mxu0 0.0
      %960 = vmatpush1.msra.mxu0 %v617
      %961 = vmatprep.subr.mxu0 0.0
      %962 = vmatpush1.msra.mxu0 %v618
      %963 = vmatprep.subr.mxu0 0.0
      %964 = vmatpush1.msra.mxu0 %v619
      %965 = vmatprep.subr.mxu0 0.0
      %966 = vmatpush1.msra.mxu0 %v620
      %967 = vmatprep.subr.mxu0 0.0
      %968 = vmatpush1.msra.mxu0 %v621
      %969 = vmatprep.subr.mxu0 0.0
      %970 = vmatpush1.msra.mxu0 %v622
      %971 = vmatprep.subr.mxu0 0.0
      %972 = vmatpush1.msra.mxu0 %v623
      %973 = vmatprep.subr.mxu0 0.0
      %974 = vmatpush1.msra.mxu0 %v624
      %975 = vmatprep.subr.mxu0 0.0
      %976 = vmatpush1.msra.mxu0 %v625
      %977 = vmatprep.subr.mxu0 0.0
      %978 = vmatpush1.msra.mxu0 %v626
      %979 = vmatprep.subr.mxu0 0.0
      %980 = vmatpush1.msra.mxu0 %v627
      %981 = vmatprep.subr.mxu0 0.0
      %982 = vmatpush1.msra.mxu0 %v628
      %983 = vmatprep.subr.mxu0 0.0
      %984 = vmatpush1.msra.mxu0 %v629
      %985 = vmatprep.subr.mxu0 0.0
      %986 = vmatpush1.msra.mxu0 %v630
      %987 = vmatprep.subr.mxu0 0.0
      %988 = vmatpush1.msra.mxu0 %v631
      %989 = vmatprep.subr.mxu0 0.0
      %990 = vmatpush1.msra.mxu0 %v632
      %991 = vmatprep.subr.mxu0 0.0
      %992 = vmatpush1.msra.mxu0 %v633
      %993 = vmatprep.subr.mxu0 0.0
      %994 = vmatpush1.msra.mxu0 %v634
      %995 = vmatprep.subr.mxu0 0.0
      %996 = vmatpush1.msra.mxu0 %v635
      %997 = vmatprep.subr.mxu0 0.0
      %998 = vmatpush1.msra.mxu0 %v636
      %999 = vmatprep.subr.mxu0 0.0
      %1000 = vmatpush1.msra.mxu0 %v637
      %1001 = vmatprep.subr.mxu0 0.0
      %1002 = vmatpush1.msra.mxu0 %v638
      %1003 = vmatprep.subr.mxu0 0.0
      %1004 = vmatpush1.msra.mxu0 %v639
      %1005 = vmatprep.subr.mxu0 0.0
      %1006 = vmatpush1.msra.mxu0 %v640
      %1007 = vmatprep.subr.mxu0 0.0
      %1008 = vmatpush1.msra.mxu0 %v641
      %1009 = vmatprep.subr.mxu0 0.0
      %1010 = vmatpush1.msra.mxu0 %v642
      %1011 = vmatprep.subr.mxu0 0.0
      %1012 = vmatpush1.msra.mxu0 %v643
      %1013 = vmatprep.mubr.f32.mxu0 %v387
      %1014 = vmatmul.mubr.f32.gmra.mrb[0].mxu0 %v355
      %v1015 = vpop.f32.mrb[0].mxu0
      %v1016 = vadd.f32 %v791, %v1015
      %v1017 = vpop.f32.mrb[0].mxu0
      %1018 = vmatprep.mubr.f32.mxu0 %v388
      %1019 = vmatmul.mubr.f32.gmra.mrb[0].mxu0 %v356
      %v1020 = vpop.f32.mrb[0].mxu0
      %v1021 = vadd.f32 %v796, %v1020
      %v1022 = vpop.f32.mrb[0].mxu0
      %1023 = vmatprep.mubr.f32.mxu0 %v389
      %1024 = vmatmul.mubr.f32.gmra.mrb[0].mxu0 %v357
      %v1025 = vpop.f32.mrb[0].mxu0
      %v1026 = vadd.f32 %v801, %v1025
      %v1027 = vpop.f32.mrb[0].mxu0
      %1028 = vmatprep.mubr.f32.mxu0 %v390
      %1029 = vmatmul.mubr.f32.gmra.mrb[0].mxu0 %v358
      %v1030 = vpop.f32.mrb[0].mxu0
      %v1031 = vadd.f32 %v806, %v1030
      %v1032 = vpop.f32.mrb[0].mxu0
      %1033 = vmatprep.mubr.f32.mxu0 %v391
      %1034 = vmatmul.mubr.f32.gmra.mrb[0].mxu0 %v359
      %v1035 = vpop.f32.mrb[0].mxu0
      %v1036 = vadd.f32 %v811, %v1035
      %v1037 = vpop.f32.mrb[0].mxu0
      %1038 = vmatprep.mubr.f32.mxu0 %v392
      %1039 = vmatmul.mubr.f32.gmra.mrb[0].mxu0 %v360
      %v1040 = vpop.f32.mrb[0].mxu0
      %v1041 = vadd.f32 %v816, %v1040
      %v1042 = vpop.f32.mrb[0].mxu0
      %1043 = vmatprep.mubr.f32.mxu0 %v393
      %1044 = vmatmul.mubr.f32.gmra.mrb[0].mxu0 %v361
      %v1045 = vpop.f32.mrb[0].mxu0
      %v1046 = vadd.f32 %v821, %v1045
      %v1047 = vpop.f32.mrb[0].mxu0
      %1048 = vmatprep.mubr.f32.mxu0 %v394
      %1049 = vmatmul.mubr.f32.gmra.mrb[0].mxu0 %v362
      %v1050 = vpop.f32.mrb[0].mxu0
      %v1051 = vadd.f32 %v826, %v1050
      %v1052 = vpop.f32.mrb[0].mxu0
      %1053 = vmatprep.mubr.f32.mxu0 %v395
      %1054 = vmatmul.mubr.f32.gmra.mrb[0].mxu0 %v363
      %v1055 = vpop.f32.mrb[0].mxu0
      %v1056 = vadd.f32 %v831, %v1055
      %v1057 = vpop.f32.mrb[0].mxu0
      %1058 = vmatprep.mubr.f32.mxu0 %v396
      %1059 = vmatmul.mubr.f32.gmra.mrb[0].mxu0 %v364
      %v1060 = vpop.f32.mrb[0].mxu0
      %v1061 = vadd.f32 %v836, %v1060
      %v1062 = vpop.f32.mrb[0].mxu0
      %1063 = vmatprep.mubr.f32.mxu0 %v397
      %1064 = vmatmul.mubr.f32.gmra.mrb[0].mxu0 %v365
      %v1065 = vpop.f32.mrb[0].mxu0
      %v1066 = vadd.f32 %v841, %v1065
      %v1067 = vpop.f32.mrb[0].mxu0
      %1068 = vmatprep.mubr.f32.mxu0 %v398
      %1069 = vmatmul.mubr.f32.gmra.mrb[0].mxu0 %v366
      %v1070 = vpop.f32.mrb[0].mxu0
      %v1071 = vadd.f32 %v846, %v1070
      %v1072 = vpop.f32.mrb[0].mxu0
      %1073 = vmatprep.mubr.f32.mxu0 %v399
      %1074 = vmatmul.mubr.f32.gmra.mrb[0].mxu0 %v367
      %v1075 = vpop.f32.mrb[0].mxu0
      %v1076 = vadd.f32 %v851, %v1075
      %v1077 = vpop.f32.mrb[0].mxu0
      %1078 = vmatprep.mubr.f32.mxu0 %v400
      %1079 = vmatmul.mubr.f32.gmra.mrb[0].mxu0 %v368
      %v1080 = vpop.f32.mrb[0].mxu0
      %v1081 = vadd.f32 %v856, %v1080
      %v1082 = vpop.f32.mrb[0].mxu0
      %1083 = vmatprep.mubr.f32.mxu0 %v401
      %1084 = vmatmul.mubr.f32.gmra.mrb[0].mxu0 %v369
      %v1085 = vpop.f32.mrb[0].mxu0
      %v1086 = vadd.f32 %v861, %v1085
      %v1087 = vpop.f32.mrb[0].mxu0
      %1088 = vmatprep.mubr.f32.mxu0 %v402
      %1089 = vmatmul.mubr.f32.gmra.mrb[0].mxu0 %v370
      %v1090 = vpop.f32.mrb[0].mxu0
      %v1091 = vadd.f32 %v866, %v1090
      %v1092 = vpop.f32.mrb[0].mxu0
      %1093 = vmatprep.mubr.f32.mxu0 %v403
      %1094 = vmatmul.mubr.f32.gmra.mrb[0].mxu0 %v371
      %v1095 = vpop.f32.mrb[0].mxu0
      %v1096 = vadd.f32 %v871, %v1095
      %v1097 = vpop.f32.mrb[0].mxu0
      %1098 = vmatprep.mubr.f32.mxu0 %v404
      %1099 = vmatmul.mubr.f32.gmra.mrb[0].mxu0 %v372
      %v1100 = vpop.f32.mrb[0].mxu0
      %v1101 = vadd.f32 %v876, %v1100
      %v1102 = vpop.f32.mrb[0].mxu0
      %1103 = vmatprep.mubr.f32.mxu0 %v405
      %1104 = vmatmul.mubr.f32.gmra.mrb[0].mxu0 %v373
      %v1105 = vpop.f32.mrb[0].mxu0
      %v1106 = vadd.f32 %v881, %v1105
      %v1107 = vpop.f32.mrb[0].mxu0
      %1108 = vmatprep.mubr.f32.mxu0 %v406
      %1109 = vmatmul.mubr.f32.gmra.mrb[0].mxu0 %v374
      %v1110 = vpop.f32.mrb[0].mxu0
      %v1111 = vadd.f32 %v886, %v1110
      %v1112 = vpop.f32.mrb[0].mxu0
      %1113 = vmatprep.mubr.f32.mxu0 %v407
      %1114 = vmatmul.mubr.f32.gmra.mrb[0].mxu0 %v375
      %v1115 = vpop.f32.mrb[0].mxu0
      %v1116 = vadd.f32 %v891, %v1115
      %v1117 = vpop.f32.mrb[0].mxu0
      %1118 = vmatprep.mubr.f32.mxu0 %v408
      %1119 = vmatmul.mubr.f32.gmra.mrb[0].mxu0 %v376
      %v1120 = vpop.f32.mrb[0].mxu0
      %v1121 = vadd.f32 %v896, %v1120
      %v1122 = vpop.f32.mrb[0].mxu0
      %1123 = vmatprep.mubr.f32.mxu0 %v409
      %1124 = vmatmul.mubr.f32.gmra.mrb[0].mxu0 %v377
      %v1125 = vpop.f32.mrb[0].mxu0
      %v1126 = vadd.f32 %v901, %v1125
      %v1127 = vpop.f32.mrb[0].mxu0
      %1128 = vmatprep.mubr.f32.mxu0 %v410
      %1129 = vmatmul.mubr.f32.gmra.mrb[0].mxu0 %v378
      %v1130 = vpop.f32.mrb[0].mxu0
      %v1131 = vadd.f32 %v906, %v1130
      %v1132 = vpop.f32.mrb[0].mxu0
      %1133 = vmatprep.mubr.f32.mxu0 %v411
      %1134 = vmatmul.mubr.f32.gmra.mrb[0].mxu0 %v379
      %v1135 = vpop.f32.mrb[0].mxu0
      %v1136 = vadd.f32 %v911, %v1135
      %v1137 = vpop.f32.mrb[0].mxu0
      %1138 = vmatprep.mubr.f32.mxu0 %v412
      %1139 = vmatmul.mubr.f32.gmra.mrb[0].mxu0 %v380
      %v1140 = vpop.f32.mrb[0].mxu0
      %v1141 = vadd.f32 %v916, %v1140
      %v1142 = vpop.f32.mrb[0].mxu0
      %1143 = vmatprep.mubr.f32.mxu0 %v413
      %1144 = vmatmul.mubr.f32.gmra.mrb[0].mxu0 %v381
      %v1145 = vpop.f32.mrb[0].mxu0
      %v1146 = vadd.f32 %v921, %v1145
      %v1147 = vpop.f32.mrb[0].mxu0
      %1148 = vmatprep.mubr.f32.mxu0 %v414
      %1149 = vmatmul.mubr.f32.gmra.mrb[0].mxu0 %v382
      %v1150 = vpop.f32.mrb[0].mxu0
      %v1151 = vadd.f32 %v926, %v1150
      %v1152 = vpop.f32.mrb[0].mxu0
      %1153 = vmatprep.mubr.f32.mxu0 %v415
      %1154 = vmatmul.mubr.f32.gmra.mrb[0].mxu0 %v383
      %v1155 = vpop.f32.mrb[0].mxu0
      %v1156 = vadd.f32 %v931, %v1155
      %v1157 = vpop.f32.mrb[0].mxu0
      %1158 = vmatprep.mubr.f32.mxu0 %v416
      %1159 = vmatmul.mubr.f32.gmra.mrb[0].mxu0 %v384
      %v1160 = vpop.f32.mrb[0].mxu0
      %v1161 = vadd.f32 %v936, %v1160
      %v1162 = vpop.f32.mrb[0].mxu0
      %1163 = vmatprep.mubr.f32.mxu0 %v417
      %1164 = vmatmul.mubr.f32.gmra.mrb[0].mxu0 %v385
      %v1165 = vpop.f32.mrb[0].mxu0
      %v1166 = vadd.f32 %v941, %v1165
      %v1167 = vpop.f32.mrb[0].mxu0
      %1168 = vmatprep.mubr.f32.mxu0 %v418
      %1169 = vmatmul.mubr.f32.gmra.mrb[0].mxu0 %v386
      %v1170 = vpop.f32.mrb[0].mxu0
      %v1171 = vadd.f32 %v946, %v1170
      %v1172 = vpop.f32.mrb[0].mxu0
      %1173 = vdwg.mxu0
      %1174 = vmatprep.subr.mxu0 0.0
      %1175 = vmatpush1.msra.mxu0 %v644
      %1176 = vmatprep.subr.mxu0 0.0
      %1177 = vmatpush1.msra.mxu0 %v645
      %1178 = vmatprep.subr.mxu0 0.0
      %1179 = vmatpush1.msra.mxu0 %v646
      %1180 = vmatprep.subr.mxu0 0.0
      %1181 = vmatpush1.msra.mxu0 %v647
      %1182 = vmatprep.subr.mxu0 0.0
      %1183 = vmatpush1.msra.mxu0 %v648
      %1184 = vmatprep.subr.mxu0 0.0
      %1185 = vmatpush1.msra.mxu0 %v649
      %1186 = vmatprep.subr.mxu0 0.0
      %1187 = vmatpush1.msra.mxu0 %v650
      %1188 = vmatprep.subr.mxu0 0.0
      %1189 = vmatpush1.msra.mxu0 %v651
      %1190 = vmatprep.subr.mxu0 0.0
      %1191 = vmatpush1.msra.mxu0 %v652
      %1192 = vmatprep.subr.mxu0 0.0
      %1193 = vmatpush1.msra.mxu0 %v653
      %1194 = vmatprep.subr.mxu0 0.0
      %1195 = vmatpush1.msra.mxu0 %v654
      %1196 = vmatprep.subr.mxu0 0.0
      %1197 = vmatpush1.msra.mxu0 %v655
      %1198 = vmatprep.subr.mxu0 0.0
      %1199 = vmatpush1.msra.mxu0 %v656
      %1200 = vmatprep.subr.mxu0 0.0
      %1201 = vmatpush1.msra.mxu0 %v657
      %1202 = vmatprep.subr.mxu0 0.0
      %1203 = vmatpush1.msra.mxu0 %v658
      %1204 = vmatprep.subr.mxu0 0.0
      %1205 = vmatpush1.msra.mxu0 %v659
      %1206 = vmatprep.subr.mxu0 0.0
      %1207 = vmatpush1.msra.mxu0 %v660
      %1208 = vmatprep.subr.mxu0 0.0
      %1209 = vmatpush1.msra.mxu0 %v661
      %1210 = vmatprep.subr.mxu0 0.0
      %1211 = vmatpush1.msra.mxu0 %v662
      %1212 = vmatprep.subr.mxu0 0.0
      %1213 = vmatpush1.msra.mxu0 %v663
      %1214 = vmatprep.subr.mxu0 0.0
      %1215 = vmatpush1.msra.mxu0 %v664
      %1216 = vmatprep.subr.mxu0 0.0
      %1217 = vmatpush1.msra.mxu0 %v665
      %1218 = vmatprep.subr.mxu0 0.0
      %1219 = vmatpush1.msra.mxu0 %v666
      %1220 = vmatprep.subr.mxu0 0.0
      %1221 = vmatpush1.msra.mxu0 %v667
      %1222 = vmatprep.subr.mxu0 0.0
      %1223 = vmatpush1.msra.mxu0 %v668
      %1224 = vmatprep.subr.mxu0 0.0
      %1225 = vmatpush1.msra.mxu0 %v669
      %1226 = vmatprep.subr.mxu0 0.0
      %1227 = vmatpush1.msra.mxu0 %v670
      %1228 = vmatprep.subr.mxu0 0.0
      %1229 = vmatpush1.msra.mxu0 %v671
      %1230 = vmatprep.subr.mxu0 0.0
      %1231 = vmatpush1.msra.mxu0 %v672
      %1232 = vmatprep.subr.mxu0 0.0
      %1233 = vmatpush1.msra.mxu0 %v673
      %1234 = vmatprep.subr.mxu0 0.0
      %1235 = vmatpush1.msra.mxu0 %v674
      %1236 = vmatprep.subr.mxu0 0.0
      %1237 = vmatpush1.msra.mxu0 %v675
      %1238 = vmatprep.mubr.f32.mxu0 %v451
      %1239 = vmatmul.mubr.f32.gmra.mrb[0].mxu0 %v419
      %v1240 = vpop.f32.mrb[0].mxu0
      %v1241 = vadd.f32 %v1016, %v1240
      %v1242 = vpop.f32.mrb[0].mxu0
      %1243 = vmatprep.mubr.f32.mxu0 %v452
      %1244 = vmatmul.mubr.f32.gmra.mrb[0].mxu0 %v420
      %v1245 = vpop.f32.mrb[0].mxu0
      %v1246 = vadd.f32 %v1021, %v1245
      %v1247 = vpop.f32.mrb[0].mxu0
      %1248 = vmatprep.mubr.f32.mxu0 %v453
      %1249 = vmatmul.mubr.f32.gmra.mrb[0].mxu0 %v421
      %v1250 = vpop.f32.mrb[0].mxu0
      %v1251 = vadd.f32 %v1026, %v1250
      %v1252 = vpop.f32.mrb[0].mxu0
      %1253 = vmatprep.mubr.f32.mxu0 %v454
      %1254 = vmatmul.mubr.f32.gmra.mrb[0].mxu0 %v422
      %v1255 = vpop.f32.mrb[0].mxu0
      %v1256 = vadd.f32 %v1031, %v1255
      %v1257 = vpop.f32.mrb[0].mxu0
      %1258 = vmatprep.mubr.f32.mxu0 %v455
      %1259 = vmatmul.mubr.f32.gmra.mrb[0].mxu0 %v423
      %v1260 = vpop.f32.mrb[0].mxu0
      %v1261 = vadd.f32 %v1036, %v1260
      %v1262 = vpop.f32.mrb[0].mxu0
      %1263 = vmatprep.mubr.f32.mxu0 %v456
      %1264 = vmatmul.mubr.f32.gmra.mrb[0].mxu0 %v424
      %v1265 = vpop.f32.mrb[0].mxu0
      %v1266 = vadd.f32 %v1041, %v1265
      %v1267 = vpop.f32.mrb[0].mxu0
      %1268 = vmatprep.mubr.f32.mxu0 %v457
      %1269 = vmatmul.mubr.f32.gmra.mrb[0].mxu0 %v425
      %v1270 = vpop.f32.mrb[0].mxu0
      %v1271 = vadd.f32 %v1046, %v1270
      %v1272 = vpop.f32.mrb[0].mxu0
      %1273 = vmatprep.mubr.f32.mxu0 %v458
      %1274 = vmatmul.mubr.f32.gmra.mrb[0].mxu0 %v426
      %v1275 = vpop.f32.mrb[0].mxu0
      %v1276 = vadd.f32 %v1051, %v1275
      %v1277 = vpop.f32.mrb[0].mxu0
      %1278 = vmatprep.mubr.f32.mxu0 %v459
      %1279 = vmatmul.mubr.f32.gmra.mrb[0].mxu0 %v427
      %v1280 = vpop.f32.mrb[0].mxu0
      %v1281 = vadd.f32 %v1056, %v1280
      %v1282 = vpop.f32.mrb[0].mxu0
      %1283 = vmatprep.mubr.f32.mxu0 %v460
      %1284 = vmatmul.mubr.f32.gmra.mrb[0].mxu0 %v428
      %v1285 = vpop.f32.mrb[0].mxu0
      %v1286 = vadd.f32 %v1061, %v1285
      %v1287 = vpop.f32.mrb[0].mxu0
      %1288 = vmatprep.mubr.f32.mxu0 %v461
      %1289 = vmatmul.mubr.f32.gmra.mrb[0].mxu0 %v429
      %v1290 = vpop.f32.mrb[0].mxu0
      %v1291 = vadd.f32 %v1066, %v1290
      %v1292 = vpop.f32.mrb[0].mxu0
      %1293 = vmatprep.mubr.f32.mxu0 %v462
      %1294 = vmatmul.mubr.f32.gmra.mrb[0].mxu0 %v430
      %v1295 = vpop.f32.mrb[0].mxu0
      %v1296 = vadd.f32 %v1071, %v1295
      %v1297 = vpop.f32.mrb[0].mxu0
      %1298 = vmatprep.mubr.f32.mxu0 %v463
      %1299 = vmatmul.mubr.f32.gmra.mrb[0].mxu0 %v431
      %v1300 = vpop.f32.mrb[0].mxu0
      %v1301 = vadd.f32 %v1076, %v1300
      %v1302 = vpop.f32.mrb[0].mxu0
      %1303 = vmatprep.mubr.f32.mxu0 %v464
      %1304 = vmatmul.mubr.f32.gmra.mrb[0].mxu0 %v432
      %v1305 = vpop.f32.mrb[0].mxu0
      %v1306 = vadd.f32 %v1081, %v1305
      %v1307 = vpop.f32.mrb[0].mxu0
      %1308 = vmatprep.mubr.f32.mxu0 %v465
      %1309 = vmatmul.mubr.f32.gmra.mrb[0].mxu0 %v433
      %v1310 = vpop.f32.mrb[0].mxu0
      %v1311 = vadd.f32 %v1086, %v1310
      %v1312 = vpop.f32.mrb[0].mxu0
      %1313 = vmatprep.mubr.f32.mxu0 %v466
      %1314 = vmatmul.mubr.f32.gmra.mrb[0].mxu0 %v434
      %v1315 = vpop.f32.mrb[0].mxu0
      %v1316 = vadd.f32 %v1091, %v1315
      %v1317 = vpop.f32.mrb[0].mxu0
      %1318 = vmatprep.mubr.f32.mxu0 %v467
      %1319 = vmatmul.mubr.f32.gmra.mrb[0].mxu0 %v435
      %v1320 = vpop.f32.mrb[0].mxu0
      %v1321 = vadd.f32 %v1096, %v1320
      %v1322 = vpop.f32.mrb[0].mxu0
      %1323 = vmatprep.mubr.f32.mxu0 %v468
      %1324 = vmatmul.mubr.f32.gmra.mrb[0].mxu0 %v436
      %v1325 = vpop.f32.mrb[0].mxu0
      %v1326 = vadd.f32 %v1101, %v1325
      %v1327 = vpop.f32.mrb[0].mxu0
      %1328 = vmatprep.mubr.f32.mxu0 %v469
      %1329 = vmatmul.mubr.f32.gmra.mrb[0].mxu0 %v437
      %v1330 = vpop.f32.mrb[0].mxu0
      %v1331 = vadd.f32 %v1106, %v1330
      %v1332 = vpop.f32.mrb[0].mxu0
      %1333 = vmatprep.mubr.f32.mxu0 %v470
      %1334 = vmatmul.mubr.f32.gmra.mrb[0].mxu0 %v438
      %v1335 = vpop.f32.mrb[0].mxu0
      %v1336 = vadd.f32 %v1111, %v1335
      %v1337 = vpop.f32.mrb[0].mxu0
      %1338 = vmatprep.mubr.f32.mxu0 %v471
      %1339 = vmatmul.mubr.f32.gmra.mrb[0].mxu0 %v439
      %v1340 = vpop.f32.mrb[0].mxu0
      %v1341 = vadd.f32 %v1116, %v1340
      %v1342 = vpop.f32.mrb[0].mxu0
      %1343 = vmatprep.mubr.f32.mxu0 %v472
      %1344 = vmatmul.mubr.f32.gmra.mrb[0].mxu0 %v440
      %v1345 = vpop.f32.mrb[0].mxu0
      %v1346 = vadd.f32 %v1121, %v1345
      %v1347 = vpop.f32.mrb[0].mxu0
      %1348 = vmatprep.mubr.f32.mxu0 %v473
      %1349 = vmatmul.mubr.f32.gmra.mrb[0].mxu0 %v441
      %v1350 = vpop.f32.mrb[0].mxu0
      %v1351 = vadd.f32 %v1126, %v1350
      %v1352 = vpop.f32.mrb[0].mxu0
      %1353 = vmatprep.mubr.f32.mxu0 %v474
      %1354 = vmatmul.mubr.f32.gmra.mrb[0].mxu0 %v442
      %v1355 = vpop.f32.mrb[0].mxu0
      %v1356 = vadd.f32 %v1131, %v1355
      %v1357 = vpop.f32.mrb[0].mxu0
      %1358 = vmatprep.mubr.f32.mxu0 %v475
      %1359 = vmatmul.mubr.f32.gmra.mrb[0].mxu0 %v443
      %v1360 = vpop.f32.mrb[0].mxu0
      %v1361 = vadd.f32 %v1136, %v1360
      %v1362 = vpop.f32.mrb[0].mxu0
      %1363 = vmatprep.mubr.f32.mxu0 %v476
      %1364 = vmatmul.mubr.f32.gmra.mrb[0].mxu0 %v444
      %v1365 = vpop.f32.mrb[0].mxu0
      %v1366 = vadd.f32 %v1141, %v1365
      %v1367 = vpop.f32.mrb[0].mxu0
      %1368 = vmatprep.mubr.f32.mxu0 %v477
      %1369 = vmatmul.mubr.f32.gmra.mrb[0].mxu0 %v445
      %v1370 = vpop.f32.mrb[0].mxu0
      %v1371 = vadd.f32 %v1146, %v1370
      %v1372 = vpop.f32.mrb[0].mxu0
      %1373 = vmatprep.mubr.f32.mxu0 %v478
      %1374 = vmatmul.mubr.f32.gmra.mrb[0].mxu0 %v446
      %v1375 = vpop.f32.mrb[0].mxu0
      %v1376 = vadd.f32 %v1151, %v1375
      %v1377 = vpop.f32.mrb[0].mxu0
      %1378 = vmatprep.mubr.f32.mxu0 %v479
      %1379 = vmatmul.mubr.f32.gmra.mrb[0].mxu0 %v447
      %v1380 = vpop.f32.mrb[0].mxu0
      %v1381 = vadd.f32 %v1156, %v1380
      %v1382 = vpop.f32.mrb[0].mxu0
      %1383 = vmatprep.mubr.f32.mxu0 %v480
      %1384 = vmatmul.mubr.f32.gmra.mrb[0].mxu0 %v448
      %v1385 = vpop.f32.mrb[0].mxu0
      %v1386 = vadd.f32 %v1161, %v1385
      %v1387 = vpop.f32.mrb[0].mxu0
      %1388 = vmatprep.mubr.f32.mxu0 %v481
      %1389 = vmatmul.mubr.f32.gmra.mrb[0].mxu0 %v449
      %v1390 = vpop.f32.mrb[0].mxu0
      %v1391 = vadd.f32 %v1166, %v1390
      %v1392 = vpop.f32.mrb[0].mxu0
      %1393 = vmatprep.mubr.f32.mxu0 %v482
      %1394 = vmatmul.mubr.f32.gmra.mrb[0].mxu0 %v450
      %v1395 = vpop.f32.mrb[0].mxu0
      %v1396 = vadd.f32 %v1171, %v1395
      %v1397 = vpop.f32.mrb[0].mxu0
      %1398 = vdwg.mxu0
      %1399 = vmatprep.subr.mxu0 0.0
      %1400 = vmatpush1.msra.mxu0 %v676
      %1401 = vmatprep.subr.mxu0 0.0
      %1402 = vmatpush1.msra.mxu0 %v677
      %1403 = vmatprep.subr.mxu0 0.0
      %1404 = vmatpush1.msra.mxu0 %v678
      %1405 = vmatprep.subr.mxu0 0.0
      %1406 = vmatpush1.msra.mxu0 %v679
      %1407 = vmatprep.subr.mxu0 0.0
      %1408 = vmatpush1.msra.mxu0 %v680
      %1409 = vmatprep.subr.mxu0 0.0
      %1410 = vmatpush1.msra.mxu0 %v681
      %1411 = vmatprep.subr.mxu0 0.0
      %1412 = vmatpush1.msra.mxu0 %v682
      %1413 = vmatprep.subr.mxu0 0.0
      %1414 = vmatpush1.msra.mxu0 %v683
      %1415 = vmatprep.subr.mxu0 0.0
      %1416 = vmatpush1.msra.mxu0 %v684
      %1417 = vmatprep.subr.mxu0 0.0
      %1418 = vmatpush1.msra.mxu0 %v685
      %1419 = vmatprep.subr.mxu0 0.0
      %1420 = vmatpush1.msra.mxu0 %v686
      %1421 = vmatprep.subr.mxu0 0.0
      %1422 = vmatpush1.msra.mxu0 %v687
      %1423 = vmatprep.subr.mxu0 0.0
      %1424 = vmatpush1.msra.mxu0 %v688
      %1425 = vmatprep.subr.mxu0 0.0
      %1426 = vmatpush1.msra.mxu0 %v689
      %1427 = vmatprep.subr.mxu0 0.0
      %1428 = vmatpush1.msra.mxu0 %v690
      %1429 = vmatprep.subr.mxu0 0.0
      %1430 = vmatpush1.msra.mxu0 %v691
      %1431 = vmatprep.subr.mxu0 0.0
      %1432 = vmatpush1.msra.mxu0 %v692
      %1433 = vmatprep.subr.mxu0 0.0
      %1434 = vmatpush1.msra.mxu0 %v693
      %1435 = vmatprep.subr.mxu0 0.0
      %1436 = vmatpush1.msra.mxu0 %v694
      %1437 = vmatprep.subr.mxu0 0.0
      %1438 = vmatpush1.msra.mxu0 %v695
      %1439 = vmatprep.subr.mxu0 0.0
      %1440 = vmatpush1.msra.mxu0 %v696
      %1441 = vmatprep.subr.mxu0 0.0
      %1442 = vmatpush1.msra.mxu0 %v697
      %1443 = vmatprep.subr.mxu0 0.0
      %1444 = vmatpush1.msra.mxu0 %v698
      %1445 = vmatprep.subr.mxu0 0.0
      %1446 = vmatpush1.msra.mxu0 %v699
      %1447 = vmatprep.subr.mxu0 0.0
      %1448 = vmatpush1.msra.mxu0 %v700
      %1449 = vmatprep.subr.mxu0 0.0
      %1450 = vmatpush1.msra.mxu0 %v701
      %1451 = vmatprep.subr.mxu0 0.0
      %1452 = vmatpush1.msra.mxu0 %v702
      %1453 = vmatprep.subr.mxu0 0.0
      %1454 = vmatpush1.msra.mxu0 %v703
      %1455 = vmatprep.subr.mxu0 0.0
      %1456 = vmatpush1.msra.mxu0 %v704
      %1457 = vmatprep.subr.mxu0 0.0
      %1458 = vmatpush1.msra.mxu0 %v705
      %1459 = vmatprep.subr.mxu0 0.0
      %1460 = vmatpush1.msra.mxu0 %v706
      %1461 = vmatprep.subr.mxu0 0.0
      %1462 = vmatpush1.msra.mxu0 %v707
      %1463 = vmatprep.mubr.f32.mxu0 %v516
      %1464 = vmatmul.mubr.f32.gmra.mrb[0].mxu0 %v484
      %v1465 = vpop.f32.mrb[0].mxu0
      %v1466 = vadd.f32 %v1241, %v1465
      %v1467 = vpop.f32.mrb[0].mxu0
      %1468 = vmatprep.mubr.f32.mxu0 %v517
      %1469 = vmatmul.mubr.f32.gmra.mrb[0].mxu0 %v485
      %v1470 = vpop.f32.mrb[0].mxu0
      %v1471 = vadd.f32 %v1246, %v1470
      %v1472 = vpop.f32.mrb[0].mxu0
      %1473 = vmatprep.mubr.f32.mxu0 %v518
      %1474 = vmatmul.mubr.f32.gmra.mrb[0].mxu0 %v486
      %v1475 = vpop.f32.mrb[0].mxu0
      %v1476 = vadd.f32 %v1251, %v1475
      %v1477 = vpop.f32.mrb[0].mxu0
      %1478 = vmatprep.mubr.f32.mxu0 %v519
      %1479 = vmatmul.mubr.f32.gmra.mrb[0].mxu0 %v487
      %v1480 = vpop.f32.mrb[0].mxu0
      %v1481 = vadd.f32 %v1256, %v1480
      %v1482 = vpop.f32.mrb[0].mxu0
      %1483 = vmatprep.mubr.f32.mxu0 %v520
      %1484 = vmatmul.mubr.f32.gmra.mrb[0].mxu0 %v488
      %v1485 = vpop.f32.mrb[0].mxu0
      %v1486 = vadd.f32 %v1261, %v1485
      %v1487 = vpop.f32.mrb[0].mxu0
      %1488 = vmatprep.mubr.f32.mxu0 %v521
      %1489 = vmatmul.mubr.f32.gmra.mrb[0].mxu0 %v489
      %v1490 = vpop.f32.mrb[0].mxu0
      %v1491 = vadd.f32 %v1266, %v1490
      %v1492 = vpop.f32.mrb[0].mxu0
      %1493 = vmatprep.mubr.f32.mxu0 %v522
      %1494 = vmatmul.mubr.f32.gmra.mrb[0].mxu0 %v490
      %v1495 = vpop.f32.mrb[0].mxu0
      %v1496 = vadd.f32 %v1271, %v1495
      %v1497 = vpop.f32.mrb[0].mxu0
      %1498 = vmatprep.mubr.f32.mxu0 %v523
      %1499 = vmatmul.mubr.f32.gmra.mrb[0].mxu0 %v491
      %v1500 = vpop.f32.mrb[0].mxu0
      %v1501 = vadd.f32 %v1276, %v1500
      %v1502 = vpop.f32.mrb[0].mxu0
      %1503 = vmatprep.mubr.f32.mxu0 %v524
      %1504 = vmatmul.mubr.f32.gmra.mrb[0].mxu0 %v492
      %v1505 = vpop.f32.mrb[0].mxu0
      %v1506 = vadd.f32 %v1281, %v1505
      %v1507 = vpop.f32.mrb[0].mxu0
      %1508 = vmatprep.mubr.f32.mxu0 %v525
      %1509 = vmatmul.mubr.f32.gmra.mrb[0].mxu0 %v493
      %v1510 = vpop.f32.mrb[0].mxu0
      %v1511 = vadd.f32 %v1286, %v1510
      %v1512 = vpop.f32.mrb[0].mxu0
      %1513 = vmatprep.mubr.f32.mxu0 %v526
      %1514 = vmatmul.mubr.f32.gmra.mrb[0].mxu0 %v494
      %v1515 = vpop.f32.mrb[0].mxu0
      %v1516 = vadd.f32 %v1291, %v1515
      %v1517 = vpop.f32.mrb[0].mxu0
      %1518 = vmatprep.mubr.f32.mxu0 %v527
      %1519 = vmatmul.mubr.f32.gmra.mrb[0].mxu0 %v495
      %v1520 = vpop.f32.mrb[0].mxu0
      %v1521 = vadd.f32 %v1296, %v1520
      %v1522 = vpop.f32.mrb[0].mxu0
      %1523 = vmatprep.mubr.f32.mxu0 %v528
      %1524 = vmatmul.mubr.f32.gmra.mrb[0].mxu0 %v496
      %v1525 = vpop.f32.mrb[0].mxu0
      %v1526 = vadd.f32 %v1301, %v1525
      %v1527 = vpop.f32.mrb[0].mxu0
      %1528 = vmatprep.mubr.f32.mxu0 %v529
      %1529 = vmatmul.mubr.f32.gmra.mrb[0].mxu0 %v497
      %v1530 = vpop.f32.mrb[0].mxu0
      %v1531 = vadd.f32 %v1306, %v1530
      %v1532 = vpop.f32.mrb[0].mxu0
      %1533 = vmatprep.mubr.f32.mxu0 %v530
      %1534 = vmatmul.mubr.f32.gmra.mrb[0].mxu0 %v498
      %v1535 = vpop.f32.mrb[0].mxu0
      %v1536 = vadd.f32 %v1311, %v1535
      %v1537 = vpop.f32.mrb[0].mxu0
      %1538 = vmatprep.mubr.f32.mxu0 %v531
      %1539 = vmatmul.mubr.f32.gmra.mrb[0].mxu0 %v499
      %v1540 = vpop.f32.mrb[0].mxu0
      %v1541 = vadd.f32 %v1316, %v1540
      %v1542 = vpop.f32.mrb[0].mxu0
      %1543 = vmatprep.mubr.f32.mxu0 %v532
      %1544 = vmatmul.mubr.f32.gmra.mrb[0].mxu0 %v500
      %v1545 = vpop.f32.mrb[0].mxu0
      %v1546 = vadd.f32 %v1321, %v1545
      %v1547 = vpop.f32.mrb[0].mxu0
      %1548 = vmatprep.mubr.f32.mxu0 %v533
      %1549 = vmatmul.mubr.f32.gmra.mrb[0].mxu0 %v501
      %v1550 = vpop.f32.mrb[0].mxu0
      %v1551 = vadd.f32 %v1326, %v1550
      %v1552 = vpop.f32.mrb[0].mxu0
      %1553 = vmatprep.mubr.f32.mxu0 %v534
      %1554 = vmatmul.mubr.f32.gmra.mrb[0].mxu0 %v502
      %v1555 = vpop.f32.mrb[0].mxu0
      %v1556 = vadd.f32 %v1331, %v1555
      %v1557 = vpop.f32.mrb[0].mxu0
      %1558 = vmatprep.mubr.f32.mxu0 %v535
      %1559 = vmatmul.mubr.f32.gmra.mrb[0].mxu0 %v503
      %v1560 = vpop.f32.mrb[0].mxu0
      %v1561 = vadd.f32 %v1336, %v1560
      %v1562 = vpop.f32.mrb[0].mxu0
      %1563 = vmatprep.mubr.f32.mxu0 %v536
      %1564 = vmatmul.mubr.f32.gmra.mrb[0].mxu0 %v504
      %v1565 = vpop.f32.mrb[0].mxu0
      %v1566 = vadd.f32 %v1341, %v1565
      %v1567 = vpop.f32.mrb[0].mxu0
      %1568 = vmatprep.mubr.f32.mxu0 %v537
      %1569 = vmatmul.mubr.f32.gmra.mrb[0].mxu0 %v505
      %v1570 = vpop.f32.mrb[0].mxu0
      %v1571 = vadd.f32 %v1346, %v1570
      %v1572 = vpop.f32.mrb[0].mxu0
      %1573 = vmatprep.mubr.f32.mxu0 %v538
      %1574 = vmatmul.mubr.f32.gmra.mrb[0].mxu0 %v506
      %v1575 = vpop.f32.mrb[0].mxu0
      %v1576 = vadd.f32 %v1351, %v1575
      %v1577 = vpop.f32.mrb[0].mxu0
      %1578 = vmatprep.mubr.f32.mxu0 %v539
      %1579 = vmatmul.mubr.f32.gmra.mrb[0].mxu0 %v507
      %v1580 = vpop.f32.mrb[0].mxu0
      %v1581 = vadd.f32 %v1356, %v1580
      %v1582 = vpop.f32.mrb[0].mxu0
      %1583 = vmatprep.mubr.f32.mxu0 %v540
      %1584 = vmatmul.mubr.f32.gmra.mrb[0].mxu0 %v508
      %v1585 = vpop.f32.mrb[0].mxu0
      %v1586 = vadd.f32 %v1361, %v1585
      %v1587 = vpop.f32.mrb[0].mxu0
      %1588 = vmatprep.mubr.f32.mxu0 %v541
      %1589 = vmatmul.mubr.f32.gmra.mrb[0].mxu0 %v509
      %v1590 = vpop.f32.mrb[0].mxu0
      %v1591 = vadd.f32 %v1366, %v1590
      %v1592 = vpop.f32.mrb[0].mxu0
      %1593 = vmatprep.mubr.f32.mxu0 %v542
      %1594 = vmatmul.mubr.f32.gmra.mrb[0].mxu0 %v510
      %v1595 = vpop.f32.mrb[0].mxu0
      %v1596 = vadd.f32 %v1371, %v1595
      %v1597 = vpop.f32.mrb[0].mxu0
      %1598 = vmatprep.mubr.f32.mxu0 %v543
      %1599 = vmatmul.mubr.f32.gmra.mrb[0].mxu0 %v511
      %v1600 = vpop.f32.mrb[0].mxu0
      %v1601 = vadd.f32 %v1376, %v1600
      %v1602 = vpop.f32.mrb[0].mxu0
      %1603 = vmatprep.mubr.f32.mxu0 %v544
      %1604 = vmatmul.mubr.f32.gmra.mrb[0].mxu0 %v512
      %v1605 = vpop.f32.mrb[0].mxu0
      %v1606 = vadd.f32 %v1381, %v1605
      %v1607 = vpop.f32.mrb[0].mxu0
      %1608 = vmatprep.mubr.f32.mxu0 %v545
      %1609 = vmatmul.mubr.f32.gmra.mrb[0].mxu0 %v513
      %v1610 = vpop.f32.mrb[0].mxu0
      %v1611 = vadd.f32 %v1386, %v1610
      %v1612 = vpop.f32.mrb[0].mxu0
      %1613 = vmatprep.mubr.f32.mxu0 %v546
      %1614 = vmatmul.mubr.f32.gmra.mrb[0].mxu0 %v514
      %v1615 = vpop.f32.mrb[0].mxu0
      %v1616 = vadd.f32 %v1391, %v1615
      %v1617 = vpop.f32.mrb[0].mxu0
      %1618 = vmatprep.mubr.f32.mxu0 %v547
      %1619 = vmatmul.mubr.f32.gmra.mrb[0].mxu0 %v515
      %v1620 = vpop.f32.mrb[0].mxu0
      %v1621 = vadd.f32 %v1396, %v1620
      %v1622 = vpop.f32.mrb[0].mxu0
      %1623 = vdwg.mxu0
      %1624 = vmatprep.subr.mxu0 0.0
      %1625 = vmatpush1.msra.mxu0 %v708
      %1626 = vmatprep.subr.mxu0 0.0
      %1627 = vmatpush1.msra.mxu0 %v709
      %1628 = vmatprep.subr.mxu0 0.0
      %1629 = vmatpush1.msra.mxu0 %v710
      %1630 = vmatprep.subr.mxu0 0.0
      %1631 = vmatpush1.msra.mxu0 %v711
      %1632 = vmatprep.subr.mxu0 0.0
      %1633 = vmatpush1.msra.mxu0 %v712
      %1634 = vmatprep.subr.mxu0 0.0
      %1635 = vmatpush1.msra.mxu0 %v713
      %1636 = vmatprep.subr.mxu0 0.0
      %1637 = vmatpush1.msra.mxu0 %v714
      %1638 = vmatprep.subr.mxu0 0.0
      %1639 = vmatpush1.msra.mxu0 %v715
      %1640 = vmatprep.subr.mxu0 0.0
      %1641 = vmatpush1.msra.mxu0 %v716
      %1642 = vmatprep.subr.mxu0 0.0
      %1643 = vmatpush1.msra.mxu0 %v717
      %1644 = vmatprep.subr.mxu0 0.0
      %1645 = vmatpush1.msra.mxu0 %v718
      %1646 = vmatprep.subr.mxu0 0.0
      %1647 = vmatpush1.msra.mxu0 %v719
      %1648 = vmatprep.subr.mxu0 0.0
      %1649 = vmatpush1.msra.mxu0 %v720
      %1650 = vmatprep.subr.mxu0 0.0
      %1651 = vmatpush1.msra.mxu0 %v721
      %1652 = vmatprep.subr.mxu0 0.0
      %1653 = vmatpush1.msra.mxu0 %v722
      %1654 = vmatprep.subr.mxu0 0.0
      %1655 = vmatpush1.msra.mxu0 %v723
      %1656 = vmatprep.subr.mxu0 0.0
      %1657 = vmatpush1.msra.mxu0 0.0
      %1658 = vmatprep.subr.mxu0 0.0
      %1659 = vmatpush1.msra.mxu0 0.0
      %1660 = vmatprep.subr.mxu0 0.0
      %1661 = vmatpush1.msra.mxu0 0.0
      %1662 = vmatprep.subr.mxu0 0.0
      %1663 = vmatpush1.msra.mxu0 0.0
      %1664 = vmatprep.subr.mxu0 0.0
      %1665 = vmatpush1.msra.mxu0 0.0
      %1666 = vmatprep.subr.mxu0 0.0
      %1667 = vmatpush1.msra.mxu0 0.0
      %1668 = vmatprep.subr.mxu0 0.0
      %1669 = vmatpush1.msra.mxu0 0.0
      %1670 = vmatprep.subr.mxu0 0.0
      %1671 = vmatpush1.msra.mxu0 0.0
      %1672 = vmatprep.subr.mxu0 0.0
      %1673 = vmatpush1.msra.mxu0 0.0
      %1674 = vmatprep.subr.mxu0 0.0
      %1675 = vmatpush1.msra.mxu0 0.0
      %1676 = vmatprep.subr.mxu0 0.0
      %1677 = vmatpush1.msra.mxu0 0.0
      %1678 = vmatprep.subr.mxu0 0.0
      %1679 = vmatpush1.msra.mxu0 0.0
      %1680 = vmatprep.subr.mxu0 0.0
      %1681 = vmatpush1.msra.mxu0 0.0
      %1682 = vmatprep.subr.mxu0 0.0
      %1683 = vmatpush1.msra.mxu0 0.0
      %1684 = vmatprep.subr.mxu0 0.0
      %1685 = vmatpush1.msra.mxu0 0.0
      %1686 = vmatprep.subr.mxu0 0.0
      %1687 = vmatpush1.msra.mxu0 0.0
      %1688 = vmatprep.mubr.f32.mxu0 0.0
      %1689 = vmatmul.mubr.f32.gmra.mrb[0].mxu0 %v548
      %v1690 = vpop.f32.mrb[0].mxu0
      %v1691 = vadd.f32 %v1466, %v1690
      %v1692 = vpop.f32.mrb[0].mxu0
      %1693 = vmatprep.mubr.f32.mxu0 0.0
      %1694 = vmatmul.mubr.f32.gmra.mrb[0].mxu0 %v549
      %v1695 = vpop.f32.mrb[0].mxu0
      %v1696 = vadd.f32 %v1471, %v1695
      %v1697 = vpop.f32.mrb[0].mxu0
      %1698 = vmatprep.mubr.f32.mxu0 0.0
      %1699 = vmatmul.mubr.f32.gmra.mrb[0].mxu0 %v550
      %v1700 = vpop.f32.mrb[0].mxu0
      %v1701 = vadd.f32 %v1476, %v1700
      %v1702 = vpop.f32.mrb[0].mxu0
      %1703 = vmatprep.mubr.f32.mxu0 0.0
      %1704 = vmatmul.mubr.f32.gmra.mrb[0].mxu0 %v551
      %v1705 = vpop.f32.mrb[0].mxu0
      %v1706 = vadd.f32 %v1481, %v1705
      %v1707 = vpop.f32.mrb[0].mxu0
      %1708 = vmatprep.mubr.f32.mxu0 0.0
      %1709 = vmatmul.mubr.f32.gmra.mrb[0].mxu0 %v552
      %v1710 = vpop.f32.mrb[0].mxu0
      %v1711 = vadd.f32 %v1486, %v1710
      %v1712 = vpop.f32.mrb[0].mxu0
      %1713 = vmatprep.mubr.f32.mxu0 0.0
      %1714 = vmatmul.mubr.f32.gmra.mrb[0].mxu0 %v553
      %v1715 = vpop.f32.mrb[0].mxu0
      %v1716 = vadd.f32 %v1491, %v1715
      %v1717 = vpop.f32.mrb[0].mxu0
      %1718 = vmatprep.mubr.f32.mxu0 0.0
      %1719 = vmatmul.mubr.f32.gmra.mrb[0].mxu0 %v554
      %v1720 = vpop.f32.mrb[0].mxu0
      %v1721 = vadd.f32 %v1496, %v1720
      %v1722 = vpop.f32.mrb[0].mxu0
      %1723 = vmatprep.mubr.f32.mxu0 0.0
      %1724 = vmatmul.mubr.f32.gmra.mrb[0].mxu0 %v555
      %v1725 = vpop.f32.mrb[0].mxu0
      %v1726 = vadd.f32 %v1501, %v1725
      %v1727 = vpop.f32.mrb[0].mxu0
      %1728 = vmatprep.mubr.f32.mxu0 0.0
      %1729 = vmatmul.mubr.f32.gmra.mrb[0].mxu0 %v556
      %v1730 = vpop.f32.mrb[0].mxu0
      %v1731 = vadd.f32 %v1506, %v1730
      %v1732 = vpop.f32.mrb[0].mxu0
      %1733 = vmatprep.mubr.f32.mxu0 0.0
      %1734 = vmatmul.mubr.f32.gmra.mrb[0].mxu0 %v557
      %v1735 = vpop.f32.mrb[0].mxu0
      %v1736 = vadd.f32 %v1511, %v1735
      %v1737 = vpop.f32.mrb[0].mxu0
      %1738 = vmatprep.mubr.f32.mxu0 0.0
      %1739 = vmatmul.mubr.f32.gmra.mrb[0].mxu0 %v558
      %v1740 = vpop.f32.mrb[0].mxu0
      %v1741 = vadd.f32 %v1516, %v1740
      %v1742 = vpop.f32.mrb[0].mxu0
      %1743 = vmatprep.mubr.f32.mxu0 0.0
      %1744 = vmatmul.mubr.f32.gmra.mrb[0].mxu0 %v559
      %v1745 = vpop.f32.mrb[0].mxu0
      %v1746 = vadd.f32 %v1521, %v1745
      %v1747 = vpop.f32.mrb[0].mxu0
      %1748 = vmatprep.mubr.f32.mxu0 0.0
      %1749 = vmatmul.mubr.f32.gmra.mrb[0].mxu0 %v560
      %v1750 = vpop.f32.mrb[0].mxu0
      %v1751 = vadd.f32 %v1526, %v1750
      %v1752 = vpop.f32.mrb[0].mxu0
      %1753 = vmatprep.mubr.f32.mxu0 0.0
      %1754 = vmatmul.mubr.f32.gmra.mrb[0].mxu0 %v561
      %v1755 = vpop.f32.mrb[0].mxu0
      %v1756 = vadd.f32 %v1531, %v1755
      %v1757 = vpop.f32.mrb[0].mxu0
      %1758 = vmatprep.mubr.f32.mxu0 0.0
      %1759 = vmatmul.mubr.f32.gmra.mrb[0].mxu0 %v562
      %v1760 = vpop.f32.mrb[0].mxu0
      %v1761 = vadd.f32 %v1536, %v1760
      %v1762 = vpop.f32.mrb[0].mxu0
      %1763 = vmatprep.mubr.f32.mxu0 0.0
      %1764 = vmatmul.mubr.f32.gmra.mrb[0].mxu0 %v563
      %v1765 = vpop.f32.mrb[0].mxu0
      %v1766 = vadd.f32 %v1541, %v1765
      %v1767 = vpop.f32.mrb[0].mxu0
      %1768 = vmatprep.mubr.f32.mxu0 0.0
      %1769 = vmatmul.mubr.f32.gmra.mrb[0].mxu0 %v564
      %v1770 = vpop.f32.mrb[0].mxu0
      %v1771 = vadd.f32 %v1546, %v1770
      %v1772 = vpop.f32.mrb[0].mxu0
      %1773 = vmatprep.mubr.f32.mxu0 0.0
      %1774 = vmatmul.mubr.f32.gmra.mrb[0].mxu0 %v565
      %v1775 = vpop.f32.mrb[0].mxu0
      %v1776 = vadd.f32 %v1551, %v1775
      %v1777 = vpop.f32.mrb[0].mxu0
      %1778 = vmatprep.mubr.f32.mxu0 0.0
      %1779 = vmatmul.mubr.f32.gmra.mrb[0].mxu0 %v566
      %v1780 = vpop.f32.mrb[0].mxu0
      %v1781 = vadd.f32 %v1556, %v1780
      %v1782 = vpop.f32.mrb[0].mxu0
      %1783 = vmatprep.mubr.f32.mxu0 0.0
      %1784 = vmatmul.mubr.f32.gmra.mrb[0].mxu0 %v567
      %v1785 = vpop.f32.mrb[0].mxu0
      %v1786 = vadd.f32 %v1561, %v1785
      %v1787 = vpop.f32.mrb[0].mxu0
      %1788 = vmatprep.mubr.f32.mxu0 0.0
      %1789 = vmatmul.mubr.f32.gmra.mrb[0].mxu0 %v568
      %v1790 = vpop.f32.mrb[0].mxu0
      %v1791 = vadd.f32 %v1566, %v1790
      %v1792 = vpop.f32.mrb[0].mxu0
      %1793 = vmatprep.mubr.f32.mxu0 0.0
      %1794 = vmatmul.mubr.f32.gmra.mrb[0].mxu0 %v569
      %v1795 = vpop.f32.mrb[0].mxu0
      %v1796 = vadd.f32 %v1571, %v1795
      %v1797 = vpop.f32.mrb[0].mxu0
      %1798 = vmatprep.mubr.f32.mxu0 0.0
      %1799 = vmatmul.mubr.f32.gmra.mrb[0].mxu0 %v570
      %v1800 = vpop.f32.mrb[0].mxu0
      %v1801 = vadd.f32 %v1576, %v1800
      %v1802 = vpop.f32.mrb[0].mxu0
      %1803 = vmatprep.mubr.f32.mxu0 0.0
      %1804 = vmatmul.mubr.f32.gmra.mrb[0].mxu0 %v571
      %v1805 = vpop.f32.mrb[0].mxu0
      %v1806 = vadd.f32 %v1581, %v1805
      %v1807 = vpop.f32.mrb[0].mxu0
      %1808 = vmatprep.mubr.f32.mxu0 0.0
      %1809 = vmatmul.mubr.f32.gmra.mrb[0].mxu0 %v572
      %v1810 = vpop.f32.mrb[0].mxu0
      %v1811 = vadd.f32 %v1586, %v1810
      %v1812 = vpop.f32.mrb[0].mxu0
      %1813 = vmatprep.mubr.f32.mxu0 0.0
      %1814 = vmatmul.mubr.f32.gmra.mrb[0].mxu0 %v573
      %v1815 = vpop.f32.mrb[0].mxu0
      %v1816 = vadd.f32 %v1591, %v1815
      %v1817 = vpop.f32.mrb[0].mxu0
      %1818 = vmatprep.mubr.f32.mxu0 0.0
      %1819 = vmatmul.mubr.f32.gmra.mrb[0].mxu0 %v574
      %v1820 = vpop.f32.mrb[0].mxu0
      %v1821 = vadd.f32 %v1596, %v1820
      %v1822 = vpop.f32.mrb[0].mxu0
      %1823 = vmatprep.mubr.f32.mxu0 0.0
      %1824 = vmatmul.mubr.f32.gmra.mrb[0].mxu0 %v575
      %v1825 = vpop.f32.mrb[0].mxu0
      %v1826 = vadd.f32 %v1601, %v1825
      %v1827 = vpop.f32.mrb[0].mxu0
      %1828 = vmatprep.mubr.f32.mxu0 0.0
      %1829 = vmatmul.mubr.f32.gmra.mrb[0].mxu0 %v576
      %v1830 = vpop.f32.mrb[0].mxu0
      %v1831 = vadd.f32 %v1606, %v1830
      %v1832 = vpop.f32.mrb[0].mxu0
      %1833 = vmatprep.mubr.f32.mxu0 0.0
      %1834 = vmatmul.mubr.f32.gmra.mrb[0].mxu0 %v577
      %v1835 = vpop.f32.mrb[0].mxu0
      %v1836 = vadd.f32 %v1611, %v1835
      %v1837 = vpop.f32.mrb[0].mxu0
      %1838 = vmatprep.mubr.f32.mxu0 0.0
      %1839 = vmatmul.mubr.f32.gmra.mrb[0].mxu0 %v578
      %v1840 = vpop.f32.mrb[0].mxu0
      %v1841 = vadd.f32 %v1616, %v1840
      %v1842 = vpop.f32.mrb[0].mxu0
      %1843 = vmatprep.mubr.f32.mxu0 0.0
      %1844 = vmatmul.mubr.f32.gmra.mrb[0].mxu0 %v579
      %v1845 = vpop.f32.mrb[0].mxu0
      %v1846 = vadd.f32 %v1621, %v1845
      %v1847 = vpop.f32.mrb[0].mxu0
      %1848 = vdwg.mxu0
      %v1849 = vmax.f32 %v1691, 0.0
      %v1850 = vmax.f32 %v1696, 0.0
      %v1851 = vmax.f32 %v1701, 0.0
      %v1852 = vmax.f32 %v1706, 0.0
      %v1853 = vmax.f32 %v1711, 0.0
      %v1854 = vmax.f32 %v1716, 0.0
      %v1855 = vmax.f32 %v1721, 0.0
      %v1856 = vmax.f32 %v1726, 0.0
      %v1857 = vmax.f32 %v1731, 0.0
      %v1858 = vmax.f32 %v1736, 0.0
      %v1859 = vmax.f32 %v1741, 0.0
      %v1860 = vmax.f32 %v1746, 0.0
      %v1861 = vmax.f32 %v1751, 0.0
      %v1862 = vmax.f32 %v1756, 0.0
      %v1863 = vmax.f32 %v1761, 0.0
      %v1864 = vmax.f32 %v1766, 0.0
      %v1865 = vmax.f32 %v1771, 0.0
      %v1866 = vmax.f32 %v1776, 0.0
      %v1867 = vmax.f32 %v1781, 0.0
      %v1868 = vmax.f32 %v1786, 0.0
      %v1869 = vmax.f32 %v1791, 0.0
      %v1870 = vmax.f32 %v1796, 0.0
      %v1871 = vmax.f32 %v1801, 0.0
      %v1872 = vmax.f32 %v1806, 0.0
      %v1873 = vmax.f32 %v1811, 0.0
      %v1874 = vmax.f32 %v1816, 0.0
      %v1875 = vmax.f32 %v1821, 0.0
      %v1876 = vmax.f32 %v1826, 0.0
      %v1877 = vmax.f32 %v1831, 0.0
      %v1878 = vmax.f32 %v1836, 0.0
      %v1879 = vmax.f32 %v1841, 0.0
      %v1880 = vmax.f32 %v1846, 0.0
      %1881 = vst [vmem:[%s257 + $0x1] sm:$0xff] %v1849
      %1882 = vst [vmem:[%s257 + $0x9] sm:$0xff] %v1850
      %1883 = vst [vmem:[%s257 + $0x19] sm:$0xff] %v1851
      %1884 = vst [vmem:[%s257 + $0x21] sm:$0xff] %v1852
      %1885 = vst [vmem:[%s257 + $0x31] sm:$0xff] %v1853
      %1886 = vst [vmem:[%s257 + $0x39] sm:$0xff] %v1854
      %1887 = vst [vmem:[%s257 + $0x49] sm:$0xff] %v1855
      %1888 = vst [vmem:[%s257 + $0x51] sm:$0xff] %v1856
      %1889 = vst [vmem:[%s257 + $0x61] sm:$0xff] %v1857
      %1890 = vst [vmem:[%s257 + $0x69] sm:$0xff] %v1858
      %1891 = vst [vmem:[%s257 + $0x79] sm:$0xff] %v1859
      %1892 = vst [vmem:[%s257 + $0x81] sm:$0xff] %v1860
      %1893 = vst [vmem:[%s257 + $0x91] sm:$0xff] %v1861
      %1894 = vst [vmem:[%s257 + $0x99] sm:$0xff] %v1862
      %1895 = vst [vmem:[%s257 + $0xa9] sm:$0xff] %v1863
      %1896 = vst [vmem:[%s257 + $0xb1] sm:$0xff] %v1864
      %1897 = vst [vmem:[%s257 + $0xc1] sm:$0xff] %v1865
      %1898 = vst [vmem:[%s257 + $0xc9] sm:$0xff] %v1866
      %1899 = vst [vmem:[%s257 + $0xd9] sm:$0xff] %v1867
      %1900 = vst [vmem:[%s257 + $0xe1] sm:$0xff] %v1868
      %1901 = vst [vmem:[%s257 + $0xf1] sm:$0xff] %v1869
      %1902 = vst [vmem:[%s257 + $0xf9] sm:$0xff] %v1870
      %1903 = vst [vmem:[%s257 + $0x109] sm:$0xff] %v1871
      %1904 = vst [vmem:[%s257 + $0x111] sm:$0xff] %v1872
      %1905 = vst [vmem:[%s257 + $0x121] sm:$0xff] %v1873
      %1906 = vst [vmem:[%s257 + $0x129] sm:$0xff] %v1874
      %1907 = vst [vmem:[%s257 + $0x139] sm:$0xff] %v1875
      %1908 = vst [vmem:[%s257 + $0x141] sm:$0xff] %v1876
      %1909 = vst [vmem:[%s257 + $0x151] sm:$0xff] %v1877
      %1910 = vst [vmem:[%s257 + $0x159] sm:$0xff] %v1878
      %1911 = vst [vmem:[%s257 + $0x169] sm:$0xff] %v1879
      %1912 = vst [vmem:[%s257 + $0x171] sm:$0xff] %v1880
      %v1913 = vld [vmem:[#allocation2] sm:$0xff]
      %v1914 = vld [vmem:[#allocation2 + $0x8] sm:$0xff]
      %v1915 = vld [vmem:[#allocation2 + $0x18] sm:$0xff]
      %v1916 = vld [vmem:[#allocation2 + $0x20] sm:$0xff]
      %v1917 = vld [vmem:[#allocation2 + $0x30] sm:$0xff]
      %v1918 = vld [vmem:[#allocation2 + $0x38] sm:$0xff]
      %v1919 = vld [vmem:[#allocation2 + $0x48] sm:$0xff]
      %v1920 = vld [vmem:[#allocation2 + $0x50] sm:$0xff]
      %v1921 = vld [vmem:[#allocation2 + $0x60] sm:$0xff]
      %v1922 = vld [vmem:[#allocation2 + $0x68] sm:$0xff]
      %v1923 = vld [vmem:[#allocation2 + $0x78] sm:$0xff]
      %v1924 = vld [vmem:[#allocation2 + $0x80] sm:$0xff]
      %v1925 = vld [vmem:[#allocation2 + $0x90] sm:$0xff]
      %v1926 = vld [vmem:[#allocation2 + $0x98] sm:$0xff]
      %v1927 = vld [vmem:[#allocation2 + $0xa8] sm:$0xff]
      %v1928 = vld [vmem:[#allocation2 + $0xb0] sm:$0xff]
      %v1929 = vld [vmem:[#allocation2 + $0xc0] sm:$0xff]
      %v1930 = vld [vmem:[#allocation2 + $0xc8] sm:$0xff]
      %v1931 = vld [vmem:[#allocation2 + $0xd8] sm:$0xff]
      %v1932 = vld [vmem:[#allocation2 + $0xe0] sm:$0xff]
      %v1933 = vld [vmem:[#allocation2 + $0xf0] sm:$0xff]
      %v1934 = vld [vmem:[#allocation2 + $0xf8] sm:$0xff]
      %v1935 = vld [vmem:[#allocation2 + $0x108] sm:$0xff]
      %v1936 = vld [vmem:[#allocation2 + $0x110] sm:$0xff]
      %v1937 = vld [vmem:[#allocation2 + $0x120] sm:$0xff]
      %v1938 = vld [vmem:[#allocation2 + $0x128] sm:$0xff]
      %v1939 = vld [vmem:[#allocation2 + $0x138] sm:$0xff]
      %v1940 = vld [vmem:[#allocation2 + $0x140] sm:$0xff]
      %v1941 = vld [vmem:[#allocation2 + $0x150] sm:$0xff]
      %v1942 = vld [vmem:[#allocation2 + $0x158] sm:$0xff]
      %v1943 = vld [vmem:[#allocation2 + $0x168] sm:$0xff]
      %v1944 = vld [vmem:[#allocation2 + $0x170] sm:$0xff]
      %v1945 = vld [vmem:[#allocation2 + $0x1] sm:$0xff]
      %v1946 = vld [vmem:[#allocation2 + $0x9] sm:$0xff]
      %v1947 = vld [vmem:[#allocation2 + $0x19] sm:$0xff]
      %v1948 = vld [vmem:[#allocation2 + $0x21] sm:$0xff]
      %v1949 = vld [vmem:[#allocation2 + $0x31] sm:$0xff]
      %v1950 = vld [vmem:[#allocation2 + $0x39] sm:$0xff]
      %v1951 = vld [vmem:[#allocation2 + $0x49] sm:$0xff]
      %v1952 = vld [vmem:[#allocation2 + $0x51] sm:$0xff]
      %v1953 = vld [vmem:[#allocation2 + $0x61] sm:$0xff]
      %v1954 = vld [vmem:[#allocation2 + $0x69] sm:$0xff]
      %v1955 = vld [vmem:[#allocation2 + $0x79] sm:$0xff]
      %v1956 = vld [vmem:[#allocation2 + $0x81] sm:$0xff]
      %v1957 = vld [vmem:[#allocation2 + $0x91] sm:$0xff]
      %v1958 = vld [vmem:[#allocation2 + $0x99] sm:$0xff]
      %v1959 = vld [vmem:[#allocation2 + $0xa9] sm:$0xff]
      %v1960 = vld [vmem:[#allocation2 + $0xb1] sm:$0xff]
      %v1961 = vld [vmem:[#allocation2 + $0xc1] sm:$0xff]
      %v1962 = vld [vmem:[#allocation2 + $0xc9] sm:$0xff]
      %v1963 = vld [vmem:[#allocation2 + $0xd9] sm:$0xff]
      %v1964 = vld [vmem:[#allocation2 + $0xe1] sm:$0xff]
      %v1965 = vld [vmem:[#allocation2 + $0xf1] sm:$0xff]
      %v1966 = vld [vmem:[#allocation2 + $0xf9] sm:$0xff]
      %v1967 = vld [vmem:[#allocation2 + $0x109] sm:$0xff]
      %v1968 = vld [vmem:[#allocation2 + $0x111] sm:$0xff]
      %v1969 = vld [vmem:[#allocation2 + $0x121] sm:$0xff]
      %v1970 = vld [vmem:[#allocation2 + $0x129] sm:$0xff]
      %v1971 = vld [vmem:[#allocation2 + $0x139] sm:$0xff]
      %v1972 = vld [vmem:[#allocation2 + $0x141] sm:$0xff]
      %v1973 = vld [vmem:[#allocation2 + $0x151] sm:$0xff]
      %v1974 = vld [vmem:[#allocation2 + $0x159] sm:$0xff]
      %v1975 = vld [vmem:[#allocation2 + $0x169] sm:$0xff]
      %v1976 = vld [vmem:[#allocation2 + $0x171] sm:$0xff]
      %v1977 = vld [vmem:[#allocation2 + $0x2] sm:$0xff]
      %v1978 = vld [vmem:[#allocation2 + $0xa] sm:$0xff]
      %v1979 = vld [vmem:[#allocation2 + $0x1a] sm:$0xff]
      %v1980 = vld [vmem:[#allocation2 + $0x22] sm:$0xff]
      %v1981 = vld [vmem:[#allocation2 + $0x32] sm:$0xff]
      %v1982 = vld [vmem:[#allocation2 + $0x3a] sm:$0xff]
      %v1983 = vld [vmem:[#allocation2 + $0x4a] sm:$0xff]
      %v1984 = vld [vmem:[#allocation2 + $0x52] sm:$0xff]
      %v1985 = vld [vmem:[#allocation2 + $0x62] sm:$0xff]
      %v1986 = vld [vmem:[#allocation2 + $0x6a] sm:$0xff]
      %v1987 = vld [vmem:[#allocation2 + $0x7a] sm:$0xff]
      %v1988 = vld [vmem:[#allocation2 + $0x82] sm:$0xff]
      %v1989 = vld [vmem:[#allocation2 + $0x92] sm:$0xff]
      %v1990 = vld [vmem:[#allocation2 + $0x9a] sm:$0xff]
      %v1991 = vld [vmem:[#allocation2 + $0xaa] sm:$0xff]
      %v1992 = vld [vmem:[#allocation2 + $0xb2] sm:$0xff]
      %v1993 = vld [vmem:[#allocation2 + $0xc2] sm:$0xff]
      %v1994 = vld [vmem:[#allocation2 + $0xca] sm:$0xff]
      %v1995 = vld [vmem:[#allocation2 + $0xda] sm:$0xff]
      %v1996 = vld [vmem:[#allocation2 + $0xe2] sm:$0xff]
      %v1997 = vld [vmem:[#allocation2 + $0xf2] sm:$0xff]
      %v1998 = vld [vmem:[#allocation2 + $0xfa] sm:$0xff]
      %v1999 = vld [vmem:[#allocation2 + $0x10a] sm:$0xff]
      %v2000 = vld [vmem:[#allocation2 + $0x112] sm:$0xff]
      %v2001 = vld [vmem:[#allocation2 + $0x122] sm:$0xff]
      %v2002 = vld [vmem:[#allocation2 + $0x12a] sm:$0xff]
      %v2003 = vld [vmem:[#allocation2 + $0x13a] sm:$0xff]
      %v2004 = vld [vmem:[#allocation2 + $0x142] sm:$0xff]
      %v2005 = vld [vmem:[#allocation2 + $0x152] sm:$0xff]
      %v2006 = vld [vmem:[#allocation2 + $0x15a] sm:$0xff]
      %v2007 = vld [vmem:[#allocation2 + $0x16a] sm:$0xff]
      %v2008 = vld [vmem:[#allocation2 + $0x172] sm:$0xff]
      %v2009 = vld [vmem:[%s257] sm:$0xff]
      %v2010 = vld [vmem:[%s257 + $0x8] sm:$0xff]
      %v2011 = vld [vmem:[%s257 + $0x18] sm:$0xff]
      %v2012 = vld [vmem:[%s257 + $0x20] sm:$0xff]
      %v2013 = vld [vmem:[%s257 + $0x30] sm:$0xff]
      %v2014 = vld [vmem:[%s257 + $0x38] sm:$0xff]
      %v2015 = vld [vmem:[%s257 + $0x48] sm:$0xff]
      %v2016 = vld [vmem:[%s257 + $0x50] sm:$0xff]
      %v2017 = vld [vmem:[%s257 + $0x60] sm:$0xff]
      %v2018 = vld [vmem:[%s257 + $0x68] sm:$0xff]
      %v2019 = vld [vmem:[%s257 + $0x78] sm:$0xff]
      %v2020 = vld [vmem:[%s257 + $0x80] sm:$0xff]
      %v2021 = vld [vmem:[%s257 + $0x90] sm:$0xff]
      %v2022 = vld [vmem:[%s257 + $0x98] sm:$0xff]
      %v2023 = vld [vmem:[%s257 + $0xa8] sm:$0xff]
      %v2024 = vld [vmem:[%s257 + $0xb0] sm:$0xff]
      %v2025 = vld [vmem:[%s257 + $0xc0] sm:$0xff]
      %v2026 = vld [vmem:[%s257 + $0xc8] sm:$0xff]
      %v2027 = vld [vmem:[%s257 + $0xd8] sm:$0xff]
      %v2028 = vld [vmem:[%s257 + $0xe0] sm:$0xff]
      %v2029 = vld [vmem:[%s257 + $0xf0] sm:$0xff]
      %v2030 = vld [vmem:[%s257 + $0xf8] sm:$0xff]
      %v2031 = vld [vmem:[%s257 + $0x108] sm:$0xff]
      %v2032 = vld [vmem:[%s257 + $0x110] sm:$0xff]
      %v2033 = vld [vmem:[%s257 + $0x120] sm:$0xff]
      %v2034 = vld [vmem:[%s257 + $0x128] sm:$0xff]
      %v2035 = vld [vmem:[%s257 + $0x138] sm:$0xff]
      %v2036 = vld [vmem:[%s257 + $0x140] sm:$0xff]
      %v2037 = vld [vmem:[%s257 + $0x150] sm:$0xff]
      %v2038 = vld [vmem:[%s257 + $0x158] sm:$0xff]
      %v2039 = vld [vmem:[%s257 + $0x168] sm:$0xff]
      %v2040 = vld [vmem:[%s257 + $0x170] sm:$0xff]
      %v2041 = vld [vmem:[%s257 + $0x1] sm:$0xff]
      %v2042 = vld [vmem:[%s257 + $0x9] sm:$0xff]
      %v2043 = vld [vmem:[%s257 + $0x19] sm:$0xff]
      %v2044 = vld [vmem:[%s257 + $0x21] sm:$0xff]
      %v2045 = vld [vmem:[%s257 + $0x31] sm:$0xff]
      %v2046 = vld [vmem:[%s257 + $0x39] sm:$0xff]
      %v2047 = vld [vmem:[%s257 + $0x49] sm:$0xff]
      %v2048 = vld [vmem:[%s257 + $0x51] sm:$0xff]
      %v2049 = vld [vmem:[%s257 + $0x61] sm:$0xff]
      %v2050 = vld [vmem:[%s257 + $0x69] sm:$0xff]
      %v2051 = vld [vmem:[%s257 + $0x79] sm:$0xff]
      %v2052 = vld [vmem:[%s257 + $0x81] sm:$0xff]
      %v2053 = vld [vmem:[%s257 + $0x91] sm:$0xff]
      %v2054 = vld [vmem:[%s257 + $0x99] sm:$0xff]
      %v2055 = vld [vmem:[%s257 + $0xa9] sm:$0xff]
      %v2056 = vld [vmem:[%s257 + $0xb1] sm:$0xff]
      %v2057 = vld [vmem:[%s257 + $0xc1] sm:$0xff]
      %v2058 = vld [vmem:[%s257 + $0xc9] sm:$0xff]
      %v2059 = vld [vmem:[%s257 + $0xd9] sm:$0xff]
      %v2060 = vld [vmem:[%s257 + $0xe1] sm:$0xff]
      %v2061 = vld [vmem:[%s257 + $0xf1] sm:$0xff]
      %v2062 = vld [vmem:[%s257 + $0xf9] sm:$0xff]
      %v2063 = vld [vmem:[%s257 + $0x109] sm:$0xff]
      %v2064 = vld [vmem:[%s257 + $0x111] sm:$0xff]
      %v2065 = vld [vmem:[%s257 + $0x121] sm:$0xff]
      %v2066 = vld [vmem:[%s257 + $0x129] sm:$0xff]
      %v2067 = vld [vmem:[%s257 + $0x139] sm:$0xff]
      %v2068 = vld [vmem:[%s257 + $0x141] sm:$0xff]
      %v2069 = vld [vmem:[%s257 + $0x151] sm:$0xff]
      %v2070 = vld [vmem:[%s257 + $0x159] sm:$0xff]
      %v2071 = vld [vmem:[%s257 + $0x169] sm:$0xff]
      %v2072 = vld [vmem:[%s257 + $0x171] sm:$0xff]
      %v2073 = vld [vmem:[%s257 + $0x2] sm:$0xff]
      %v2074 = vld [vmem:[%s257 + $0xa] sm:$0xff]
      %v2075 = vld [vmem:[%s257 + $0x1a] sm:$0xff]
      %v2076 = vld [vmem:[%s257 + $0x22] sm:$0xff]
      %v2077 = vld [vmem:[%s257 + $0x32] sm:$0xff]
      %v2078 = vld [vmem:[%s257 + $0x3a] sm:$0xff]
      %v2079 = vld [vmem:[%s257 + $0x4a] sm:$0xff]
      %v2080 = vld [vmem:[%s257 + $0x52] sm:$0xff]
      %v2081 = vld [vmem:[%s257 + $0x62] sm:$0xff]
      %v2082 = vld [vmem:[%s257 + $0x6a] sm:$0xff]
      %v2083 = vld [vmem:[%s257 + $0x7a] sm:$0xff]
      %v2084 = vld [vmem:[%s257 + $0x82] sm:$0xff]
      %v2085 = vld [vmem:[%s257 + $0x92] sm:$0xff]
      %v2086 = vld [vmem:[%s257 + $0x9a] sm:$0xff]
      %v2087 = vld [vmem:[%s257 + $0xaa] sm:$0xff]
      %v2088 = vld [vmem:[%s257 + $0xb2] sm:$0xff]
      %v2089 = vld [vmem:[%s257 + $0xc2] sm:$0xff]
      %v2090 = vld [vmem:[%s257 + $0xca] sm:$0xff]
      %v2091 = vld [vmem:[%s257 + $0xda] sm:$0xff]
      %v2092 = vld [vmem:[%s257 + $0xe2] sm:$0xff]
      %v2093 = vld [vmem:[%s257 + $0xf2] sm:$0xff]
      %v2094 = vld [vmem:[%s257 + $0xfa] sm:$0xff]
      %v2095 = vld [vmem:[%s257 + $0x10a] sm:$0xff]
      %v2096 = vld [vmem:[%s257 + $0x112] sm:$0xff]
      %v2097 = vld [vmem:[%s257 + $0x122] sm:$0xff]
      %v2098 = vld [vmem:[%s257 + $0x12a] sm:$0xff]
      %v2099 = vld [vmem:[%s257 + $0x13a] sm:$0xff]
      %v2100 = vld [vmem:[%s257 + $0x142] sm:$0xff]
      %v2101 = vld [vmem:[%s257 + $0x152] sm:$0xff]
      %v2102 = vld [vmem:[%s257 + $0x15a] sm:$0xff]
      %v2103 = vld [vmem:[%s257 + $0x16a] sm:$0xff]
      %v2104 = vld [vmem:[%s257 + $0x172] sm:$0xff]
      %v2105 = vld [vmem:[%s483] sm:$0xff]
      %v2106 = vld [vmem:[%s483 + $0x8] sm:$0xff]
      %v2107 = vld [vmem:[%s483 + $0x18] sm:$0xff]
      %v2108 = vld [vmem:[%s483 + $0x20] sm:$0xff]
      %v2109 = vld [vmem:[%s483 + $0x30] sm:$0xff]
      %v2110 = vld [vmem:[%s483 + $0x38] sm:$0xff]
      %v2111 = vld [vmem:[%s483 + $0x48] sm:$0xff]
      %v2112 = vld [vmem:[%s483 + $0x50] sm:$0xff]
      %v2113 = vld [vmem:[%s483 + $0x60] sm:$0xff]
      %v2114 = vld [vmem:[%s483 + $0x68] sm:$0xff]
      %v2115 = vld [vmem:[%s483 + $0x78] sm:$0xff]
      %v2116 = vld [vmem:[%s483 + $0x80] sm:$0xff]
      %v2117 = vld [vmem:[%s483 + $0x90] sm:$0xff]
      %v2118 = vld [vmem:[%s483 + $0x98] sm:$0xff]
      %v2119 = vld [vmem:[%s483 + $0xa8] sm:$0xff]
      %v2120 = vld [vmem:[%s483 + $0xb0] sm:$0xff]
      %v2121 = vld [vmem:[%s483 + $0xc0] sm:$0xff]
      %v2122 = vld [vmem:[%s483 + $0xc8] sm:$0xff]
      %v2123 = vld [vmem:[%s483 + $0xd8] sm:$0xff]
      %v2124 = vld [vmem:[%s483 + $0xe0] sm:$0xff]
      %v2125 = vld [vmem:[%s483 + $0xf0] sm:$0xff]
      %v2126 = vld [vmem:[%s483 + $0xf8] sm:$0xff]
      %v2127 = vld [vmem:[%s483 + $0x108] sm:$0xff]
      %v2128 = vld [vmem:[%s483 + $0x110] sm:$0xff]
      %v2129 = vld [vmem:[%s483 + $0x120] sm:$0xff]
      %v2130 = vld [vmem:[%s483 + $0x128] sm:$0xff]
      %v2131 = vld [vmem:[%s483 + $0x138] sm:$0xff]
      %v2132 = vld [vmem:[%s483 + $0x140] sm:$0xff]
      %v2133 = vld [vmem:[%s483 + $0x150] sm:$0xff]
      %v2134 = vld [vmem:[%s483 + $0x158] sm:$0xff]
      %v2135 = vld [vmem:[%s483 + $0x168] sm:$0xff]
      %v2136 = vld [vmem:[%s483 + $0x170] sm:$0xff]
      %v2137 = vld [vmem:[%s483 + $0x1] sm:$0xff]
      %v2138 = vld [vmem:[%s483 + $0x9] sm:$0xff]
      %v2139 = vld [vmem:[%s483 + $0x19] sm:$0xff]
      %v2140 = vld [vmem:[%s483 + $0x21] sm:$0xff]
      %v2141 = vld [vmem:[%s483 + $0x31] sm:$0xff]
      %v2142 = vld [vmem:[%s483 + $0x39] sm:$0xff]
      %v2143 = vld [vmem:[%s483 + $0x49] sm:$0xff]
      %v2144 = vld [vmem:[%s483 + $0x51] sm:$0xff]
      %v2145 = vld [vmem:[%s483 + $0x61] sm:$0xff]
      %v2146 = vld [vmem:[%s483 + $0x69] sm:$0xff]
      %v2147 = vld [vmem:[%s483 + $0x79] sm:$0xff]
      %v2148 = vld [vmem:[%s483 + $0x81] sm:$0xff]
      %v2149 = vld [vmem:[%s483 + $0x91] sm:$0xff]
      %v2150 = vld [vmem:[%s483 + $0x99] sm:$0xff]
      %v2151 = vld [vmem:[%s483 + $0xa9] sm:$0xff]
      %v2152 = vld [vmem:[%s483 + $0xb1] sm:$0xff]
      %v2153 = vld [vmem:[%s483 + $0xc1] sm:$0xff]
      %v2154 = vld [vmem:[%s483 + $0xc9] sm:$0xff]
      %v2155 = vld [vmem:[%s483 + $0xd9] sm:$0xff]
      %v2156 = vld [vmem:[%s483 + $0xe1] sm:$0xff]
      %v2157 = vld [vmem:[%s483 + $0xf1] sm:$0xff]
      %v2158 = vld [vmem:[%s483 + $0xf9] sm:$0xff]
      %v2159 = vld [vmem:[%s483 + $0x109] sm:$0xff]
      %v2160 = vld [vmem:[%s483 + $0x111] sm:$0xff]
      %v2161 = vld [vmem:[%s483 + $0x121] sm:$0xff]
      %v2162 = vld [vmem:[%s483 + $0x129] sm:$0xff]
      %v2163 = vld [vmem:[%s483 + $0x139] sm:$0xff]
      %v2164 = vld [vmem:[%s483 + $0x141] sm:$0xff]
      %v2165 = vld [vmem:[%s483 + $0x151] sm:$0xff]
      %v2166 = vld [vmem:[%s483 + $0x159] sm:$0xff]
      %v2167 = vld [vmem:[%s483 + $0x169] sm:$0xff]
      %v2168 = vld [vmem:[%s483 + $0x171] sm:$0xff]
      %v2169 = vld [vmem:[%s483 + $0x2] sm:$0xff]
      %v2170 = vld [vmem:[%s483 + $0xa] sm:$0xff]
      %v2171 = vld [vmem:[%s483 + $0x1a] sm:$0xff]
      %v2172 = vld [vmem:[%s483 + $0x22] sm:$0xff]
      %v2173 = vld [vmem:[%s483 + $0x32] sm:$0xff]
      %v2174 = vld [vmem:[%s483 + $0x3a] sm:$0xff]
      %v2175 = vld [vmem:[%s483 + $0x4a] sm:$0xff]
      %v2176 = vld [vmem:[%s483 + $0x52] sm:$0xff]
      %v2177 = vld [vmem:[%s483 + $0x62] sm:$0xff]
      %v2178 = vld [vmem:[%s483 + $0x6a] sm:$0xff]
      %v2179 = vld [vmem:[%s483 + $0x7a] sm:$0xff]
      %v2180 = vld [vmem:[%s483 + $0x82] sm:$0xff]
      %v2181 = vld [vmem:[%s483 + $0x92] sm:$0xff]
      %v2182 = vld [vmem:[%s483 + $0x9a] sm:$0xff]
      %v2183 = vld [vmem:[%s483 + $0xaa] sm:$0xff]
      %v2184 = vld [vmem:[%s483 + $0xb2] sm:$0xff]
      %v2185 = vld [vmem:[%s483 + $0xc2] sm:$0xff]
      %v2186 = vld [vmem:[%s483 + $0xca] sm:$0xff]
      %v2187 = vld [vmem:[%s483 + $0xda] sm:$0xff]
      %v2188 = vld [vmem:[%s483 + $0xe2] sm:$0xff]
      %v2189 = vld [vmem:[%s483 + $0xf2] sm:$0xff]
      %v2190 = vld [vmem:[%s483 + $0xfa] sm:$0xff]
      %v2191 = vld [vmem:[%s483 + $0x10a] sm:$0xff]
      %v2192 = vld [vmem:[%s483 + $0x112] sm:$0xff]
      %v2193 = vld [vmem:[%s483 + $0x122] sm:$0xff]
      %v2194 = vld [vmem:[%s483 + $0x12a] sm:$0xff]
      %v2195 = vld [vmem:[%s483 + $0x13a] sm:$0xff]
      %v2196 = vld [vmem:[%s483 + $0x142] sm:$0xff]
      %v2197 = vld [vmem:[%s483 + $0x152] sm:$0xff]
      %v2198 = vld [vmem:[%s483 + $0x15a] sm:$0xff]
      %v2199 = vld [vmem:[%s483 + $0x16a] sm:$0xff]
      %v2200 = vld [vmem:[%s483 + $0x172] sm:$0xff]
      %v2201 = vld [vmem:[%s2] sm:$0xff]
      %v2202 = vld [vmem:[%s2 + $0x8] sm:$0xff]
      %v2203 = vld [vmem:[%s2 + $0x10] sm:$0xff]
      %v2204 = vld [vmem:[%s2 + $0x18] sm:$0xff]
      %v2205 = vld [vmem:[%s2 + $0x20] sm:$0xff]
      %v2206 = vld [vmem:[%s2 + $0x28] sm:$0xff]
      %v2207 = vld [vmem:[%s2 + $0x30] sm:$0xff]
      %v2208 = vld [vmem:[%s2 + $0x38] sm:$0xff]
      %v2209 = vld [vmem:[%s2 + $0x40] sm:$0xff]
      %v2210 = vld [vmem:[%s2 + $0x48] sm:$0xff]
      %v2211 = vld [vmem:[%s2 + $0x50] sm:$0xff]
      %v2212 = vld [vmem:[%s2 + $0x58] sm:$0xff]
      %v2213 = vld [vmem:[%s2 + $0x60] sm:$0xff]
      %v2214 = vld [vmem:[%s2 + $0x68] sm:$0xff]
      %v2215 = vld [vmem:[%s2 + $0x70] sm:$0xff]
      %v2216 = vld [vmem:[%s2 + $0x78] sm:$0xff]
      %v2217 = vld [vmem:[%s2 + $0x80] sm:$0xff]
      %v2218 = vld [vmem:[%s2 + $0x88] sm:$0xff]
      %v2219 = vld [vmem:[%s2 + $0x90] sm:$0xff]
      %v2220 = vld [vmem:[%s2 + $0x98] sm:$0xff]
      %v2221 = vld [vmem:[%s2 + $0xa0] sm:$0xff]
      %v2222 = vld [vmem:[%s2 + $0xa8] sm:$0xff]
      %v2223 = vld [vmem:[%s2 + $0xb0] sm:$0xff]
      %v2224 = vld [vmem:[%s2 + $0xb8] sm:$0xff]
      %v2225 = vld [vmem:[%s2 + $0xc0] sm:$0xff]
      %v2226 = vld [vmem:[%s2 + $0xc8] sm:$0xff]
      %v2227 = vld [vmem:[%s2 + $0xd0] sm:$0xff]
      %v2228 = vld [vmem:[%s2 + $0xd8] sm:$0xff]
      %v2229 = vld [vmem:[%s2 + $0xe0] sm:$0xff]
      %v2230 = vld [vmem:[%s2 + $0xe8] sm:$0xff]
      %v2231 = vld [vmem:[%s2 + $0xf0] sm:$0xff]
      %v2232 = vld [vmem:[%s2 + $0xf8] sm:$0xff]
      %v2233 = vld [vmem:[%s2 + $0x100] sm:$0xff]
      %v2234 = vld [vmem:[%s2 + $0x108] sm:$0xff]
      %v2235 = vld [vmem:[%s2 + $0x110] sm:$0xff]
      %v2236 = vld [vmem:[%s2 + $0x118] sm:$0xff]
      %v2237 = vld [vmem:[%s2 + $0x120] sm:$0xff]
      %v2238 = vld [vmem:[%s2 + $0x128] sm:$0xff]
      %v2239 = vld [vmem:[%s2 + $0x130] sm:$0xff]
      %v2240 = vld [vmem:[%s2 + $0x138] sm:$0xff]
      %v2241 = vld [vmem:[%s2 + $0x140] sm:$0xff]
      %v2242 = vld [vmem:[%s2 + $0x148] sm:$0xff]
      %v2243 = vld [vmem:[%s2 + $0x150] sm:$0xff]
      %v2244 = vld [vmem:[%s2 + $0x158] sm:$0xff]
      %v2245 = vld [vmem:[%s2 + $0x160] sm:$0xff]
      %v2246 = vld [vmem:[%s2 + $0x168] sm:$0xff]
      %v2247 = vld [vmem:[%s2 + $0x170] sm:$0xff]
      %v2248 = vld [vmem:[%s2 + $0x178] sm:$0xff]
      %v2249 = vld [vmem:[%s2 + $0x180] sm:$0xff]
      %v2250 = vld [vmem:[%s2 + $0x188] sm:$0xff]
      %v2251 = vld [vmem:[%s2 + $0x190] sm:$0xff]
      %v2252 = vld [vmem:[%s2 + $0x198] sm:$0xff]
      %v2253 = vld [vmem:[%s2 + $0x1a0] sm:$0xff]
      %v2254 = vld [vmem:[%s2 + $0x1a8] sm:$0xff]
      %v2255 = vld [vmem:[%s2 + $0x1b0] sm:$0xff]
      %v2256 = vld [vmem:[%s2 + $0x1b8] sm:$0xff]
      %v2257 = vld [vmem:[%s2 + $0x1c0] sm:$0xff]
      %v2258 = vld [vmem:[%s2 + $0x1c8] sm:$0xff]
      %v2259 = vld [vmem:[%s2 + $0x1d0] sm:$0xff]
      %v2260 = vld [vmem:[%s2 + $0x1d8] sm:$0xff]
      %v2261 = vld [vmem:[%s2 + $0x1e0] sm:$0xff]
      %v2262 = vld [vmem:[%s2 + $0x1e8] sm:$0xff]
      %v2263 = vld [vmem:[%s2 + $0x1f0] sm:$0xff]
      %v2264 = vld [vmem:[%s2 + $0x1f8] sm:$0xff]
      %v2265 = vld [vmem:[%s2 + $0x200] sm:$0xff]
      %v2266 = vld [vmem:[%s2 + $0x208] sm:$0xff]
      %v2267 = vld [vmem:[%s2 + $0x210] sm:$0xff]
      %v2268 = vld [vmem:[%s2 + $0x218] sm:$0xff]
      %v2269 = vld [vmem:[%s2 + $0x220] sm:$0xff]
      %v2270 = vld [vmem:[%s2 + $0x228] sm:$0xff]
      %v2271 = vld [vmem:[%s2 + $0x230] sm:$0xff]
      %v2272 = vld [vmem:[%s2 + $0x238] sm:$0xff]
      %v2273 = vld [vmem:[%s2 + $0x240] sm:$0xff]
      %v2274 = vld [vmem:[%s2 + $0x248] sm:$0xff]
      %v2275 = vld [vmem:[%s2 + $0x250] sm:$0xff]
      %v2276 = vld [vmem:[%s2 + $0x258] sm:$0xff]
      %v2277 = vld [vmem:[%s2 + $0x260] sm:$0xff]
      %v2278 = vld [vmem:[%s2 + $0x268] sm:$0xff]
      %v2279 = vld [vmem:[%s2 + $0x270] sm:$0xff]
      %v2280 = vld [vmem:[%s2 + $0x278] sm:$0xff]
      %v2281 = vld [vmem:[%s2 + $0x280] sm:$0xff]
      %v2282 = vld [vmem:[%s2 + $0x288] sm:$0xff]
      %v2283 = vld [vmem:[%s2 + $0x290] sm:$0xff]
      %v2284 = vld [vmem:[%s2 + $0x298] sm:$0xff]
      %v2285 = vld [vmem:[%s2 + $0x2a0] sm:$0xff]
      %v2286 = vld [vmem:[%s2 + $0x2a8] sm:$0xff]
      %v2287 = vld [vmem:[%s2 + $0x2b0] sm:$0xff]
      %v2288 = vld [vmem:[%s2 + $0x2b8] sm:$0xff]
      %v2289 = vld [vmem:[%s2 + $0x2c0] sm:$0xff]
      %v2290 = vld [vmem:[%s2 + $0x2c8] sm:$0xff]
      %v2291 = vld [vmem:[%s2 + $0x2d0] sm:$0xff]
      %v2292 = vld [vmem:[%s2 + $0x2d8] sm:$0xff]
      %v2293 = vld [vmem:[%s2 + $0x2e0] sm:$0xff]
      %v2294 = vld [vmem:[%s2 + $0x2e8] sm:$0xff]
      %v2295 = vld [vmem:[%s2 + $0x2f0] sm:$0xff]
      %v2296 = vld [vmem:[%s2 + $0x2f8] sm:$0xff]
      %v2297 = vld [vmem:[%s2 + $0x300] sm:$0xff]
      %v2298 = vld [vmem:[%s2 + $0x308] sm:$0xff]
      %v2299 = vld [vmem:[%s2 + $0x310] sm:$0xff]
      %v2300 = vld [vmem:[%s2 + $0x318] sm:$0xff]
      %v2301 = vld [vmem:[%s2 + $0x320] sm:$0xff]
      %v2302 = vld [vmem:[%s2 + $0x328] sm:$0xff]
      %v2303 = vld [vmem:[%s2 + $0x330] sm:$0xff]
      %v2304 = vld [vmem:[%s2 + $0x338] sm:$0xff]
      %v2305 = vld [vmem:[%s2 + $0x340] sm:$0xff]
      %v2306 = vld [vmem:[%s2 + $0x348] sm:$0xff]
      %v2307 = vld [vmem:[%s2 + $0x350] sm:$0xff]
      %v2308 = vld [vmem:[%s2 + $0x358] sm:$0xff]
      %v2309 = vld [vmem:[%s2 + $0x360] sm:$0xff]
      %v2310 = vld [vmem:[%s2 + $0x368] sm:$0xff]
      %v2311 = vld [vmem:[%s2 + $0x370] sm:$0xff]
      %v2312 = vld [vmem:[%s2 + $0x378] sm:$0xff]
      %v2313 = vld [vmem:[%s2 + $0x380] sm:$0xff]
      %v2314 = vld [vmem:[%s2 + $0x388] sm:$0xff]
      %v2315 = vld [vmem:[%s2 + $0x390] sm:$0xff]
      %v2316 = vld [vmem:[%s2 + $0x398] sm:$0xff]
      %v2317 = vld [vmem:[%s2 + $0x3a0] sm:$0xff]
      %v2318 = vld [vmem:[%s2 + $0x3a8] sm:$0xff]
      %v2319 = vld [vmem:[%s2 + $0x3b0] sm:$0xff]
      %v2320 = vld [vmem:[%s2 + $0x3b8] sm:$0xff]
      %v2321 = vld [vmem:[%s2 + $0x3c0] sm:$0xff]
      %v2322 = vld [vmem:[%s2 + $0x3c8] sm:$0xff]
      %v2323 = vld [vmem:[%s2 + $0x3d0] sm:$0xff]
      %v2324 = vld [vmem:[%s2 + $0x3d8] sm:$0xff]
      %v2325 = vld [vmem:[%s2 + $0x3e0] sm:$0xff]
      %v2326 = vld [vmem:[%s2 + $0x3e8] sm:$0xff]
      %v2327 = vld [vmem:[%s2 + $0x3f0] sm:$0xff]
      %v2328 = vld [vmem:[%s2 + $0x3f8] sm:$0xff]
      %v2329 = vld [vmem:[%s2 + $0x400] sm:$0xff]
      %v2330 = vld [vmem:[%s2 + $0x408] sm:$0xff]
      %v2331 = vld [vmem:[%s2 + $0x410] sm:$0xff]
      %v2332 = vld [vmem:[%s2 + $0x418] sm:$0xff]
      %v2333 = vld [vmem:[%s2 + $0x420] sm:$0xff]
      %v2334 = vld [vmem:[%s2 + $0x428] sm:$0xff]
      %v2335 = vld [vmem:[%s2 + $0x430] sm:$0xff]
      %v2336 = vld [vmem:[%s2 + $0x438] sm:$0xff]
      %v2337 = vld [vmem:[%s2 + $0x440] sm:$0xff]
      %v2338 = vld [vmem:[%s2 + $0x448] sm:$0xff]
      %v2339 = vld [vmem:[%s2 + $0x450] sm:$0xff]
      %v2340 = vld [vmem:[%s2 + $0x458] sm:$0xff]
      %v2341 = vld [vmem:[%s2 + $0x460] sm:$0xff]
      %v2342 = vld [vmem:[%s2 + $0x468] sm:$0xff]
      %v2343 = vld [vmem:[%s2 + $0x470] sm:$0xff]
      %v2344 = vld [vmem:[%s2 + $0x478] sm:$0xff]
      %2345 = vmatprep.subr.mxu0 0.0
      %2346 = vmatpush1.msra.mxu0 %v2201
      %2347 = vmatprep.subr.mxu0 0.0
      %2348 = vmatpush1.msra.mxu0 %v2202
      %2349 = vmatprep.subr.mxu0 0.0
      %2350 = vmatpush1.msra.mxu0 %v2203
      %2351 = vmatprep.subr.mxu0 0.0
      %2352 = vmatpush1.msra.mxu0 %v2204
      %2353 = vmatprep.subr.mxu0 0.0
      %2354 = vmatpush1.msra.mxu0 %v2205
      %2355 = vmatprep.subr.mxu0 0.0
      %2356 = vmatpush1.msra.mxu0 %v2206
      %2357 = vmatprep.subr.mxu0 0.0
      %2358 = vmatpush1.msra.mxu0 %v2207
      %2359 = vmatprep.subr.mxu0 0.0
      %2360 = vmatpush1.msra.mxu0 %v2208
      %2361 = vmatprep.subr.mxu0 0.0
      %2362 = vmatpush1.msra.mxu0 %v2209
      %2363 = vmatprep.subr.mxu0 0.0
      %2364 = vmatpush1.msra.mxu0 %v2210
      %2365 = vmatprep.subr.mxu0 0.0
      %2366 = vmatpush1.msra.mxu0 %v2211
      %2367 = vmatprep.subr.mxu0 0.0
      %2368 = vmatpush1.msra.mxu0 %v2212
      %2369 = vmatprep.subr.mxu0 0.0
      %2370 = vmatpush1.msra.mxu0 %v2213
      %2371 = vmatprep.subr.mxu0 0.0
      %2372 = vmatpush1.msra.mxu0 %v2214
      %2373 = vmatprep.subr.mxu0 0.0
      %2374 = vmatpush1.msra.mxu0 %v2215
      %2375 = vmatprep.subr.mxu0 0.0
      %2376 = vmatpush1.msra.mxu0 %v2216
      %2377 = vmatprep.subr.mxu0 0.0
      %2378 = vmatpush1.msra.mxu0 %v2217
      %2379 = vmatprep.subr.mxu0 0.0
      %2380 = vmatpush1.msra.mxu0 %v2218
      %2381 = vmatprep.subr.mxu0 0.0
      %2382 = vmatpush1.msra.mxu0 %v2219
      %2383 = vmatprep.subr.mxu0 0.0
      %2384 = vmatpush1.msra.mxu0 %v2220
      %2385 = vmatprep.subr.mxu0 0.0
      %2386 = vmatpush1.msra.mxu0 %v2221
      %2387 = vmatprep.subr.mxu0 0.0
      %2388 = vmatpush1.msra.mxu0 %v2222
      %2389 = vmatprep.subr.mxu0 0.0
      %2390 = vmatpush1.msra.mxu0 %v2223
      %2391 = vmatprep.subr.mxu0 0.0
      %2392 = vmatpush1.msra.mxu0 %v2224
      %2393 = vmatprep.subr.mxu0 0.0
      %2394 = vmatpush1.msra.mxu0 %v2225
      %2395 = vmatprep.subr.mxu0 0.0
      %2396 = vmatpush1.msra.mxu0 %v2226
      %2397 = vmatprep.subr.mxu0 0.0
      %2398 = vmatpush1.msra.mxu0 %v2227
      %2399 = vmatprep.subr.mxu0 0.0
      %2400 = vmatpush1.msra.mxu0 %v2228
      %2401 = vmatprep.subr.mxu0 0.0
      %2402 = vmatpush1.msra.mxu0 %v2229
      %2403 = vmatprep.subr.mxu0 0.0
      %2404 = vmatpush1.msra.mxu0 %v2230
      %2405 = vmatprep.subr.mxu0 0.0
      %2406 = vmatpush1.msra.mxu0 %v2231
      %2407 = vmatprep.subr.mxu0 0.0
      %2408 = vmatpush1.msra.mxu0 %v2232
      %2409 = vmatprep.mubr.f32.mxu0 %v1945
      %2410 = vmatmul.mubr.f32.gmra.mrb[0].mxu0 %v1913
      %v2411 = vpop.f32.mrb[0].mxu0
      %v2412 = vadd.f32 0.0, %v2411
      %v2413 = vpop.f32.mrb[0].mxu0
      %2414 = vmatprep.mubr.f32.mxu0 %v1946
      %2415 = vmatmul.mubr.f32.gmra.mrb[0].mxu0 %v1914
      %v2416 = vpop.f32.mrb[0].mxu0
      %v2417 = vadd.f32 0.0, %v2416
      %v2418 = vpop.f32.mrb[0].mxu0
      %2419 = vmatprep.mubr.f32.mxu0 %v1947
      %2420 = vmatmul.mubr.f32.gmra.mrb[0].mxu0 %v1915
      %v2421 = vpop.f32.mrb[0].mxu0
      %v2422 = vadd.f32 0.0, %v2421
      %v2423 = vpop.f32.mrb[0].mxu0
      %2424 = vmatprep.mubr.f32.mxu0 %v1948
      %2425 = vmatmul.mubr.f32.gmra.mrb[0].mxu0 %v1916
      %v2426 = vpop.f32.mrb[0].mxu0
      %v2427 = vadd.f32 0.0, %v2426
      %v2428 = vpop.f32.mrb[0].mxu0
      %2429 = vmatprep.mubr.f32.mxu0 %v1949
      %2430 = vmatmul.mubr.f32.gmra.mrb[0].mxu0 %v1917
      %v2431 = vpop.f32.mrb[0].mxu0
      %v2432 = vadd.f32 0.0, %v2431
      %v2433 = vpop.f32.mrb[0].mxu0
      %2434 = vmatprep.mubr.f32.mxu0 %v1950
      %2435 = vmatmul.mubr.f32.gmra.mrb[0].mxu0 %v1918
      %v2436 = vpop.f32.mrb[0].mxu0
      %v2437 = vadd.f32 0.0, %v2436
      %v2438 = vpop.f32.mrb[0].mxu0
      %2439 = vmatprep.mubr.f32.mxu0 %v1951
      %2440 = vmatmul.mubr.f32.gmra.mrb[0].mxu0 %v1919
      %v2441 = vpop.f32.mrb[0].mxu0
      %v2442 = vadd.f32 0.0, %v2441
      %v2443 = vpop.f32.mrb[0].mxu0
      %2444 = vmatprep.mubr.f32.mxu0 %v1952
      %2445 = vmatmul.mubr.f32.gmra.mrb[0].mxu0 %v1920
      %v2446 = vpop.f32.mrb[0].mxu0
      %v2447 = vadd.f32 0.0, %v2446
      %v2448 = vpop.f32.mrb[0].mxu0
      %2449 = vmatprep.mubr.f32.mxu0 %v1953
      %2450 = vmatmul.mubr.f32.gmra.mrb[0].mxu0 %v1921
      %v2451 = vpop.f32.mrb[0].mxu0
      %v2452 = vadd.f32 0.0, %v2451
      %v2453 = vpop.f32.mrb[0].mxu0
      %2454 = vmatprep.mubr.f32.mxu0 %v1954
      %2455 = vmatmul.mubr.f32.gmra.mrb[0].mxu0 %v1922
      %v2456 = vpop.f32.mrb[0].mxu0
      %v2457 = vadd.f32 0.0, %v2456
      %v2458 = vpop.f32.mrb[0].mxu0
      %2459 = vmatprep.mubr.f32.mxu0 %v1955
      %2460 = vmatmul.mubr.f32.gmra.mrb[0].mxu0 %v1923
      %v2461 = vpop.f32.mrb[0].mxu0
      %v2462 = vadd.f32 0.0, %v2461
      %v2463 = vpop.f32.mrb[0].mxu0
      %2464 = vmatprep.mubr.f32.mxu0 %v1956
      %2465 = vmatmul.mubr.f32.gmra.mrb[0].mxu0 %v1924
      %v2466 = vpop.f32.mrb[0].mxu0
      %v2467 = vadd.f32 0.0, %v2466
      %v2468 = vpop.f32.mrb[0].mxu0
      %2469 = vmatprep.mubr.f32.mxu0 %v1957
      %2470 = vmatmul.mubr.f32.gmra.mrb[0].mxu0 %v1925
      %v2471 = vpop.f32.mrb[0].mxu0
      %v2472 = vadd.f32 0.0, %v2471
      %v2473 = vpop.f32.mrb[0].mxu0
      %2474 = vmatprep.mubr.f32.mxu0 %v1958
      %2475 = vmatmul.mubr.f32.gmra.mrb[0].mxu0 %v1926
      %v2476 = vpop.f32.mrb[0].mxu0
      %v2477 = vadd.f32 0.0, %v2476
      %v2478 = vpop.f32.mrb[0].mxu0
      %2479 = vmatprep.mubr.f32.mxu0 %v1959
      %2480 = vmatmul.mubr.f32.gmra.mrb[0].mxu0 %v1927
      %v2481 = vpop.f32.mrb[0].mxu0
      %v2482 = vadd.f32 0.0, %v2481
      %v2483 = vpop.f32.mrb[0].mxu0
      %2484 = vmatprep.mubr.f32.mxu0 %v1960
      %2485 = vmatmul.mubr.f32.gmra.mrb[0].mxu0 %v1928
      %v2486 = vpop.f32.mrb[0].mxu0
      %v2487 = vadd.f32 0.0, %v2486
      %v2488 = vpop.f32.mrb[0].mxu0
      %2489 = vmatprep.mubr.f32.mxu0 %v1961
      %2490 = vmatmul.mubr.f32.gmra.mrb[0].mxu0 %v1929
      %v2491 = vpop.f32.mrb[0].mxu0
      %v2492 = vadd.f32 0.0, %v2491
      %v2493 = vpop.f32.mrb[0].mxu0
      %2494 = vmatprep.mubr.f32.mxu0 %v1962
      %2495 = vmatmul.mubr.f32.gmra.mrb[0].mxu0 %v1930
      %v2496 = vpop.f32.mrb[0].mxu0
      %v2497 = vadd.f32 0.0, %v2496
      %v2498 = vpop.f32.mrb[0].mxu0
      %2499 = vmatprep.mubr.f32.mxu0 %v1963
      %2500 = vmatmul.mubr.f32.gmra.mrb[0].mxu0 %v1931
      %v2501 = vpop.f32.mrb[0].mxu0
      %v2502 = vadd.f32 0.0, %v2501
      %v2503 = vpop.f32.mrb[0].mxu0
      %2504 = vmatprep.mubr.f32.mxu0 %v1964
      %2505 = vmatmul.mubr.f32.gmra.mrb[0].mxu0 %v1932
      %v2506 = vpop.f32.mrb[0].mxu0
      %v2507 = vadd.f32 0.0, %v2506
      %v2508 = vpop.f32.mrb[0].mxu0
      %2509 = vmatprep.mubr.f32.mxu0 %v1965
      %2510 = vmatmul.mubr.f32.gmra.mrb[0].mxu0 %v1933
      %v2511 = vpop.f32.mrb[0].mxu0
      %v2512 = vadd.f32 0.0, %v2511
      %v2513 = vpop.f32.mrb[0].mxu0
      %2514 = vmatprep.mubr.f32.mxu0 %v1966
      %2515 = vmatmul.mubr.f32.gmra.mrb[0].mxu0 %v1934
      %v2516 = vpop.f32.mrb[0].mxu0
      %v2517 = vadd.f32 0.0, %v2516
      %v2518 = vpop.f32.mrb[0].mxu0
      %2519 = vmatprep.mubr.f32.mxu0 %v1967
      %2520 = vmatmul.mubr.f32.gmra.mrb[0].mxu0 %v1935
      %v2521 = vpop.f32.mrb[0].mxu0
      %v2522 = vadd.f32 0.0, %v2521
      %v2523 = vpop.f32.mrb[0].mxu0
      %2524 = vmatprep.mubr.f32.mxu0 %v1968
      %2525 = vmatmul.mubr.f32.gmra.mrb[0].mxu0 %v1936
      %v2526 = vpop.f32.mrb[0].mxu0
      %v2527 = vadd.f32 0.0, %v2526
      %v2528 = vpop.f32.mrb[0].mxu0
      %2529 = vmatprep.mubr.f32.mxu0 %v1969
      %2530 = vmatmul.mubr.f32.gmra.mrb[0].mxu0 %v1937
      %v2531 = vpop.f32.mrb[0].mxu0
      %v2532 = vadd.f32 0.0, %v2531
      %v2533 = vpop.f32.mrb[0].mxu0
      %2534 = vmatprep.mubr.f32.mxu0 %v1970
      %2535 = vmatmul.mubr.f32.gmra.mrb[0].mxu0 %v1938
      %v2536 = vpop.f32.mrb[0].mxu0
      %v2537 = vadd.f32 0.0, %v2536
      %v2538 = vpop.f32.mrb[0].mxu0
      %2539 = vmatprep.mubr.f32.mxu0 %v1971
      %2540 = vmatmul.mubr.f32.gmra.mrb[0].mxu0 %v1939
      %v2541 = vpop.f32.mrb[0].mxu0
      %v2542 = vadd.f32 0.0, %v2541
      %v2543 = vpop.f32.mrb[0].mxu0
      %2544 = vmatprep.mubr.f32.mxu0 %v1972
      %2545 = vmatmul.mubr.f32.gmra.mrb[0].mxu0 %v1940
      %v2546 = vpop.f32.mrb[0].mxu0
      %v2547 = vadd.f32 0.0, %v2546
      %v2548 = vpop.f32.mrb[0].mxu0
      %2549 = vmatprep.mubr.f32.mxu0 %v1973
      %2550 = vmatmul.mubr.f32.gmra.mrb[0].mxu0 %v1941
      %v2551 = vpop.f32.mrb[0].mxu0
      %v2552 = vadd.f32 0.0, %v2551
      %v2553 = vpop.f32.mrb[0].mxu0
      %2554 = vmatprep.mubr.f32.mxu0 %v1974
      %2555 = vmatmul.mubr.f32.gmra.mrb[0].mxu0 %v1942
      %v2556 = vpop.f32.mrb[0].mxu0
      %v2557 = vadd.f32 0.0, %v2556
      %v2558 = vpop.f32.mrb[0].mxu0
      %2559 = vmatprep.mubr.f32.mxu0 %v1975
      %2560 = vmatmul.mubr.f32.gmra.mrb[0].mxu0 %v1943
      %v2561 = vpop.f32.mrb[0].mxu0
      %v2562 = vadd.f32 0.0, %v2561
      %v2563 = vpop.f32.mrb[0].mxu0
      %2564 = vmatprep.mubr.f32.mxu0 %v1976
      %2565 = vmatmul.mubr.f32.gmra.mrb[0].mxu0 %v1944
      %v2566 = vpop.f32.mrb[0].mxu0
      %v2567 = vadd.f32 0.0, %v2566
      %v2568 = vpop.f32.mrb[0].mxu0
      %2569 = vdwg.mxu0
      %2570 = vmatprep.subr.mxu0 0.0
      %2571 = vmatpush1.msra.mxu0 %v2233
      %2572 = vmatprep.subr.mxu0 0.0
      %2573 = vmatpush1.msra.mxu0 %v2234
      %2574 = vmatprep.subr.mxu0 0.0
      %2575 = vmatpush1.msra.mxu0 %v2235
      %2576 = vmatprep.subr.mxu0 0.0
      %2577 = vmatpush1.msra.mxu0 %v2236
      %2578 = vmatprep.subr.mxu0 0.0
      %2579 = vmatpush1.msra.mxu0 %v2237
      %2580 = vmatprep.subr.mxu0 0.0
      %2581 = vmatpush1.msra.mxu0 %v2238
      %2582 = vmatprep.subr.mxu0 0.0
      %2583 = vmatpush1.msra.mxu0 %v2239
      %2584 = vmatprep.subr.mxu0 0.0
      %2585 = vmatpush1.msra.mxu0 %v2240
      %2586 = vmatprep.subr.mxu0 0.0
      %2587 = vmatpush1.msra.mxu0 %v2241
      %2588 = vmatprep.subr.mxu0 0.0
      %2589 = vmatpush1.msra.mxu0 %v2242
      %2590 = vmatprep.subr.mxu0 0.0
      %2591 = vmatpush1.msra.mxu0 %v2243
      %2592 = vmatprep.subr.mxu0 0.0
      %2593 = vmatpush1.msra.mxu0 %v2244
      %2594 = vmatprep.subr.mxu0 0.0
      %2595 = vmatpush1.msra.mxu0 %v2245
      %2596 = vmatprep.subr.mxu0 0.0
      %2597 = vmatpush1.msra.mxu0 %v2246
      %2598 = vmatprep.subr.mxu0 0.0
      %2599 = vmatpush1.msra.mxu0 %v2247
      %2600 = vmatprep.subr.mxu0 0.0
      %2601 = vmatpush1.msra.mxu0 %v2248
      %2602 = vmatprep.subr.mxu0 0.0
      %2603 = vmatpush1.msra.mxu0 %v2249
      %2604 = vmatprep.subr.mxu0 0.0
      %2605 = vmatpush1.msra.mxu0 %v2250
      %2606 = vmatprep.subr.mxu0 0.0
      %2607 = vmatpush1.msra.mxu0 %v2251
      %2608 = vmatprep.subr.mxu0 0.0
      %2609 = vmatpush1.msra.mxu0 %v2252
      %2610 = vmatprep.subr.mxu0 0.0
      %2611 = vmatpush1.msra.mxu0 %v2253
      %2612 = vmatprep.subr.mxu0 0.0
      %2613 = vmatpush1.msra.mxu0 %v2254
      %2614 = vmatprep.subr.mxu0 0.0
      %2615 = vmatpush1.msra.mxu0 %v2255
      %2616 = vmatprep.subr.mxu0 0.0
      %2617 = vmatpush1.msra.mxu0 %v2256
      %2618 = vmatprep.subr.mxu0 0.0
      %2619 = vmatpush1.msra.mxu0 %v2257
      %2620 = vmatprep.subr.mxu0 0.0
      %2621 = vmatpush1.msra.mxu0 %v2258
      %2622 = vmatprep.subr.mxu0 0.0
      %2623 = vmatpush1.msra.mxu0 %v2259
      %2624 = vmatprep.subr.mxu0 0.0
      %2625 = vmatpush1.msra.mxu0 %v2260
      %2626 = vmatprep.subr.mxu0 0.0
      %2627 = vmatpush1.msra.mxu0 %v2261
      %2628 = vmatprep.subr.mxu0 0.0
      %2629 = vmatpush1.msra.mxu0 %v2262
      %2630 = vmatprep.subr.mxu0 0.0
      %2631 = vmatpush1.msra.mxu0 %v2263
      %2632 = vmatprep.subr.mxu0 0.0
      %2633 = vmatpush1.msra.mxu0 %v2264
      %2634 = vmatprep.mubr.f32.mxu0 %v2009
      %2635 = vmatmul.mubr.f32.gmra.mrb[0].mxu0 %v1977
      %v2636 = vpop.f32.mrb[0].mxu0
      %v2637 = vadd.f32 %v2412, %v2636
      %v2638 = vpop.f32.mrb[0].mxu0
      %2639 = vmatprep.mubr.f32.mxu0 %v2010
      %2640 = vmatmul.mubr.f32.gmra.mrb[0].mxu0 %v1978
      %v2641 = vpop.f32.mrb[0].mxu0
      %v2642 = vadd.f32 %v2417, %v2641
      %v2643 = vpop.f32.mrb[0].mxu0
      %2644 = vmatprep.mubr.f32.mxu0 %v2011
      %2645 = vmatmul.mubr.f32.gmra.mrb[0].mxu0 %v1979
      %v2646 = vpop.f32.mrb[0].mxu0
      %v2647 = vadd.f32 %v2422, %v2646
      %v2648 = vpop.f32.mrb[0].mxu0
      %2649 = vmatprep.mubr.f32.mxu0 %v2012
      %2650 = vmatmul.mubr.f32.gmra.mrb[0].mxu0 %v1980
      %v2651 = vpop.f32.mrb[0].mxu0
      %v2652 = vadd.f32 %v2427, %v2651
      %v2653 = vpop.f32.mrb[0].mxu0
      %2654 = vmatprep.mubr.f32.mxu0 %v2013
      %2655 = vmatmul.mubr.f32.gmra.mrb[0].mxu0 %v1981
      %v2656 = vpop.f32.mrb[0].mxu0
      %v2657 = vadd.f32 %v2432, %v2656
      %v2658 = vpop.f32.mrb[0].mxu0
      %2659 = vmatprep.mubr.f32.mxu0 %v2014
      %2660 = vmatmul.mubr.f32.gmra.mrb[0].mxu0 %v1982
      %v2661 = vpop.f32.mrb[0].mxu0
      %v2662 = vadd.f32 %v2437, %v2661
      %v2663 = vpop.f32.mrb[0].mxu0
      %2664 = vmatprep.mubr.f32.mxu0 %v2015
      %2665 = vmatmul.mubr.f32.gmra.mrb[0].mxu0 %v1983
      %v2666 = vpop.f32.mrb[0].mxu0
      %v2667 = vadd.f32 %v2442, %v2666
      %v2668 = vpop.f32.mrb[0].mxu0
      %2669 = vmatprep.mubr.f32.mxu0 %v2016
      %2670 = vmatmul.mubr.f32.gmra.mrb[0].mxu0 %v1984
      %v2671 = vpop.f32.mrb[0].mxu0
      %v2672 = vadd.f32 %v2447, %v2671
      %v2673 = vpop.f32.mrb[0].mxu0
      %2674 = vmatprep.mubr.f32.mxu0 %v2017
      %2675 = vmatmul.mubr.f32.gmra.mrb[0].mxu0 %v1985
      %v2676 = vpop.f32.mrb[0].mxu0
      %v2677 = vadd.f32 %v2452, %v2676
      %v2678 = vpop.f32.mrb[0].mxu0
      %2679 = vmatprep.mubr.f32.mxu0 %v2018
      %2680 = vmatmul.mubr.f32.gmra.mrb[0].mxu0 %v1986
      %v2681 = vpop.f32.mrb[0].mxu0
      %v2682 = vadd.f32 %v2457, %v2681
      %v2683 = vpop.f32.mrb[0].mxu0
      %2684 = vmatprep.mubr.f32.mxu0 %v2019
      %2685 = vmatmul.mubr.f32.gmra.mrb[0].mxu0 %v1987
      %v2686 = vpop.f32.mrb[0].mxu0
      %v2687 = vadd.f32 %v2462, %v2686
      %v2688 = vpop.f32.mrb[0].mxu0
      %2689 = vmatprep.mubr.f32.mxu0 %v2020
      %2690 = vmatmul.mubr.f32.gmra.mrb[0].mxu0 %v1988
      %v2691 = vpop.f32.mrb[0].mxu0
      %v2692 = vadd.f32 %v2467, %v2691
      %v2693 = vpop.f32.mrb[0].mxu0
      %2694 = vmatprep.mubr.f32.mxu0 %v2021
      %2695 = vmatmul.mubr.f32.gmra.mrb[0].mxu0 %v1989
      %v2696 = vpop.f32.mrb[0].mxu0
      %v2697 = vadd.f32 %v2472, %v2696
      %v2698 = vpop.f32.mrb[0].mxu0
      %2699 = vmatprep.mubr.f32.mxu0 %v2022
      %2700 = vmatmul.mubr.f32.gmra.mrb[0].mxu0 %v1990
      %v2701 = vpop.f32.mrb[0].mxu0
      %v2702 = vadd.f32 %v2477, %v2701
      %v2703 = vpop.f32.mrb[0].mxu0
      %2704 = vmatprep.mubr.f32.mxu0 %v2023
      %2705 = vmatmul.mubr.f32.gmra.mrb[0].mxu0 %v1991
      %v2706 = vpop.f32.mrb[0].mxu0
      %v2707 = vadd.f32 %v2482, %v2706
      %v2708 = vpop.f32.mrb[0].mxu0
      %2709 = vmatprep.mubr.f32.mxu0 %v2024
      %2710 = vmatmul.mubr.f32.gmra.mrb[0].mxu0 %v1992
      %v2711 = vpop.f32.mrb[0].mxu0
      %v2712 = vadd.f32 %v2487, %v2711
      %v2713 = vpop.f32.mrb[0].mxu0
      %2714 = vmatprep.mubr.f32.mxu0 %v2025
      %2715 = vmatmul.mubr.f32.gmra.mrb[0].mxu0 %v1993
      %v2716 = vpop.f32.mrb[0].mxu0
      %v2717 = vadd.f32 %v2492, %v2716
      %v2718 = vpop.f32.mrb[0].mxu0
      %2719 = vmatprep.mubr.f32.mxu0 %v2026
      %2720 = vmatmul.mubr.f32.gmra.mrb[0].mxu0 %v1994
      %v2721 = vpop.f32.mrb[0].mxu0
      %v2722 = vadd.f32 %v2497, %v2721
      %v2723 = vpop.f32.mrb[0].mxu0
      %2724 = vmatprep.mubr.f32.mxu0 %v2027
      %2725 = vmatmul.mubr.f32.gmra.mrb[0].mxu0 %v1995
      %v2726 = vpop.f32.mrb[0].mxu0
      %v2727 = vadd.f32 %v2502, %v2726
      %v2728 = vpop.f32.mrb[0].mxu0
      %2729 = vmatprep.mubr.f32.mxu0 %v2028
      %2730 = vmatmul.mubr.f32.gmra.mrb[0].mxu0 %v1996
      %v2731 = vpop.f32.mrb[0].mxu0
      %v2732 = vadd.f32 %v2507, %v2731
      %v2733 = vpop.f32.mrb[0].mxu0
      %2734 = vmatprep.mubr.f32.mxu0 %v2029
      %2735 = vmatmul.mubr.f32.gmra.mrb[0].mxu0 %v1997
      %v2736 = vpop.f32.mrb[0].mxu0
      %v2737 = vadd.f32 %v2512, %v2736
      %v2738 = vpop.f32.mrb[0].mxu0
      %2739 = vmatprep.mubr.f32.mxu0 %v2030
      %2740 = vmatmul.mubr.f32.gmra.mrb[0].mxu0 %v1998
      %v2741 = vpop.f32.mrb[0].mxu0
      %v2742 = vadd.f32 %v2517, %v2741
      %v2743 = vpop.f32.mrb[0].mxu0
      %2744 = vmatprep.mubr.f32.mxu0 %v2031
      %2745 = vmatmul.mubr.f32.gmra.mrb[0].mxu0 %v1999
      %v2746 = vpop.f32.mrb[0].mxu0
      %v2747 = vadd.f32 %v2522, %v2746
      %v2748 = vpop.f32.mrb[0].mxu0
      %2749 = vmatprep.mubr.f32.mxu0 %v2032
      %2750 = vmatmul.mubr.f32.gmra.mrb[0].mxu0 %v2000
      %v2751 = vpop.f32.mrb[0].mxu0
      %v2752 = vadd.f32 %v2527, %v2751
      %v2753 = vpop.f32.mrb[0].mxu0
      %2754 = vmatprep.mubr.f32.mxu0 %v2033
      %2755 = vmatmul.mubr.f32.gmra.mrb[0].mxu0 %v2001
      %v2756 = vpop.f32.mrb[0].mxu0
      %v2757 = vadd.f32 %v2532, %v2756
      %v2758 = vpop.f32.mrb[0].mxu0
      %2759 = vmatprep.mubr.f32.mxu0 %v2034
      %2760 = vmatmul.mubr.f32.gmra.mrb[0].mxu0 %v2002
      %v2761 = vpop.f32.mrb[0].mxu0
      %v2762 = vadd.f32 %v2537, %v2761
      %v2763 = vpop.f32.mrb[0].mxu0
      %2764 = vmatprep.mubr.f32.mxu0 %v2035
      %2765 = vmatmul.mubr.f32.gmra.mrb[0].mxu0 %v2003
      %v2766 = vpop.f32.mrb[0].mxu0
      %v2767 = vadd.f32 %v2542, %v2766
      %v2768 = vpop.f32.mrb[0].mxu0
      %2769 = vmatprep.mubr.f32.mxu0 %v2036
      %2770 = vmatmul.mubr.f32.gmra.mrb[0].mxu0 %v2004
      %v2771 = vpop.f32.mrb[0].mxu0
      %v2772 = vadd.f32 %v2547, %v2771
      %v2773 = vpop.f32.mrb[0].mxu0
      %2774 = vmatprep.mubr.f32.mxu0 %v2037
      %2775 = vmatmul.mubr.f32.gmra.mrb[0].mxu0 %v2005
      %v2776 = vpop.f32.mrb[0].mxu0
      %v2777 = vadd.f32 %v2552, %v2776
      %v2778 = vpop.f32.mrb[0].mxu0
      %2779 = vmatprep.mubr.f32.mxu0 %v2038
      %2780 = vmatmul.mubr.f32.gmra.mrb[0].mxu0 %v2006
      %v2781 = vpop.f32.mrb[0].mxu0
      %v2782 = vadd.f32 %v2557, %v2781
      %v2783 = vpop.f32.mrb[0].mxu0
      %2784 = vmatprep.mubr.f32.mxu0 %v2039
      %2785 = vmatmul.mubr.f32.gmra.mrb[0].mxu0 %v2007
      %v2786 = vpop.f32.mrb[0].mxu0
      %v2787 = vadd.f32 %v2562, %v2786
      %v2788 = vpop.f32.mrb[0].mxu0
      %2789 = vmatprep.mubr.f32.mxu0 %v2040
      %2790 = vmatmul.mubr.f32.gmra.mrb[0].mxu0 %v2008
      %v2791 = vpop.f32.mrb[0].mxu0
      %v2792 = vadd.f32 %v2567, %v2791
      %v2793 = vpop.f32.mrb[0].mxu0
      %2794 = vdwg.mxu0
      %2795 = vmatprep.subr.mxu0 0.0
      %2796 = vmatpush1.msra.mxu0 %v2265
      %2797 = vmatprep.subr.mxu0 0.0
      %2798 = vmatpush1.msra.mxu0 %v2266
      %2799 = vmatprep.subr.mxu0 0.0
      %2800 = vmatpush1.msra.mxu0 %v2267
      %2801 = vmatprep.subr.mxu0 0.0
      %2802 = vmatpush1.msra.mxu0 %v2268
      %2803 = vmatprep.subr.mxu0 0.0
      %2804 = vmatpush1.msra.mxu0 %v2269
      %2805 = vmatprep.subr.mxu0 0.0
      %2806 = vmatpush1.msra.mxu0 %v2270
      %2807 = vmatprep.subr.mxu0 0.0
      %2808 = vmatpush1.msra.mxu0 %v2271
      %2809 = vmatprep.subr.mxu0 0.0
      %2810 = vmatpush1.msra.mxu0 %v2272
      %2811 = vmatprep.subr.mxu0 0.0
      %2812 = vmatpush1.msra.mxu0 %v2273
      %2813 = vmatprep.subr.mxu0 0.0
      %2814 = vmatpush1.msra.mxu0 %v2274
      %2815 = vmatprep.subr.mxu0 0.0
      %2816 = vmatpush1.msra.mxu0 %v2275
      %2817 = vmatprep.subr.mxu0 0.0
      %2818 = vmatpush1.msra.mxu0 %v2276
      %2819 = vmatprep.subr.mxu0 0.0
      %2820 = vmatpush1.msra.mxu0 %v2277
      %2821 = vmatprep.subr.mxu0 0.0
      %2822 = vmatpush1.msra.mxu0 %v2278
      %2823 = vmatprep.subr.mxu0 0.0
      %2824 = vmatpush1.msra.mxu0 %v2279
      %2825 = vmatprep.subr.mxu0 0.0
      %2826 = vmatpush1.msra.mxu0 %v2280
      %2827 = vmatprep.subr.mxu0 0.0
      %2828 = vmatpush1.msra.mxu0 %v2281
      %2829 = vmatprep.subr.mxu0 0.0
      %2830 = vmatpush1.msra.mxu0 %v2282
      %2831 = vmatprep.subr.mxu0 0.0
      %2832 = vmatpush1.msra.mxu0 %v2283
      %2833 = vmatprep.subr.mxu0 0.0
      %2834 = vmatpush1.msra.mxu0 %v2284
      %2835 = vmatprep.subr.mxu0 0.0
      %2836 = vmatpush1.msra.mxu0 %v2285
      %2837 = vmatprep.subr.mxu0 0.0
      %2838 = vmatpush1.msra.mxu0 %v2286
      %2839 = vmatprep.subr.mxu0 0.0
      %2840 = vmatpush1.msra.mxu0 %v2287
      %2841 = vmatprep.subr.mxu0 0.0
      %2842 = vmatpush1.msra.mxu0 %v2288
      %2843 = vmatprep.subr.mxu0 0.0
      %2844 = vmatpush1.msra.mxu0 %v2289
      %2845 = vmatprep.subr.mxu0 0.0
      %2846 = vmatpush1.msra.mxu0 %v2290
      %2847 = vmatprep.subr.mxu0 0.0
      %2848 = vmatpush1.msra.mxu0 %v2291
      %2849 = vmatprep.subr.mxu0 0.0
      %2850 = vmatpush1.msra.mxu0 %v2292
      %2851 = vmatprep.subr.mxu0 0.0
      %2852 = vmatpush1.msra.mxu0 %v2293
      %2853 = vmatprep.subr.mxu0 0.0
      %2854 = vmatpush1.msra.mxu0 %v2294
      %2855 = vmatprep.subr.mxu0 0.0
      %2856 = vmatpush1.msra.mxu0 %v2295
      %2857 = vmatprep.subr.mxu0 0.0
      %2858 = vmatpush1.msra.mxu0 %v2296
      %2859 = vmatprep.mubr.f32.mxu0 %v2073
      %2860 = vmatmul.mubr.f32.gmra.mrb[0].mxu0 %v2041
      %v2861 = vpop.f32.mrb[0].mxu0
      %v2862 = vadd.f32 %v2637, %v2861
      %v2863 = vpop.f32.mrb[0].mxu0
      %2864 = vmatprep.mubr.f32.mxu0 %v2074
      %2865 = vmatmul.mubr.f32.gmra.mrb[0].mxu0 %v2042
      %v2866 = vpop.f32.mrb[0].mxu0
      %v2867 = vadd.f32 %v2642, %v2866
      %v2868 = vpop.f32.mrb[0].mxu0
      %2869 = vmatprep.mubr.f32.mxu0 %v2075
      %2870 = vmatmul.mubr.f32.gmra.mrb[0].mxu0 %v2043
      %v2871 = vpop.f32.mrb[0].mxu0
      %v2872 = vadd.f32 %v2647, %v2871
      %v2873 = vpop.f32.mrb[0].mxu0
      %2874 = vmatprep.mubr.f32.mxu0 %v2076
      %2875 = vmatmul.mubr.f32.gmra.mrb[0].mxu0 %v2044
      %v2876 = vpop.f32.mrb[0].mxu0
      %v2877 = vadd.f32 %v2652, %v2876
      %v2878 = vpop.f32.mrb[0].mxu0
      %2879 = vmatprep.mubr.f32.mxu0 %v2077
      %2880 = vmatmul.mubr.f32.gmra.mrb[0].mxu0 %v2045
      %v2881 = vpop.f32.mrb[0].mxu0
      %v2882 = vadd.f32 %v2657, %v2881
      %v2883 = vpop.f32.mrb[0].mxu0
      %2884 = vmatprep.mubr.f32.mxu0 %v2078
      %2885 = vmatmul.mubr.f32.gmra.mrb[0].mxu0 %v2046
      %v2886 = vpop.f32.mrb[0].mxu0
      %v2887 = vadd.f32 %v2662, %v2886
      %v2888 = vpop.f32.mrb[0].mxu0
      %2889 = vmatprep.mubr.f32.mxu0 %v2079
      %2890 = vmatmul.mubr.f32.gmra.mrb[0].mxu0 %v2047
      %v2891 = vpop.f32.mrb[0].mxu0
      %v2892 = vadd.f32 %v2667, %v2891
      %v2893 = vpop.f32.mrb[0].mxu0
      %2894 = vmatprep.mubr.f32.mxu0 %v2080
      %2895 = vmatmul.mubr.f32.gmra.mrb[0].mxu0 %v2048
      %v2896 = vpop.f32.mrb[0].mxu0
      %v2897 = vadd.f32 %v2672, %v2896
      %v2898 = vpop.f32.mrb[0].mxu0
      %2899 = vmatprep.mubr.f32.mxu0 %v2081
      %2900 = vmatmul.mubr.f32.gmra.mrb[0].mxu0 %v2049
      %v2901 = vpop.f32.mrb[0].mxu0
      %v2902 = vadd.f32 %v2677, %v2901
      %v2903 = vpop.f32.mrb[0].mxu0
      %2904 = vmatprep.mubr.f32.mxu0 %v2082
      %2905 = vmatmul.mubr.f32.gmra.mrb[0].mxu0 %v2050
      %v2906 = vpop.f32.mrb[0].mxu0
      %v2907 = vadd.f32 %v2682, %v2906
      %v2908 = vpop.f32.mrb[0].mxu0
      %2909 = vmatprep.mubr.f32.mxu0 %v2083
      %2910 = vmatmul.mubr.f32.gmra.mrb[0].mxu0 %v2051
      %v2911 = vpop.f32.mrb[0].mxu0
      %v2912 = vadd.f32 %v2687, %v2911
      %v2913 = vpop.f32.mrb[0].mxu0
      %2914 = vmatprep.mubr.f32.mxu0 %v2084
      %2915 = vmatmul.mubr.f32.gmra.mrb[0].mxu0 %v2052
      %v2916 = vpop.f32.mrb[0].mxu0
      %v2917 = vadd.f32 %v2692, %v2916
      %v2918 = vpop.f32.mrb[0].mxu0
      %2919 = vmatprep.mubr.f32.mxu0 %v2085
      %2920 = vmatmul.mubr.f32.gmra.mrb[0].mxu0 %v2053
      %v2921 = vpop.f32.mrb[0].mxu0
      %v2922 = vadd.f32 %v2697, %v2921
      %v2923 = vpop.f32.mrb[0].mxu0
      %2924 = vmatprep.mubr.f32.mxu0 %v2086
      %2925 = vmatmul.mubr.f32.gmra.mrb[0].mxu0 %v2054
      %v2926 = vpop.f32.mrb[0].mxu0
      %v2927 = vadd.f32 %v2702, %v2926
      %v2928 = vpop.f32.mrb[0].mxu0
      %2929 = vmatprep.mubr.f32.mxu0 %v2087
      %2930 = vmatmul.mubr.f32.gmra.mrb[0].mxu0 %v2055
      %v2931 = vpop.f32.mrb[0].mxu0
      %v2932 = vadd.f32 %v2707, %v2931
      %v2933 = vpop.f32.mrb[0].mxu0
      %2934 = vmatprep.mubr.f32.mxu0 %v2088
      %2935 = vmatmul.mubr.f32.gmra.mrb[0].mxu0 %v2056
      %v2936 = vpop.f32.mrb[0].mxu0
      %v2937 = vadd.f32 %v2712, %v2936
      %v2938 = vpop.f32.mrb[0].mxu0
      %2939 = vmatprep.mubr.f32.mxu0 %v2089
      %2940 = vmatmul.mubr.f32.gmra.mrb[0].mxu0 %v2057
      %v2941 = vpop.f32.mrb[0].mxu0
      %v2942 = vadd.f32 %v2717, %v2941
      %v2943 = vpop.f32.mrb[0].mxu0
      %2944 = vmatprep.mubr.f32.mxu0 %v2090
      %2945 = vmatmul.mubr.f32.gmra.mrb[0].mxu0 %v2058
      %v2946 = vpop.f32.mrb[0].mxu0
      %v2947 = vadd.f32 %v2722, %v2946
      %v2948 = vpop.f32.mrb[0].mxu0
      %2949 = vmatprep.mubr.f32.mxu0 %v2091
      %2950 = vmatmul.mubr.f32.gmra.mrb[0].mxu0 %v2059
      %v2951 = vpop.f32.mrb[0].mxu0
      %v2952 = vadd.f32 %v2727, %v2951
      %v2953 = vpop.f32.mrb[0].mxu0
      %2954 = vmatprep.mubr.f32.mxu0 %v2092
      %2955 = vmatmul.mubr.f32.gmra.mrb[0].mxu0 %v2060
      %v2956 = vpop.f32.mrb[0].mxu0
      %v2957 = vadd.f32 %v2732, %v2956
      %v2958 = vpop.f32.mrb[0].mxu0
      %2959 = vmatprep.mubr.f32.mxu0 %v2093
      %2960 = vmatmul.mubr.f32.gmra.mrb[0].mxu0 %v2061
      %v2961 = vpop.f32.mrb[0].mxu0
      %v2962 = vadd.f32 %v2737, %v2961
      %v2963 = vpop.f32.mrb[0].mxu0
      %2964 = vmatprep.mubr.f32.mxu0 %v2094
      %2965 = vmatmul.mubr.f32.gmra.mrb[0].mxu0 %v2062
      %v2966 = vpop.f32.mrb[0].mxu0
      %v2967 = vadd.f32 %v2742, %v2966
      %v2968 = vpop.f32.mrb[0].mxu0
      %2969 = vmatprep.mubr.f32.mxu0 %v2095
      %2970 = vmatmul.mubr.f32.gmra.mrb[0].mxu0 %v2063
      %v2971 = vpop.f32.mrb[0].mxu0
      %v2972 = vadd.f32 %v2747, %v2971
      %v2973 = vpop.f32.mrb[0].mxu0
      %2974 = vmatprep.mubr.f32.mxu0 %v2096
      %2975 = vmatmul.mubr.f32.gmra.mrb[0].mxu0 %v2064
      %v2976 = vpop.f32.mrb[0].mxu0
      %v2977 = vadd.f32 %v2752, %v2976
      %v2978 = vpop.f32.mrb[0].mxu0
      %2979 = vmatprep.mubr.f32.mxu0 %v2097
      %2980 = vmatmul.mubr.f32.gmra.mrb[0].mxu0 %v2065
      %v2981 = vpop.f32.mrb[0].mxu0
      %v2982 = vadd.f32 %v2757, %v2981
      %v2983 = vpop.f32.mrb[0].mxu0
      %2984 = vmatprep.mubr.f32.mxu0 %v2098
      %2985 = vmatmul.mubr.f32.gmra.mrb[0].mxu0 %v2066
      %v2986 = vpop.f32.mrb[0].mxu0
      %v2987 = vadd.f32 %v2762, %v2986
      %v2988 = vpop.f32.mrb[0].mxu0
      %2989 = vmatprep.mubr.f32.mxu0 %v2099
      %2990 = vmatmul.mubr.f32.gmra.mrb[0].mxu0 %v2067
      %v2991 = vpop.f32.mrb[0].mxu0
      %v2992 = vadd.f32 %v2767, %v2991
      %v2993 = vpop.f32.mrb[0].mxu0
      %2994 = vmatprep.mubr.f32.mxu0 %v2100
      %2995 = vmatmul.mubr.f32.gmra.mrb[0].mxu0 %v2068
      %v2996 = vpop.f32.mrb[0].mxu0
      %v2997 = vadd.f32 %v2772, %v2996
      %v2998 = vpop.f32.mrb[0].mxu0
      %2999 = vmatprep.mubr.f32.mxu0 %v2101
      %3000 = vmatmul.mubr.f32.gmra.mrb[0].mxu0 %v2069
      %v3001 = vpop.f32.mrb[0].mxu0
      %v3002 = vadd.f32 %v2777, %v3001
      %v3003 = vpop.f32.mrb[0].mxu0
      %3004 = vmatprep.mubr.f32.mxu0 %v2102
      %3005 = vmatmul.mubr.f32.gmra.mrb[0].mxu0 %v2070
      %v3006 = vpop.f32.mrb[0].mxu0
      %v3007 = vadd.f32 %v2782, %v3006
      %v3008 = vpop.f32.mrb[0].mxu0
      %3009 = vmatprep.mubr.f32.mxu0 %v2103
      %3010 = vmatmul.mubr.f32.gmra.mrb[0].mxu0 %v2071
      %v3011 = vpop.f32.mrb[0].mxu0
      %v3012 = vadd.f32 %v2787, %v3011
      %v3013 = vpop.f32.mrb[0].mxu0
      %3014 = vmatprep.mubr.f32.mxu0 %v2104
      %3015 = vmatmul.mubr.f32.gmra.mrb[0].mxu0 %v2072
      %v3016 = vpop.f32.mrb[0].mxu0
      %v3017 = vadd.f32 %v2792, %v3016
      %v3018 = vpop.f32.mrb[0].mxu0
      %3019 = vdwg.mxu0
      %3020 = vmatprep.subr.mxu0 0.0
      %3021 = vmatpush1.msra.mxu0 %v2297
      %3022 = vmatprep.subr.mxu0 0.0
      %3023 = vmatpush1.msra.mxu0 %v2298
      %3024 = vmatprep.subr.mxu0 0.0
      %3025 = vmatpush1.msra.mxu0 %v2299
      %3026 = vmatprep.subr.mxu0 0.0
      %3027 = vmatpush1.msra.mxu0 %v2300
      %3028 = vmatprep.subr.mxu0 0.0
      %3029 = vmatpush1.msra.mxu0 %v2301
      %3030 = vmatprep.subr.mxu0 0.0
      %3031 = vmatpush1.msra.mxu0 %v2302
      %3032 = vmatprep.subr.mxu0 0.0
      %3033 = vmatpush1.msra.mxu0 %v2303
      %3034 = vmatprep.subr.mxu0 0.0
      %3035 = vmatpush1.msra.mxu0 %v2304
      %3036 = vmatprep.subr.mxu0 0.0
      %3037 = vmatpush1.msra.mxu0 %v2305
      %3038 = vmatprep.subr.mxu0 0.0
      %3039 = vmatpush1.msra.mxu0 %v2306
      %3040 = vmatprep.subr.mxu0 0.0
      %3041 = vmatpush1.msra.mxu0 %v2307
      %3042 = vmatprep.subr.mxu0 0.0
      %3043 = vmatpush1.msra.mxu0 %v2308
      %3044 = vmatprep.subr.mxu0 0.0
      %3045 = vmatpush1.msra.mxu0 %v2309
      %3046 = vmatprep.subr.mxu0 0.0
      %3047 = vmatpush1.msra.mxu0 %v2310
      %3048 = vmatprep.subr.mxu0 0.0
      %3049 = vmatpush1.msra.mxu0 %v2311
      %3050 = vmatprep.subr.mxu0 0.0
      %3051 = vmatpush1.msra.mxu0 %v2312
      %3052 = vmatprep.subr.mxu0 0.0
      %3053 = vmatpush1.msra.mxu0 %v2313
      %3054 = vmatprep.subr.mxu0 0.0
      %3055 = vmatpush1.msra.mxu0 %v2314
      %3056 = vmatprep.subr.mxu0 0.0
      %3057 = vmatpush1.msra.mxu0 %v2315
      %3058 = vmatprep.subr.mxu0 0.0
      %3059 = vmatpush1.msra.mxu0 %v2316
      %3060 = vmatprep.subr.mxu0 0.0
      %3061 = vmatpush1.msra.mxu0 %v2317
      %3062 = vmatprep.subr.mxu0 0.0
      %3063 = vmatpush1.msra.mxu0 %v2318
      %3064 = vmatprep.subr.mxu0 0.0
      %3065 = vmatpush1.msra.mxu0 %v2319
      %3066 = vmatprep.subr.mxu0 0.0
      %3067 = vmatpush1.msra.mxu0 %v2320
      %3068 = vmatprep.subr.mxu0 0.0
      %3069 = vmatpush1.msra.mxu0 %v2321
      %3070 = vmatprep.subr.mxu0 0.0
      %3071 = vmatpush1.msra.mxu0 %v2322
      %3072 = vmatprep.subr.mxu0 0.0
      %3073 = vmatpush1.msra.mxu0 %v2323
      %3074 = vmatprep.subr.mxu0 0.0
      %3075 = vmatpush1.msra.mxu0 %v2324
      %3076 = vmatprep.subr.mxu0 0.0
      %3077 = vmatpush1.msra.mxu0 %v2325
      %3078 = vmatprep.subr.mxu0 0.0
      %3079 = vmatpush1.msra.mxu0 %v2326
      %3080 = vmatprep.subr.mxu0 0.0
      %3081 = vmatpush1.msra.mxu0 %v2327
      %3082 = vmatprep.subr.mxu0 0.0
      %3083 = vmatpush1.msra.mxu0 %v2328
      %3084 = vmatprep.mubr.f32.mxu0 %v2137
      %3085 = vmatmul.mubr.f32.gmra.mrb[0].mxu0 %v2105
      %v3086 = vpop.f32.mrb[0].mxu0
      %v3087 = vadd.f32 %v2862, %v3086
      %v3088 = vpop.f32.mrb[0].mxu0
      %3089 = vmatprep.mubr.f32.mxu0 %v2138
      %3090 = vmatmul.mubr.f32.gmra.mrb[0].mxu0 %v2106
      %v3091 = vpop.f32.mrb[0].mxu0
      %v3092 = vadd.f32 %v2867, %v3091
      %v3093 = vpop.f32.mrb[0].mxu0
      %3094 = vmatprep.mubr.f32.mxu0 %v2139
      %3095 = vmatmul.mubr.f32.gmra.mrb[0].mxu0 %v2107
      %v3096 = vpop.f32.mrb[0].mxu0
      %v3097 = vadd.f32 %v2872, %v3096
      %v3098 = vpop.f32.mrb[0].mxu0
      %3099 = vmatprep.mubr.f32.mxu0 %v2140
      %3100 = vmatmul.mubr.f32.gmra.mrb[0].mxu0 %v2108
      %v3101 = vpop.f32.mrb[0].mxu0
      %v3102 = vadd.f32 %v2877, %v3101
      %v3103 = vpop.f32.mrb[0].mxu0
      %3104 = vmatprep.mubr.f32.mxu0 %v2141
      %3105 = vmatmul.mubr.f32.gmra.mrb[0].mxu0 %v2109
      %v3106 = vpop.f32.mrb[0].mxu0
      %v3107 = vadd.f32 %v2882, %v3106
      %v3108 = vpop.f32.mrb[0].mxu0
      %3109 = vmatprep.mubr.f32.mxu0 %v2142
      %3110 = vmatmul.mubr.f32.gmra.mrb[0].mxu0 %v2110
      %v3111 = vpop.f32.mrb[0].mxu0
      %v3112 = vadd.f32 %v2887, %v3111
      %v3113 = vpop.f32.mrb[0].mxu0
      %3114 = vmatprep.mubr.f32.mxu0 %v2143
      %3115 = vmatmul.mubr.f32.gmra.mrb[0].mxu0 %v2111
      %v3116 = vpop.f32.mrb[0].mxu0
      %v3117 = vadd.f32 %v2892, %v3116
      %v3118 = vpop.f32.mrb[0].mxu0
      %3119 = vmatprep.mubr.f32.mxu0 %v2144
      %3120 = vmatmul.mubr.f32.gmra.mrb[0].mxu0 %v2112
      %v3121 = vpop.f32.mrb[0].mxu0
      %v3122 = vadd.f32 %v2897, %v3121
      %v3123 = vpop.f32.mrb[0].mxu0
      %3124 = vmatprep.mubr.f32.mxu0 %v2145
      %3125 = vmatmul.mubr.f32.gmra.mrb[0].mxu0 %v2113
      %v3126 = vpop.f32.mrb[0].mxu0
      %v3127 = vadd.f32 %v2902, %v3126
      %v3128 = vpop.f32.mrb[0].mxu0
      %3129 = vmatprep.mubr.f32.mxu0 %v2146
      %3130 = vmatmul.mubr.f32.gmra.mrb[0].mxu0 %v2114
      %v3131 = vpop.f32.mrb[0].mxu0
      %v3132 = vadd.f32 %v2907, %v3131
      %v3133 = vpop.f32.mrb[0].mxu0
      %3134 = vmatprep.mubr.f32.mxu0 %v2147
      %3135 = vmatmul.mubr.f32.gmra.mrb[0].mxu0 %v2115
      %v3136 = vpop.f32.mrb[0].mxu0
      %v3137 = vadd.f32 %v2912, %v3136
      %v3138 = vpop.f32.mrb[0].mxu0
      %3139 = vmatprep.mubr.f32.mxu0 %v2148
      %3140 = vmatmul.mubr.f32.gmra.mrb[0].mxu0 %v2116
      %v3141 = vpop.f32.mrb[0].mxu0
      %v3142 = vadd.f32 %v2917, %v3141
      %v3143 = vpop.f32.mrb[0].mxu0
      %3144 = vmatprep.mubr.f32.mxu0 %v2149
      %3145 = vmatmul.mubr.f32.gmra.mrb[0].mxu0 %v2117
      %v3146 = vpop.f32.mrb[0].mxu0
      %v3147 = vadd.f32 %v2922, %v3146
      %v3148 = vpop.f32.mrb[0].mxu0
      %3149 = vmatprep.mubr.f32.mxu0 %v2150
      %3150 = vmatmul.mubr.f32.gmra.mrb[0].mxu0 %v2118
      %v3151 = vpop.f32.mrb[0].mxu0
      %v3152 = vadd.f32 %v2927, %v3151
      %v3153 = vpop.f32.mrb[0].mxu0
      %3154 = vmatprep.mubr.f32.mxu0 %v2151
      %3155 = vmatmul.mubr.f32.gmra.mrb[0].mxu0 %v2119
      %v3156 = vpop.f32.mrb[0].mxu0
      %v3157 = vadd.f32 %v2932, %v3156
      %v3158 = vpop.f32.mrb[0].mxu0
      %3159 = vmatprep.mubr.f32.mxu0 %v2152
      %3160 = vmatmul.mubr.f32.gmra.mrb[0].mxu0 %v2120
      %v3161 = vpop.f32.mrb[0].mxu0
      %v3162 = vadd.f32 %v2937, %v3161
      %v3163 = vpop.f32.mrb[0].mxu0
      %3164 = vmatprep.mubr.f32.mxu0 %v2153
      %3165 = vmatmul.mubr.f32.gmra.mrb[0].mxu0 %v2121
      %v3166 = vpop.f32.mrb[0].mxu0
      %v3167 = vadd.f32 %v2942, %v3166
      %v3168 = vpop.f32.mrb[0].mxu0
      %3169 = vmatprep.mubr.f32.mxu0 %v2154
      %3170 = vmatmul.mubr.f32.gmra.mrb[0].mxu0 %v2122
      %v3171 = vpop.f32.mrb[0].mxu0
      %v3172 = vadd.f32 %v2947, %v3171
      %v3173 = vpop.f32.mrb[0].mxu0
      %3174 = vmatprep.mubr.f32.mxu0 %v2155
      %3175 = vmatmul.mubr.f32.gmra.mrb[0].mxu0 %v2123
      %v3176 = vpop.f32.mrb[0].mxu0
      %v3177 = vadd.f32 %v2952, %v3176
      %v3178 = vpop.f32.mrb[0].mxu0
      %3179 = vmatprep.mubr.f32.mxu0 %v2156
      %3180 = vmatmul.mubr.f32.gmra.mrb[0].mxu0 %v2124
      %v3181 = vpop.f32.mrb[0].mxu0
      %v3182 = vadd.f32 %v2957, %v3181
      %v3183 = vpop.f32.mrb[0].mxu0
      %3184 = vmatprep.mubr.f32.mxu0 %v2157
      %3185 = vmatmul.mubr.f32.gmra.mrb[0].mxu0 %v2125
      %v3186 = vpop.f32.mrb[0].mxu0
      %v3187 = vadd.f32 %v2962, %v3186
      %v3188 = vpop.f32.mrb[0].mxu0
      %3189 = vmatprep.mubr.f32.mxu0 %v2158
      %3190 = vmatmul.mubr.f32.gmra.mrb[0].mxu0 %v2126
      %v3191 = vpop.f32.mrb[0].mxu0
      %v3192 = vadd.f32 %v2967, %v3191
      %v3193 = vpop.f32.mrb[0].mxu0
      %3194 = vmatprep.mubr.f32.mxu0 %v2159
      %3195 = vmatmul.mubr.f32.gmra.mrb[0].mxu0 %v2127
      %v3196 = vpop.f32.mrb[0].mxu0
      %v3197 = vadd.f32 %v2972, %v3196
      %v3198 = vpop.f32.mrb[0].mxu0
      %3199 = vmatprep.mubr.f32.mxu0 %v2160
      %3200 = vmatmul.mubr.f32.gmra.mrb[0].mxu0 %v2128
      %v3201 = vpop.f32.mrb[0].mxu0
      %v3202 = vadd.f32 %v2977, %v3201
      %v3203 = vpop.f32.mrb[0].mxu0
      %3204 = vmatprep.mubr.f32.mxu0 %v2161
      %3205 = vmatmul.mubr.f32.gmra.mrb[0].mxu0 %v2129
      %v3206 = vpop.f32.mrb[0].mxu0
      %v3207 = vadd.f32 %v2982, %v3206
      %v3208 = vpop.f32.mrb[0].mxu0
      %3209 = vmatprep.mubr.f32.mxu0 %v2162
      %3210 = vmatmul.mubr.f32.gmra.mrb[0].mxu0 %v2130
      %v3211 = vpop.f32.mrb[0].mxu0
      %v3212 = vadd.f32 %v2987, %v3211
      %v3213 = vpop.f32.mrb[0].mxu0
      %3214 = vmatprep.mubr.f32.mxu0 %v2163
      %3215 = vmatmul.mubr.f32.gmra.mrb[0].mxu0 %v2131
      %v3216 = vpop.f32.mrb[0].mxu0
      %v3217 = vadd.f32 %v2992, %v3216
      %v3218 = vpop.f32.mrb[0].mxu0
      %3219 = vmatprep.mubr.f32.mxu0 %v2164
      %3220 = vmatmul.mubr.f32.gmra.mrb[0].mxu0 %v2132
      %v3221 = vpop.f32.mrb[0].mxu0
      %v3222 = vadd.f32 %v2997, %v3221
      %v3223 = vpop.f32.mrb[0].mxu0
      %3224 = vmatprep.mubr.f32.mxu0 %v2165
      %3225 = vmatmul.mubr.f32.gmra.mrb[0].mxu0 %v2133
      %v3226 = vpop.f32.mrb[0].mxu0
      %v3227 = vadd.f32 %v3002, %v3226
      %v3228 = vpop.f32.mrb[0].mxu0
      %3229 = vmatprep.mubr.f32.mxu0 %v2166
      %3230 = vmatmul.mubr.f32.gmra.mrb[0].mxu0 %v2134
      %v3231 = vpop.f32.mrb[0].mxu0
      %v3232 = vadd.f32 %v3007, %v3231
      %v3233 = vpop.f32.mrb[0].mxu0
      %3234 = vmatprep.mubr.f32.mxu0 %v2167
      %3235 = vmatmul.mubr.f32.gmra.mrb[0].mxu0 %v2135
      %v3236 = vpop.f32.mrb[0].mxu0
      %v3237 = vadd.f32 %v3012, %v3236
      %v3238 = vpop.f32.mrb[0].mxu0
      %3239 = vmatprep.mubr.f32.mxu0 %v2168
      %3240 = vmatmul.mubr.f32.gmra.mrb[0].mxu0 %v2136
      %v3241 = vpop.f32.mrb[0].mxu0
      %v3242 = vadd.f32 %v3017, %v3241
      %v3243 = vpop.f32.mrb[0].mxu0
      %3244 = vdwg.mxu0
      %3245 = vmatprep.subr.mxu0 0.0
      %3246 = vmatpush1.msra.mxu0 %v2329
      %3247 = vmatprep.subr.mxu0 0.0
      %3248 = vmatpush1.msra.mxu0 %v2330
      %3249 = vmatprep.subr.mxu0 0.0
      %3250 = vmatpush1.msra.mxu0 %v2331
      %3251 = vmatprep.subr.mxu0 0.0
      %3252 = vmatpush1.msra.mxu0 %v2332
      %3253 = vmatprep.subr.mxu0 0.0
      %3254 = vmatpush1.msra.mxu0 %v2333
      %3255 = vmatprep.subr.mxu0 0.0
      %3256 = vmatpush1.msra.mxu0 %v2334
      %3257 = vmatprep.subr.mxu0 0.0
      %3258 = vmatpush1.msra.mxu0 %v2335
      %3259 = vmatprep.subr.mxu0 0.0
      %3260 = vmatpush1.msra.mxu0 %v2336
      %3261 = vmatprep.subr.mxu0 0.0
      %3262 = vmatpush1.msra.mxu0 %v2337
      %3263 = vmatprep.subr.mxu0 0.0
      %3264 = vmatpush1.msra.mxu0 %v2338
      %3265 = vmatprep.subr.mxu0 0.0
      %3266 = vmatpush1.msra.mxu0 %v2339
      %3267 = vmatprep.subr.mxu0 0.0
      %3268 = vmatpush1.msra.mxu0 %v2340
      %3269 = vmatprep.subr.mxu0 0.0
      %3270 = vmatpush1.msra.mxu0 %v2341
      %3271 = vmatprep.subr.mxu0 0.0
      %3272 = vmatpush1.msra.mxu0 %v2342
      %3273 = vmatprep.subr.mxu0 0.0
      %3274 = vmatpush1.msra.mxu0 %v2343
      %3275 = vmatprep.subr.mxu0 0.0
      %3276 = vmatpush1.msra.mxu0 %v2344
      %3277 = vmatprep.subr.mxu0 0.0
      %3278 = vmatpush1.msra.mxu0 0.0
      %3279 = vmatprep.subr.mxu0 0.0
      %3280 = vmatpush1.msra.mxu0 0.0
      %3281 = vmatprep.subr.mxu0 0.0
      %3282 = vmatpush1.msra.mxu0 0.0
      %3283 = vmatprep.subr.mxu0 0.0
      %3284 = vmatpush1.msra.mxu0 0.0
      %3285 = vmatprep.subr.mxu0 0.0
      %3286 = vmatpush1.msra.mxu0 0.0
      %3287 = vmatprep.subr.mxu0 0.0
      %3288 = vmatpush1.msra.mxu0 0.0
      %3289 = vmatprep.subr.mxu0 0.0
      %3290 = vmatpush1.msra.mxu0 0.0
      %3291 = vmatprep.subr.mxu0 0.0
      %3292 = vmatpush1.msra.mxu0 0.0
      %3293 = vmatprep.subr.mxu0 0.0
      %3294 = vmatpush1.msra.mxu0 0.0
      %3295 = vmatprep.subr.mxu0 0.0
      %3296 = vmatpush1.msra.mxu0 0.0
      %3297 = vmatprep.subr.mxu0 0.0
      %3298 = vmatpush1.msra.mxu0 0.0
      %3299 = vmatprep.subr.mxu0 0.0
      %3300 = vmatpush1.msra.mxu0 0.0
      %3301 = vmatprep.subr.mxu0 0.0
      %3302 = vmatpush1.msra.mxu0 0.0
      %3303 = vmatprep.subr.mxu0 0.0
      %3304 = vmatpush1.msra.mxu0 0.0
      %3305 = vmatprep.subr.mxu0 0.0
      %3306 = vmatpush1.msra.mxu0 0.0
      %3307 = vmatprep.subr.mxu0 0.0
      %3308 = vmatpush1.msra.mxu0 0.0
      %3309 = vmatprep.mubr.f32.mxu0 0.0
      %3310 = vmatmul.mubr.f32.gmra.mrb[0].mxu0 %v2169
      %v3311 = vpop.f32.mrb[0].mxu0
      %v3312 = vadd.f32 %v3087, %v3311
      %v3313 = vpop.f32.mrb[0].mxu0
      %3314 = vmatprep.mubr.f32.mxu0 0.0
      %3315 = vmatmul.mubr.f32.gmra.mrb[0].mxu0 %v2170
      %v3316 = vpop.f32.mrb[0].mxu0
      %v3317 = vadd.f32 %v3092, %v3316
      %v3318 = vpop.f32.mrb[0].mxu0
      %3319 = vmatprep.mubr.f32.mxu0 0.0
      %3320 = vmatmul.mubr.f32.gmra.mrb[0].mxu0 %v2171
      %v3321 = vpop.f32.mrb[0].mxu0
      %v3322 = vadd.f32 %v3097, %v3321
      %v3323 = vpop.f32.mrb[0].mxu0
      %3324 = vmatprep.mubr.f32.mxu0 0.0
      %3325 = vmatmul.mubr.f32.gmra.mrb[0].mxu0 %v2172
      %v3326 = vpop.f32.mrb[0].mxu0
      %v3327 = vadd.f32 %v3102, %v3326
      %v3328 = vpop.f32.mrb[0].mxu0
      %3329 = vmatprep.mubr.f32.mxu0 0.0
      %3330 = vmatmul.mubr.f32.gmra.mrb[0].mxu0 %v2173
      %v3331 = vpop.f32.mrb[0].mxu0
      %v3332 = vadd.f32 %v3107, %v3331
      %v3333 = vpop.f32.mrb[0].mxu0
      %3334 = vmatprep.mubr.f32.mxu0 0.0
      %3335 = vmatmul.mubr.f32.gmra.mrb[0].mxu0 %v2174
      %v3336 = vpop.f32.mrb[0].mxu0
      %v3337 = vadd.f32 %v3112, %v3336
      %v3338 = vpop.f32.mrb[0].mxu0
      %3339 = vmatprep.mubr.f32.mxu0 0.0
      %3340 = vmatmul.mubr.f32.gmra.mrb[0].mxu0 %v2175
      %v3341 = vpop.f32.mrb[0].mxu0
      %v3342 = vadd.f32 %v3117, %v3341
      %v3343 = vpop.f32.mrb[0].mxu0
      %3344 = vmatprep.mubr.f32.mxu0 0.0
      %3345 = vmatmul.mubr.f32.gmra.mrb[0].mxu0 %v2176
      %v3346 = vpop.f32.mrb[0].mxu0
      %v3347 = vadd.f32 %v3122, %v3346
      %v3348 = vpop.f32.mrb[0].mxu0
      %3349 = vmatprep.mubr.f32.mxu0 0.0
      %3350 = vmatmul.mubr.f32.gmra.mrb[0].mxu0 %v2177
      %v3351 = vpop.f32.mrb[0].mxu0
      %v3352 = vadd.f32 %v3127, %v3351
      %v3353 = vpop.f32.mrb[0].mxu0
      %3354 = vmatprep.mubr.f32.mxu0 0.0
      %3355 = vmatmul.mubr.f32.gmra.mrb[0].mxu0 %v2178
      %v3356 = vpop.f32.mrb[0].mxu0
      %v3357 = vadd.f32 %v3132, %v3356
      %v3358 = vpop.f32.mrb[0].mxu0
      %3359 = vmatprep.mubr.f32.mxu0 0.0
      %3360 = vmatmul.mubr.f32.gmra.mrb[0].mxu0 %v2179
      %v3361 = vpop.f32.mrb[0].mxu0
      %v3362 = vadd.f32 %v3137, %v3361
      %v3363 = vpop.f32.mrb[0].mxu0
      %3364 = vmatprep.mubr.f32.mxu0 0.0
      %3365 = vmatmul.mubr.f32.gmra.mrb[0].mxu0 %v2180
      %v3366 = vpop.f32.mrb[0].mxu0
      %v3367 = vadd.f32 %v3142, %v3366
      %v3368 = vpop.f32.mrb[0].mxu0
      %3369 = vmatprep.mubr.f32.mxu0 0.0
      %3370 = vmatmul.mubr.f32.gmra.mrb[0].mxu0 %v2181
      %v3371 = vpop.f32.mrb[0].mxu0
      %v3372 = vadd.f32 %v3147, %v3371
      %v3373 = vpop.f32.mrb[0].mxu0
      %3374 = vmatprep.mubr.f32.mxu0 0.0
      %3375 = vmatmul.mubr.f32.gmra.mrb[0].mxu0 %v2182
      %v3376 = vpop.f32.mrb[0].mxu0
      %v3377 = vadd.f32 %v3152, %v3376
      %v3378 = vpop.f32.mrb[0].mxu0
      %3379 = vmatprep.mubr.f32.mxu0 0.0
      %3380 = vmatmul.mubr.f32.gmra.mrb[0].mxu0 %v2183
      %v3381 = vpop.f32.mrb[0].mxu0
      %v3382 = vadd.f32 %v3157, %v3381
      %v3383 = vpop.f32.mrb[0].mxu0
      %3384 = vmatprep.mubr.f32.mxu0 0.0
      %3385 = vmatmul.mubr.f32.gmra.mrb[0].mxu0 %v2184
      %v3386 = vpop.f32.mrb[0].mxu0
      %v3387 = vadd.f32 %v3162, %v3386
      %v3388 = vpop.f32.mrb[0].mxu0
      %3389 = vmatprep.mubr.f32.mxu0 0.0
      %3390 = vmatmul.mubr.f32.gmra.mrb[0].mxu0 %v2185
      %v3391 = vpop.f32.mrb[0].mxu0
      %v3392 = vadd.f32 %v3167, %v3391
      %v3393 = vpop.f32.mrb[0].mxu0
      %3394 = vmatprep.mubr.f32.mxu0 0.0
      %3395 = vmatmul.mubr.f32.gmra.mrb[0].mxu0 %v2186
      %v3396 = vpop.f32.mrb[0].mxu0
      %v3397 = vadd.f32 %v3172, %v3396
      %v3398 = vpop.f32.mrb[0].mxu0
      %3399 = vmatprep.mubr.f32.mxu0 0.0
      %3400 = vmatmul.mubr.f32.gmra.mrb[0].mxu0 %v2187
      %v3401 = vpop.f32.mrb[0].mxu0
      %v3402 = vadd.f32 %v3177, %v3401
      %v3403 = vpop.f32.mrb[0].mxu0
      %3404 = vmatprep.mubr.f32.mxu0 0.0
      %3405 = vmatmul.mubr.f32.gmra.mrb[0].mxu0 %v2188
      %v3406 = vpop.f32.mrb[0].mxu0
      %v3407 = vadd.f32 %v3182, %v3406
      %v3408 = vpop.f32.mrb[0].mxu0
      %3409 = vmatprep.mubr.f32.mxu0 0.0
      %3410 = vmatmul.mubr.f32.gmra.mrb[0].mxu0 %v2189
      %v3411 = vpop.f32.mrb[0].mxu0
      %v3412 = vadd.f32 %v3187, %v3411
      %v3413 = vpop.f32.mrb[0].mxu0
      %3414 = vmatprep.mubr.f32.mxu0 0.0
      %3415 = vmatmul.mubr.f32.gmra.mrb[0].mxu0 %v2190
      %v3416 = vpop.f32.mrb[0].mxu0
      %v3417 = vadd.f32 %v3192, %v3416
      %v3418 = vpop.f32.mrb[0].mxu0
      %3419 = vmatprep.mubr.f32.mxu0 0.0
      %3420 = vmatmul.mubr.f32.gmra.mrb[0].mxu0 %v2191
      %v3421 = vpop.f32.mrb[0].mxu0
      %v3422 = vadd.f32 %v3197, %v3421
      %v3423 = vpop.f32.mrb[0].mxu0
      %3424 = vmatprep.mubr.f32.mxu0 0.0
      %3425 = vmatmul.mubr.f32.gmra.mrb[0].mxu0 %v2192
      %v3426 = vpop.f32.mrb[0].mxu0
      %v3427 = vadd.f32 %v3202, %v3426
      %v3428 = vpop.f32.mrb[0].mxu0
      %3429 = vmatprep.mubr.f32.mxu0 0.0
      %3430 = vmatmul.mubr.f32.gmra.mrb[0].mxu0 %v2193
      %v3431 = vpop.f32.mrb[0].mxu0
      %v3432 = vadd.f32 %v3207, %v3431
      %v3433 = vpop.f32.mrb[0].mxu0
      %3434 = vmatprep.mubr.f32.mxu0 0.0
      %3435 = vmatmul.mubr.f32.gmra.mrb[0].mxu0 %v2194
      %v3436 = vpop.f32.mrb[0].mxu0
      %v3437 = vadd.f32 %v3212, %v3436
      %v3438 = vpop.f32.mrb[0].mxu0
      %3439 = vmatprep.mubr.f32.mxu0 0.0
      %3440 = vmatmul.mubr.f32.gmra.mrb[0].mxu0 %v2195
      %v3441 = vpop.f32.mrb[0].mxu0
      %v3442 = vadd.f32 %v3217, %v3441
      %v3443 = vpop.f32.mrb[0].mxu0
      %3444 = vmatprep.mubr.f32.mxu0 0.0
      %3445 = vmatmul.mubr.f32.gmra.mrb[0].mxu0 %v2196
      %v3446 = vpop.f32.mrb[0].mxu0
      %v3447 = vadd.f32 %v3222, %v3446
      %v3448 = vpop.f32.mrb[0].mxu0
      %3449 = vmatprep.mubr.f32.mxu0 0.0
      %3450 = vmatmul.mubr.f32.gmra.mrb[0].mxu0 %v2197
      %v3451 = vpop.f32.mrb[0].mxu0
      %v3452 = vadd.f32 %v3227, %v3451
      %v3453 = vpop.f32.mrb[0].mxu0
      %3454 = vmatprep.mubr.f32.mxu0 0.0
      %3455 = vmatmul.mubr.f32.gmra.mrb[0].mxu0 %v2198
      %v3456 = vpop.f32.mrb[0].mxu0
      %v3457 = vadd.f32 %v3232, %v3456
      %v3458 = vpop.f32.mrb[0].mxu0
      %3459 = vmatprep.mubr.f32.mxu0 0.0
      %3460 = vmatmul.mubr.f32.gmra.mrb[0].mxu0 %v2199
      %v3461 = vpop.f32.mrb[0].mxu0
      %v3462 = vadd.f32 %v3237, %v3461
      %v3463 = vpop.f32.mrb[0].mxu0
      %3464 = vmatprep.mubr.f32.mxu0 0.0
      %3465 = vmatmul.mubr.f32.gmra.mrb[0].mxu0 %v2200
      %v3466 = vpop.f32.mrb[0].mxu0
      %v3467 = vadd.f32 %v3242, %v3466
      %v3468 = vpop.f32.mrb[0].mxu0
      %3469 = vdwg.mxu0
      %v3470 = vmax.f32 %v3312, 0.0
      %v3471 = vmax.f32 %v3317, 0.0
      %v3472 = vmax.f32 %v3322, 0.0
      %v3473 = vmax.f32 %v3327, 0.0
      %v3474 = vmax.f32 %v3332, 0.0
      %v3475 = vmax.f32 %v3337, 0.0
      %v3476 = vmax.f32 %v3342, 0.0
      %v3477 = vmax.f32 %v3347, 0.0
      %v3478 = vmax.f32 %v3352, 0.0
      %v3479 = vmax.f32 %v3357, 0.0
      %v3480 = vmax.f32 %v3362, 0.0
      %v3481 = vmax.f32 %v3367, 0.0
      %v3482 = vmax.f32 %v3372, 0.0
      %v3483 = vmax.f32 %v3377, 0.0
      %v3484 = vmax.f32 %v3382, 0.0
      %v3485 = vmax.f32 %v3387, 0.0
      %v3486 = vmax.f32 %v3392, 0.0
      %v3487 = vmax.f32 %v3397, 0.0
      %v3488 = vmax.f32 %v3402, 0.0
      %v3489 = vmax.f32 %v3407, 0.0
      %v3490 = vmax.f32 %v3412, 0.0
      %v3491 = vmax.f32 %v3417, 0.0
      %v3492 = vmax.f32 %v3422, 0.0
      %v3493 = vmax.f32 %v3427, 0.0
      %v3494 = vmax.f32 %v3432, 0.0
      %v3495 = vmax.f32 %v3437, 0.0
      %v3496 = vmax.f32 %v3442, 0.0
      %v3497 = vmax.f32 %v3447, 0.0
      %v3498 = vmax.f32 %v3452, 0.0
      %v3499 = vmax.f32 %v3457, 0.0
      %v3500 = vmax.f32 %v3462, 0.0
      %v3501 = vmax.f32 %v3467, 0.0
      %v3534 = vcombine.high %v3470, %v3470
      %v3536 = vunpack.c.l.s4 1983009808
      %v3537 = vunpack.c.0.s8 %v3536
      %v3538 = vlaneseq
      %v3539 = vshrl.u32 %v3538, 7
      %v3540 = vsub.s32 %v3537, %v3539
      %v3541 = vrot.slane %v3470, %v3540
      %v3543 = vunpack.c.l.s4 1983009808
      %v3544 = vunpack.c.0.s8 %v3543
      %v3545 = vlaneseq
      %v3546 = vshrl.u32 %v3545, 7
      %v3547 = vsub.s32 %v3544, %v3546
      %v3548 = vrot.slane %v3534, %v3547
      %v3549 = vcombine.high %v3541, %v3541
      %v3550 = vcombine.high %v3548, %v3548
      %v3551 = vcombine.high %v3471, %v3471
      %v3553 = vunpack.c.l.s4 1983009808
      %v3554 = vunpack.c.0.s8 %v3553
      %v3555 = vlaneseq
      %v3556 = vshrl.u32 %v3555, 7
      %v3557 = vsub.s32 %v3554, %v3556
      %v3558 = vrot.slane %v3471, %v3557
      %v3560 = vunpack.c.l.s4 1983009808
      %v3561 = vunpack.c.0.s8 %v3560
      %v3562 = vlaneseq
      %v3563 = vshrl.u32 %v3562, 7
      %v3564 = vsub.s32 %v3561, %v3563
      %v3565 = vrot.slane %v3551, %v3564
      %v3566 = vcombine.high %v3558, %v3558
      %v3567 = vcombine.high %v3565, %v3565
      %v3568 = vcombine.high %v3472, %v3472
      %v3570 = vunpack.c.l.s4 1983009808
      %v3571 = vunpack.c.0.s8 %v3570
      %v3572 = vlaneseq
      %v3573 = vshrl.u32 %v3572, 7
      %v3574 = vsub.s32 %v3571, %v3573
      %v3575 = vrot.slane %v3472, %v3574
      %v3577 = vunpack.c.l.s4 1983009808
      %v3578 = vunpack.c.0.s8 %v3577
      %v3579 = vlaneseq
      %v3580 = vshrl.u32 %v3579, 7
      %v3581 = vsub.s32 %v3578, %v3580
      %v3582 = vrot.slane %v3568, %v3581
      %v3583 = vcombine.high %v3575, %v3575
      %v3584 = vcombine.high %v3582, %v3582
      %v3585 = vcombine.high %v3473, %v3473
      %v3587 = vunpack.c.l.s4 1983009808
      %v3588 = vunpack.c.0.s8 %v3587
      %v3589 = vlaneseq
      %v3590 = vshrl.u32 %v3589, 7
      %v3591 = vsub.s32 %v3588, %v3590
      %v3592 = vrot.slane %v3473, %v3591
      %v3594 = vunpack.c.l.s4 1983009808
      %v3595 = vunpack.c.0.s8 %v3594
      %v3596 = vlaneseq
      %v3597 = vshrl.u32 %v3596, 7
      %v3598 = vsub.s32 %v3595, %v3597
      %v3599 = vrot.slane %v3585, %v3598
      %v3600 = vcombine.high %v3592, %v3592
      %v3601 = vcombine.high %v3599, %v3599
      %v3602 = vcombine.high %v3474, %v3474
      %v3604 = vunpack.c.l.s4 1983009808
      %v3605 = vunpack.c.0.s8 %v3604
      %v3606 = vlaneseq
      %v3607 = vshrl.u32 %v3606, 7
      %v3608 = vsub.s32 %v3605, %v3607
      %v3609 = vrot.slane %v3474, %v3608
      %v3611 = vunpack.c.l.s4 1983009808
      %v3612 = vunpack.c.0.s8 %v3611
      %v3613 = vlaneseq
      %v3614 = vshrl.u32 %v3613, 7
      %v3615 = vsub.s32 %v3612, %v3614
      %v3616 = vrot.slane %v3602, %v3615
      %v3617 = vcombine.high %v3609, %v3609
      %v3618 = vcombine.high %v3616, %v3616
      %v3619 = vcombine.high %v3475, %v3475
      %v3621 = vunpack.c.l.s4 1983009808
      %v3622 = vunpack.c.0.s8 %v3621
      %v3623 = vlaneseq
      %v3624 = vshrl.u32 %v3623, 7
      %v3625 = vsub.s32 %v3622, %v3624
      %v3626 = vrot.slane %v3475, %v3625
      %v3628 = vunpack.c.l.s4 1983009808
      %v3629 = vunpack.c.0.s8 %v3628
      %v3630 = vlaneseq
      %v3631 = vshrl.u32 %v3630, 7
      %v3632 = vsub.s32 %v3629, %v3631
      %v3633 = vrot.slane %v3619, %v3632
      %v3634 = vcombine.high %v3626, %v3626
      %v3635 = vcombine.high %v3633, %v3633
      %v3636 = vcombine.high %v3476, %v3476
      %v3638 = vunpack.c.l.s4 1983009808
      %v3639 = vunpack.c.0.s8 %v3638
      %v3640 = vlaneseq
      %v3641 = vshrl.u32 %v3640, 7
      %v3642 = vsub.s32 %v3639, %v3641
      %v3643 = vrot.slane %v3476, %v3642
      %v3645 = vunpack.c.l.s4 1983009808
      %v3646 = vunpack.c.0.s8 %v3645
      %v3647 = vlaneseq
      %v3648 = vshrl.u32 %v3647, 7
      %v3649 = vsub.s32 %v3646, %v3648
      %v3650 = vrot.slane %v3636, %v3649
      %v3651 = vcombine.high %v3643, %v3643
      %v3652 = vcombine.high %v3650, %v3650
      %v3653 = vcombine.high %v3477, %v3477
      %v3655 = vunpack.c.l.s4 1983009808
      %v3656 = vunpack.c.0.s8 %v3655
      %v3657 = vlaneseq
      %v3658 = vshrl.u32 %v3657, 7
      %v3659 = vsub.s32 %v3656, %v3658
      %v3660 = vrot.slane %v3477, %v3659
      %v3662 = vunpack.c.l.s4 1983009808
      %v3663 = vunpack.c.0.s8 %v3662
      %v3664 = vlaneseq
      %v3665 = vshrl.u32 %v3664, 7
      %v3666 = vsub.s32 %v3663, %v3665
      %v3667 = vrot.slane %v3653, %v3666
      %v3668 = vcombine.high %v3660, %v3660
      %v3669 = vcombine.high %v3667, %v3667
      %v3670 = vcombine.high %v3478, %v3478
      %v3672 = vunpack.c.l.s4 1983009808
      %v3673 = vunpack.c.0.s8 %v3672
      %v3674 = vlaneseq
      %v3675 = vshrl.u32 %v3674, 7
      %v3676 = vsub.s32 %v3673, %v3675
      %v3677 = vrot.slane %v3478, %v3676
      %v3679 = vunpack.c.l.s4 1983009808
      %v3680 = vunpack.c.0.s8 %v3679
      %v3681 = vlaneseq
      %v3682 = vshrl.u32 %v3681, 7
      %v3683 = vsub.s32 %v3680, %v3682
      %v3684 = vrot.slane %v3670, %v3683
      %v3685 = vcombine.high %v3677, %v3677
      %v3686 = vcombine.high %v3684, %v3684
      %v3687 = vcombine.high %v3479, %v3479
      %v3689 = vunpack.c.l.s4 1983009808
      %v3690 = vunpack.c.0.s8 %v3689
      %v3691 = vlaneseq
      %v3692 = vshrl.u32 %v3691, 7
      %v3693 = vsub.s32 %v3690, %v3692
      %v3694 = vrot.slane %v3479, %v3693
      %v3696 = vunpack.c.l.s4 1983009808
      %v3697 = vunpack.c.0.s8 %v3696
      %v3698 = vlaneseq
      %v3699 = vshrl.u32 %v3698, 7
      %v3700 = vsub.s32 %v3697, %v3699
      %v3701 = vrot.slane %v3687, %v3700
      %v3702 = vcombine.high %v3694, %v3694
      %v3703 = vcombine.high %v3701, %v3701
      %v3704 = vcombine.high %v3480, %v3480
      %v3706 = vunpack.c.l.s4 1983009808
      %v3707 = vunpack.c.0.s8 %v3706
      %v3708 = vlaneseq
      %v3709 = vshrl.u32 %v3708, 7
      %v3710 = vsub.s32 %v3707, %v3709
      %v3711 = vrot.slane %v3480, %v3710
      %v3713 = vunpack.c.l.s4 1983009808
      %v3714 = vunpack.c.0.s8 %v3713
      %v3715 = vlaneseq
      %v3716 = vshrl.u32 %v3715, 7
      %v3717 = vsub.s32 %v3714, %v3716
      %v3718 = vrot.slane %v3704, %v3717
      %v3719 = vcombine.high %v3711, %v3711
      %v3720 = vcombine.high %v3718, %v3718
      %v3721 = vcombine.high %v3481, %v3481
      %v3723 = vunpack.c.l.s4 1983009808
      %v3724 = vunpack.c.0.s8 %v3723
      %v3725 = vlaneseq
      %v3726 = vshrl.u32 %v3725, 7
      %v3727 = vsub.s32 %v3724, %v3726
      %v3728 = vrot.slane %v3481, %v3727
      %v3730 = vunpack.c.l.s4 1983009808
      %v3731 = vunpack.c.0.s8 %v3730
      %v3732 = vlaneseq
      %v3733 = vshrl.u32 %v3732, 7
      %v3734 = vsub.s32 %v3731, %v3733
      %v3735 = vrot.slane %v3721, %v3734
      %v3736 = vcombine.high %v3728, %v3728
      %v3737 = vcombine.high %v3735, %v3735
      %v3738 = vcombine.high %v3482, %v3482
      %v3740 = vunpack.c.l.s4 1983009808
      %v3741 = vunpack.c.0.s8 %v3740
      %v3742 = vlaneseq
      %v3743 = vshrl.u32 %v3742, 7
      %v3744 = vsub.s32 %v3741, %v3743
      %v3745 = vrot.slane %v3482, %v3744
      %v3747 = vunpack.c.l.s4 1983009808
      %v3748 = vunpack.c.0.s8 %v3747
      %v3749 = vlaneseq
      %v3750 = vshrl.u32 %v3749, 7
      %v3751 = vsub.s32 %v3748, %v3750
      %v3752 = vrot.slane %v3738, %v3751
      %v3753 = vcombine.high %v3745, %v3745
      %v3754 = vcombine.high %v3752, %v3752
      %v3755 = vcombine.high %v3483, %v3483
      %v3757 = vunpack.c.l.s4 1983009808
      %v3758 = vunpack.c.0.s8 %v3757
      %v3759 = vlaneseq
      %v3760 = vshrl.u32 %v3759, 7
      %v3761 = vsub.s32 %v3758, %v3760
      %v3762 = vrot.slane %v3483, %v3761
      %v3764 = vunpack.c.l.s4 1983009808
      %v3765 = vunpack.c.0.s8 %v3764
      %v3766 = vlaneseq
      %v3767 = vshrl.u32 %v3766, 7
      %v3768 = vsub.s32 %v3765, %v3767
      %v3769 = vrot.slane %v3755, %v3768
      %v3770 = vcombine.high %v3762, %v3762
      %v3771 = vcombine.high %v3769, %v3769
      %v3772 = vcombine.high %v3484, %v3484
      %v3774 = vunpack.c.l.s4 1983009808
      %v3775 = vunpack.c.0.s8 %v3774
      %v3776 = vlaneseq
      %v3777 = vshrl.u32 %v3776, 7
      %v3778 = vsub.s32 %v3775, %v3777
      %v3779 = vrot.slane %v3484, %v3778
      %v3781 = vunpack.c.l.s4 1983009808
      %v3782 = vunpack.c.0.s8 %v3781
      %v3783 = vlaneseq
      %v3784 = vshrl.u32 %v3783, 7
      %v3785 = vsub.s32 %v3782, %v3784
      %v3786 = vrot.slane %v3772, %v3785
      %v3787 = vcombine.high %v3779, %v3779
      %v3788 = vcombine.high %v3786, %v3786
      %v3789 = vcombine.high %v3485, %v3485
      %v3791 = vunpack.c.l.s4 1983009808
      %v3792 = vunpack.c.0.s8 %v3791
      %v3793 = vlaneseq
      %v3794 = vshrl.u32 %v3793, 7
      %v3795 = vsub.s32 %v3792, %v3794
      %v3796 = vrot.slane %v3485, %v3795
      %v3798 = vunpack.c.l.s4 1983009808
      %v3799 = vunpack.c.0.s8 %v3798
      %v3800 = vlaneseq
      %v3801 = vshrl.u32 %v3800, 7
      %v3802 = vsub.s32 %v3799, %v3801
      %v3803 = vrot.slane %v3789, %v3802
      %v3804 = vcombine.high %v3796, %v3796
      %v3805 = vcombine.high %v3803, %v3803
      %v3806 = vcombine.high %v3486, %v3486
      %v3808 = vunpack.c.l.s4 1983009808
      %v3809 = vunpack.c.0.s8 %v3808
      %v3810 = vlaneseq
      %v3811 = vshrl.u32 %v3810, 7
      %v3812 = vsub.s32 %v3809, %v3811
      %v3813 = vrot.slane %v3486, %v3812
      %v3815 = vunpack.c.l.s4 1983009808
      %v3816 = vunpack.c.0.s8 %v3815
      %v3817 = vlaneseq
      %v3818 = vshrl.u32 %v3817, 7
      %v3819 = vsub.s32 %v3816, %v3818
      %v3820 = vrot.slane %v3806, %v3819
      %v3821 = vcombine.high %v3813, %v3813
      %v3822 = vcombine.high %v3820, %v3820
      %v3823 = vcombine.high %v3487, %v3487
      %v3825 = vunpack.c.l.s4 1983009808
      %v3826 = vunpack.c.0.s8 %v3825
      %v3827 = vlaneseq
      %v3828 = vshrl.u32 %v3827, 7
      %v3829 = vsub.s32 %v3826, %v3828
      %v3830 = vrot.slane %v3487, %v3829
      %v3832 = vunpack.c.l.s4 1983009808
      %v3833 = vunpack.c.0.s8 %v3832
      %v3834 = vlaneseq
      %v3835 = vshrl.u32 %v3834, 7
      %v3836 = vsub.s32 %v3833, %v3835
      %v3837 = vrot.slane %v3823, %v3836
      %v3838 = vcombine.high %v3830, %v3830
      %v3839 = vcombine.high %v3837, %v3837
      %v3840 = vcombine.high %v3488, %v3488
      %v3842 = vunpack.c.l.s4 1983009808
      %v3843 = vunpack.c.0.s8 %v3842
      %v3844 = vlaneseq
      %v3845 = vshrl.u32 %v3844, 7
      %v3846 = vsub.s32 %v3843, %v3845
      %v3847 = vrot.slane %v3488, %v3846
      %v3849 = vunpack.c.l.s4 1983009808
      %v3850 = vunpack.c.0.s8 %v3849
      %v3851 = vlaneseq
      %v3852 = vshrl.u32 %v3851, 7
      %v3853 = vsub.s32 %v3850, %v3852
      %v3854 = vrot.slane %v3840, %v3853
      %v3855 = vcombine.high %v3847, %v3847
      %v3856 = vcombine.high %v3854, %v3854
      %v3857 = vcombine.high %v3489, %v3489
      %v3859 = vunpack.c.l.s4 1983009808
      %v3860 = vunpack.c.0.s8 %v3859
      %v3861 = vlaneseq
      %v3862 = vshrl.u32 %v3861, 7
      %v3863 = vsub.s32 %v3860, %v3862
      %v3864 = vrot.slane %v3489, %v3863
      %v3866 = vunpack.c.l.s4 1983009808
      %v3867 = vunpack.c.0.s8 %v3866
      %v3868 = vlaneseq
      %v3869 = vshrl.u32 %v3868, 7
      %v3870 = vsub.s32 %v3867, %v3869
      %v3871 = vrot.slane %v3857, %v3870
      %v3872 = vcombine.high %v3864, %v3864
      %v3873 = vcombine.high %v3871, %v3871
      %v3874 = vcombine.high %v3490, %v3490
      %v3876 = vunpack.c.l.s4 1983009808
      %v3877 = vunpack.c.0.s8 %v3876
      %v3878 = vlaneseq
      %v3879 = vshrl.u32 %v3878, 7
      %v3880 = vsub.s32 %v3877, %v3879
      %v3881 = vrot.slane %v3490, %v3880
      %v3883 = vunpack.c.l.s4 1983009808
      %v3884 = vunpack.c.0.s8 %v3883
      %v3885 = vlaneseq
      %v3886 = vshrl.u32 %v3885, 7
      %v3887 = vsub.s32 %v3884, %v3886
      %v3888 = vrot.slane %v3874, %v3887
      %v3889 = vcombine.high %v3881, %v3881
      %v3890 = vcombine.high %v3888, %v3888
      %v3891 = vcombine.high %v3491, %v3491
      %v3893 = vunpack.c.l.s4 1983009808
      %v3894 = vunpack.c.0.s8 %v3893
      %v3895 = vlaneseq
      %v3896 = vshrl.u32 %v3895, 7
      %v3897 = vsub.s32 %v3894, %v3896
      %v3898 = vrot.slane %v3491, %v3897
      %v3900 = vunpack.c.l.s4 1983009808
      %v3901 = vunpack.c.0.s8 %v3900
      %v3902 = vlaneseq
      %v3903 = vshrl.u32 %v3902, 7
      %v3904 = vsub.s32 %v3901, %v3903
      %v3905 = vrot.slane %v3891, %v3904
      %v3906 = vcombine.high %v3898, %v3898
      %v3907 = vcombine.high %v3905, %v3905
      %v3908 = vcombine.high %v3492, %v3492
      %v3910 = vunpack.c.l.s4 1983009808
      %v3911 = vunpack.c.0.s8 %v3910
      %v3912 = vlaneseq
      %v3913 = vshrl.u32 %v3912, 7
      %v3914 = vsub.s32 %v3911, %v3913
      %v3915 = vrot.slane %v3492, %v3914
      %v3917 = vunpack.c.l.s4 1983009808
      %v3918 = vunpack.c.0.s8 %v3917
      %v3919 = vlaneseq
      %v3920 = vshrl.u32 %v3919, 7
      %v3921 = vsub.s32 %v3918, %v3920
      %v3922 = vrot.slane %v3908, %v3921
      %v3923 = vcombine.high %v3915, %v3915
      %v3924 = vcombine.high %v3922, %v3922
      %v3925 = vcombine.high %v3493, %v3493
      %v3927 = vunpack.c.l.s4 1983009808
      %v3928 = vunpack.c.0.s8 %v3927
      %v3929 = vlaneseq
      %v3930 = vshrl.u32 %v3929, 7
      %v3931 = vsub.s32 %v3928, %v3930
      %v3932 = vrot.slane %v3493, %v3931
      %v3934 = vunpack.c.l.s4 1983009808
      %v3935 = vunpack.c.0.s8 %v3934
      %v3936 = vlaneseq
      %v3937 = vshrl.u32 %v3936, 7
      %v3938 = vsub.s32 %v3935, %v3937
      %v3939 = vrot.slane %v3925, %v3938
      %v3940 = vcombine.high %v3932, %v3932
      %v3941 = vcombine.high %v3939, %v3939
      %v3942 = vcombine.high %v3494, %v3494
      %v3944 = vunpack.c.l.s4 1983009808
      %v3945 = vunpack.c.0.s8 %v3944
      %v3946 = vlaneseq
      %v3947 = vshrl.u32 %v3946, 7
      %v3948 = vsub.s32 %v3945, %v3947
      %v3949 = vrot.slane %v3494, %v3948
      %v3951 = vunpack.c.l.s4 1983009808
      %v3952 = vunpack.c.0.s8 %v3951
      %v3953 = vlaneseq
      %v3954 = vshrl.u32 %v3953, 7
      %v3955 = vsub.s32 %v3952, %v3954
      %v3956 = vrot.slane %v3942, %v3955
      %v3957 = vcombine.high %v3949, %v3949
      %v3958 = vcombine.high %v3956, %v3956
      %v3959 = vcombine.high %v3495, %v3495
      %v3961 = vunpack.c.l.s4 1983009808
      %v3962 = vunpack.c.0.s8 %v3961
      %v3963 = vlaneseq
      %v3964 = vshrl.u32 %v3963, 7
      %v3965 = vsub.s32 %v3962, %v3964
      %v3966 = vrot.slane %v3495, %v3965
      %v3968 = vunpack.c.l.s4 1983009808
      %v3969 = vunpack.c.0.s8 %v3968
      %v3970 = vlaneseq
      %v3971 = vshrl.u32 %v3970, 7
      %v3972 = vsub.s32 %v3969, %v3971
      %v3973 = vrot.slane %v3959, %v3972
      %v3974 = vcombine.high %v3966, %v3966
      %v3975 = vcombine.high %v3973, %v3973
      %v3976 = vcombine.high %v3496, %v3496
      %v3978 = vunpack.c.l.s4 1983009808
      %v3979 = vunpack.c.0.s8 %v3978
      %v3980 = vlaneseq
      %v3981 = vshrl.u32 %v3980, 7
      %v3982 = vsub.s32 %v3979, %v3981
      %v3983 = vrot.slane %v3496, %v3982
      %v3985 = vunpack.c.l.s4 1983009808
      %v3986 = vunpack.c.0.s8 %v3985
      %v3987 = vlaneseq
      %v3988 = vshrl.u32 %v3987, 7
      %v3989 = vsub.s32 %v3986, %v3988
      %v3990 = vrot.slane %v3976, %v3989
      %v3991 = vcombine.high %v3983, %v3983
      %v3992 = vcombine.high %v3990, %v3990
      %v3993 = vcombine.high %v3497, %v3497
      %v3995 = vunpack.c.l.s4 1983009808
      %v3996 = vunpack.c.0.s8 %v3995
      %v3997 = vlaneseq
      %v3998 = vshrl.u32 %v3997, 7
      %v3999 = vsub.s32 %v3996, %v3998
      %v4000 = vrot.slane %v3497, %v3999
      %v4002 = vunpack.c.l.s4 1983009808
      %v4003 = vunpack.c.0.s8 %v4002
      %v4004 = vlaneseq
      %v4005 = vshrl.u32 %v4004, 7
      %v4006 = vsub.s32 %v4003, %v4005
      %v4007 = vrot.slane %v3993, %v4006
      %v4008 = vcombine.high %v4000, %v4000
      %v4009 = vcombine.high %v4007, %v4007
      %v4010 = vcombine.high %v3498, %v3498
      %v4012 = vunpack.c.l.s4 1983009808
      %v4013 = vunpack.c.0.s8 %v4012
      %v4014 = vlaneseq
      %v4015 = vshrl.u32 %v4014, 7
      %v4016 = vsub.s32 %v4013, %v4015
      %v4017 = vrot.slane %v3498, %v4016
      %v4019 = vunpack.c.l.s4 1983009808
      %v4020 = vunpack.c.0.s8 %v4019
      %v4021 = vlaneseq
      %v4022 = vshrl.u32 %v4021, 7
      %v4023 = vsub.s32 %v4020, %v4022
      %v4024 = vrot.slane %v4010, %v4023
      %v4025 = vcombine.high %v4017, %v4017
      %v4026 = vcombine.high %v4024, %v4024
      %v4027 = vcombine.high %v3499, %v3499
      %v4029 = vunpack.c.l.s4 1983009808
      %v4030 = vunpack.c.0.s8 %v4029
      %v4031 = vlaneseq
      %v4032 = vshrl.u32 %v4031, 7
      %v4033 = vsub.s32 %v4030, %v4032
      %v4034 = vrot.slane %v3499, %v4033
      %v4036 = vunpack.c.l.s4 1983009808
      %v4037 = vunpack.c.0.s8 %v4036
      %v4038 = vlaneseq
      %v4039 = vshrl.u32 %v4038, 7
      %v4040 = vsub.s32 %v4037, %v4039
      %v4041 = vrot.slane %v4027, %v4040
      %v4042 = vcombine.high %v4034, %v4034
      %v4043 = vcombine.high %v4041, %v4041
      %v4044 = vcombine.high %v3500, %v3500
      %v4046 = vunpack.c.l.s4 1983009808
      %v4047 = vunpack.c.0.s8 %v4046
      %v4048 = vlaneseq
      %v4049 = vshrl.u32 %v4048, 7
      %v4050 = vsub.s32 %v4047, %v4049
      %v4051 = vrot.slane %v3500, %v4050
      %v4053 = vunpack.c.l.s4 1983009808
      %v4054 = vunpack.c.0.s8 %v4053
      %v4055 = vlaneseq
      %v4056 = vshrl.u32 %v4055, 7
      %v4057 = vsub.s32 %v4054, %v4056
      %v4058 = vrot.slane %v4044, %v4057
      %v4059 = vcombine.high %v4051, %v4051
      %v4060 = vcombine.high %v4058, %v4058
      %v4061 = vcombine.high %v3501, %v3501
      %v4063 = vunpack.c.l.s4 1983009808
      %v4064 = vunpack.c.0.s8 %v4063
      %v4065 = vlaneseq
      %v4066 = vshrl.u32 %v4065, 7
      %v4067 = vsub.s32 %v4064, %v4066
      %v4068 = vrot.slane %v3501, %v4067
      %v4070 = vunpack.c.l.s4 1983009808
      %v4071 = vunpack.c.0.s8 %v4070
      %v4072 = vlaneseq
      %v4073 = vshrl.u32 %v4072, 7
      %v4074 = vsub.s32 %v4071, %v4073
      %v4075 = vrot.slane %v4061, %v4074
      %v4076 = vcombine.high %v4068, %v4068
      %v4077 = vcombine.high %v4075, %v4075
      %v4206 = vrot.slane %v3541, 7
      %v4207 = vrot.slane %v4206, 2
      %v4208 = vrot.slane %v3549, 7
      %v4209 = vrot.slane %v4208, 2
      %v4210 = vrot.slane %v3548, 7
      %v4211 = vrot.slane %v4210, 2
      %v4212 = vrot.slane %v3550, 7
      %v4213 = vrot.slane %v4212, 2
      %v4214 = vrot.slane %v3558, 7
      %v4215 = vrot.slane %v4214, 2
      %v4216 = vrot.slane %v3566, 7
      %v4217 = vrot.slane %v4216, 2
      %v4218 = vrot.slane %v3565, 7
      %v4219 = vrot.slane %v4218, 2
      %v4220 = vrot.slane %v3567, 7
      %v4221 = vrot.slane %v4220, 2
      %v4222 = vrot.slane %v3575, 7
      %v4223 = vrot.slane %v4222, 2
      %v4224 = vrot.slane %v3583, 7
      %v4225 = vrot.slane %v4224, 2
      %v4226 = vrot.slane %v3582, 7
      %v4227 = vrot.slane %v4226, 2
      %v4228 = vrot.slane %v3584, 7
      %v4229 = vrot.slane %v4228, 2
      %v4230 = vrot.slane %v3592, 7
      %v4231 = vrot.slane %v4230, 2
      %v4232 = vrot.slane %v3600, 7
      %v4233 = vrot.slane %v4232, 2
      %v4234 = vrot.slane %v3599, 7
      %v4235 = vrot.slane %v4234, 2
      %v4236 = vrot.slane %v3601, 7
      %v4237 = vrot.slane %v4236, 2
      %v4238 = vrot.slane %v3609, 7
      %v4239 = vrot.slane %v4238, 2
      %v4240 = vrot.slane %v3617, 7
      %v4241 = vrot.slane %v4240, 2
      %v4242 = vrot.slane %v3616, 7
      %v4243 = vrot.slane %v4242, 2
      %v4244 = vrot.slane %v3618, 7
      %v4245 = vrot.slane %v4244, 2
      %v4246 = vrot.slane %v3626, 7
      %v4247 = vrot.slane %v4246, 2
      %v4248 = vrot.slane %v3634, 7
      %v4249 = vrot.slane %v4248, 2
      %v4250 = vrot.slane %v3633, 7
      %v4251 = vrot.slane %v4250, 2
      %v4252 = vrot.slane %v3635, 7
      %v4253 = vrot.slane %v4252, 2
      %v4254 = vrot.slane %v3643, 7
      %v4255 = vrot.slane %v4254, 2
      %v4256 = vrot.slane %v3651, 7
      %v4257 = vrot.slane %v4256, 2
      %v4258 = vrot.slane %v3650, 7
      %v4259 = vrot.slane %v4258, 2
      %v4260 = vrot.slane %v3652, 7
      %v4261 = vrot.slane %v4260, 2
      %v4262 = vrot.slane %v3660, 7
      %v4263 = vrot.slane %v4262, 2
      %v4264 = vrot.slane %v3668, 7
      %v4265 = vrot.slane %v4264, 2
      %v4266 = vrot.slane %v3667, 7
      %v4267 = vrot.slane %v4266, 2
      %v4268 = vrot.slane %v3669, 7
      %v4269 = vrot.slane %v4268, 2
      %v4270 = vrot.slane %v3677, 7
      %v4271 = vrot.slane %v4270, 2
      %v4272 = vrot.slane %v3685, 7
      %v4273 = vrot.slane %v4272, 2
      %v4274 = vrot.slane %v3684, 7
      %v4275 = vrot.slane %v4274, 2
      %v4276 = vrot.slane %v3686, 7
      %v4277 = vrot.slane %v4276, 2
      %v4278 = vrot.slane %v3694, 7
      %v4279 = vrot.slane %v4278, 2
      %v4280 = vrot.slane %v3702, 7
      %v4281 = vrot.slane %v4280, 2
      %v4282 = vrot.slane %v3701, 7
      %v4283 = vrot.slane %v4282, 2
      %v4284 = vrot.slane %v3703, 7
      %v4285 = vrot.slane %v4284, 2
      %v4286 = vrot.slane %v3711, 7
      %v4287 = vrot.slane %v4286, 2
      %v4288 = vrot.slane %v3719, 7
      %v4289 = vrot.slane %v4288, 2
      %v4290 = vrot.slane %v3718, 7
      %v4291 = vrot.slane %v4290, 2
      %v4292 = vrot.slane %v3720, 7
      %v4293 = vrot.slane %v4292, 2
      %v4294 = vrot.slane %v3728, 7
      %v4295 = vrot.slane %v4294, 2
      %v4296 = vrot.slane %v3736, 7
      %v4297 = vrot.slane %v4296, 2
      %v4298 = vrot.slane %v3735, 7
      %v4299 = vrot.slane %v4298, 2
      %v4300 = vrot.slane %v3737, 7
      %v4301 = vrot.slane %v4300, 2
      %v4302 = vrot.slane %v3745, 7
      %v4303 = vrot.slane %v4302, 2
      %v4304 = vrot.slane %v3753, 7
      %v4305 = vrot.slane %v4304, 2
      %v4306 = vrot.slane %v3752, 7
      %v4307 = vrot.slane %v4306, 2
      %v4308 = vrot.slane %v3754, 7
      %v4309 = vrot.slane %v4308, 2
      %v4310 = vrot.slane %v3762, 7
      %v4311 = vrot.slane %v4310, 2
      %v4312 = vrot.slane %v3770, 7
      %v4313 = vrot.slane %v4312, 2
      %v4314 = vrot.slane %v3769, 7
      %v4315 = vrot.slane %v4314, 2
      %v4316 = vrot.slane %v3771, 7
      %v4317 = vrot.slane %v4316, 2
      %v4318 = vrot.slane %v3779, 7
      %v4319 = vrot.slane %v4318, 2
      %v4320 = vrot.slane %v3787, 7
      %v4321 = vrot.slane %v4320, 2
      %v4322 = vrot.slane %v3786, 7
      %v4323 = vrot.slane %v4322, 2
      %v4324 = vrot.slane %v3788, 7
      %v4325 = vrot.slane %v4324, 2
      %v4326 = vrot.slane %v3796, 7
      %v4327 = vrot.slane %v4326, 2
      %v4328 = vrot.slane %v3804, 7
      %v4329 = vrot.slane %v4328, 2
      %v4330 = vrot.slane %v3803, 7
      %v4331 = vrot.slane %v4330, 2
      %v4332 = vrot.slane %v3805, 7
      %v4333 = vrot.slane %v4332, 2
      %v4334 = vrot.slane %v3813, 7
      %v4335 = vrot.slane %v4334, 2
      %v4336 = vrot.slane %v3821, 7
      %v4337 = vrot.slane %v4336, 2
      %v4338 = vrot.slane %v3820, 7
      %v4339 = vrot.slane %v4338, 2
      %v4340 = vrot.slane %v3822, 7
      %v4341 = vrot.slane %v4340, 2
      %v4342 = vrot.slane %v3830, 7
      %v4343 = vrot.slane %v4342, 2
      %v4344 = vrot.slane %v3838, 7
      %v4345 = vrot.slane %v4344, 2
      %v4346 = vrot.slane %v3837, 7
      %v4347 = vrot.slane %v4346, 2
      %v4348 = vrot.slane %v3839, 7
      %v4349 = vrot.slane %v4348, 2
      %v4350 = vrot.slane %v3847, 7
      %v4351 = vrot.slane %v4350, 2
      %v4352 = vrot.slane %v3855, 7
      %v4353 = vrot.slane %v4352, 2
      %v4354 = vrot.slane %v3854, 7
      %v4355 = vrot.slane %v4354, 2
      %v4356 = vrot.slane %v3856, 7
      %v4357 = vrot.slane %v4356, 2
      %v4358 = vrot.slane %v3864, 7
      %v4359 = vrot.slane %v4358, 2
      %v4360 = vrot.slane %v3872, 7
      %v4361 = vrot.slane %v4360, 2
      %v4362 = vrot.slane %v3871, 7
      %v4363 = vrot.slane %v4362, 2
      %v4364 = vrot.slane %v3873, 7
      %v4365 = vrot.slane %v4364, 2
      %v4366 = vrot.slane %v3881, 7
      %v4367 = vrot.slane %v4366, 2
      %v4368 = vrot.slane %v3889, 7
      %v4369 = vrot.slane %v4368, 2
      %v4370 = vrot.slane %v3888, 7
      %v4371 = vrot.slane %v4370, 2
      %v4372 = vrot.slane %v3890, 7
      %v4373 = vrot.slane %v4372, 2
      %v4374 = vrot.slane %v3898, 7
      %v4375 = vrot.slane %v4374, 2
      %v4376 = vrot.slane %v3906, 7
      %v4377 = vrot.slane %v4376, 2
      %v4378 = vrot.slane %v3905, 7
      %v4379 = vrot.slane %v4378, 2
      %v4380 = vrot.slane %v3907, 7
      %v4381 = vrot.slane %v4380, 2
      %v4382 = vrot.slane %v3915, 7
      %v4383 = vrot.slane %v4382, 2
      %v4384 = vrot.slane %v3923, 7
      %v4385 = vrot.slane %v4384, 2
      %v4386 = vrot.slane %v3922, 7
      %v4387 = vrot.slane %v4386, 2
      %v4388 = vrot.slane %v3924, 7
      %v4389 = vrot.slane %v4388, 2
      %v4390 = vrot.slane %v3932, 7
      %v4391 = vrot.slane %v4390, 2
      %v4392 = vrot.slane %v3940, 7
      %v4393 = vrot.slane %v4392, 2
      %v4394 = vrot.slane %v3939, 7
      %v4395 = vrot.slane %v4394, 2
      %v4396 = vrot.slane %v3941, 7
      %v4397 = vrot.slane %v4396, 2
      %v4398 = vrot.slane %v3949, 7
      %v4399 = vrot.slane %v4398, 2
      %v4400 = vrot.slane %v3957, 7
      %v4401 = vrot.slane %v4400, 2
      %v4402 = vrot.slane %v3956, 7
      %v4403 = vrot.slane %v4402, 2
      %v4404 = vrot.slane %v3958, 7
      %v4405 = vrot.slane %v4404, 2
      %v4406 = vrot.slane %v3966, 7
      %v4407 = vrot.slane %v4406, 2
      %v4408 = vrot.slane %v3974, 7
      %v4409 = vrot.slane %v4408, 2
      %v4410 = vrot.slane %v3973, 7
      %v4411 = vrot.slane %v4410, 2
      %v4412 = vrot.slane %v3975, 7
      %v4413 = vrot.slane %v4412, 2
      %v4414 = vrot.slane %v3983, 7
      %v4415 = vrot.slane %v4414, 2
      %v4416 = vrot.slane %v3991, 7
      %v4417 = vrot.slane %v4416, 2
      %v4418 = vrot.slane %v3990, 7
      %v4419 = vrot.slane %v4418, 2
      %v4420 = vrot.slane %v3992, 7
      %v4421 = vrot.slane %v4420, 2
      %v4422 = vrot.slane %v4000, 7
      %v4423 = vrot.slane %v4422, 2
      %v4424 = vrot.slane %v4008, 7
      %v4425 = vrot.slane %v4424, 2
      %v4426 = vrot.slane %v4007, 7
      %v4427 = vrot.slane %v4426, 2
      %v4428 = vrot.slane %v4009, 7
      %v4429 = vrot.slane %v4428, 2
      %v4430 = vrot.slane %v4017, 7
      %v4431 = vrot.slane %v4430, 2
      %v4432 = vrot.slane %v4025, 7
      %v4433 = vrot.slane %v4432, 2
      %v4434 = vrot.slane %v4024, 7
      %v4435 = vrot.slane %v4434, 2
      %v4436 = vrot.slane %v4026, 7
      %v4437 = vrot.slane %v4436, 2
      %v4438 = vrot.slane %v4034, 7
      %v4439 = vrot.slane %v4438, 2
      %v4440 = vrot.slane %v4042, 7
      %v4441 = vrot.slane %v4440, 2
      %v4442 = vrot.slane %v4041, 7
      %v4443 = vrot.slane %v4442, 2
      %v4444 = vrot.slane %v4043, 7
      %v4445 = vrot.slane %v4444, 2
      %v4446 = vrot.slane %v4051, 7
      %v4447 = vrot.slane %v4446, 2
      %v4448 = vrot.slane %v4059, 7
      %v4449 = vrot.slane %v4448, 2
      %v4450 = vrot.slane %v4058, 7
      %v4451 = vrot.slane %v4450, 2
      %v4452 = vrot.slane %v4060, 7
      %v4453 = vrot.slane %v4452, 2
      %v4454 = vrot.slane %v4068, 7
      %v4455 = vrot.slane %v4454, 2
      %v4456 = vrot.slane %v4076, 7
      %v4457 = vrot.slane %v4456, 2
      %v4458 = vrot.slane %v4075, 7
      %v4459 = vrot.slane %v4458, 2
      %v4460 = vrot.slane %v4077, 7
      %v4461 = vrot.slane %v4460, 2
      %v4590 = vmax.f32 %v3541, %v4207
      %v4591 = vmax.f32 %v3549, %v4209
      %v4592 = vmax.f32 %v3548, %v4211
      %v4593 = vmax.f32 %v3550, %v4213
      %v4594 = vmax.f32 %v3558, %v4215
      %v4595 = vmax.f32 %v3566, %v4217
      %v4596 = vmax.f32 %v3565, %v4219
      %v4597 = vmax.f32 %v3567, %v4221
      %v4598 = vmax.f32 %v3575, %v4223
      %v4599 = vmax.f32 %v3583, %v4225
      %v4600 = vmax.f32 %v3582, %v4227
      %v4601 = vmax.f32 %v3584, %v4229
      %v4602 = vmax.f32 %v3592, %v4231
      %v4603 = vmax.f32 %v3600, %v4233
      %v4604 = vmax.f32 %v3599, %v4235
      %v4605 = vmax.f32 %v3601, %v4237
      %v4606 = vmax.f32 %v3609, %v4239
      %v4607 = vmax.f32 %v3617, %v4241
      %v4608 = vmax.f32 %v3616, %v4243
      %v4609 = vmax.f32 %v3618, %v4245
      %v4610 = vmax.f32 %v3626, %v4247
      %v4611 = vmax.f32 %v3634, %v4249
      %v4612 = vmax.f32 %v3633, %v4251
      %v4613 = vmax.f32 %v3635, %v4253
      %v4614 = vmax.f32 %v3643, %v4255
      %v4615 = vmax.f32 %v3651, %v4257
      %v4616 = vmax.f32 %v3650, %v4259
      %v4617 = vmax.f32 %v3652, %v4261
      %v4618 = vmax.f32 %v3660, %v4263
      %v4619 = vmax.f32 %v3668, %v4265
      %v4620 = vmax.f32 %v3667, %v4267
      %v4621 = vmax.f32 %v3669, %v4269
      %v4622 = vmax.f32 %v3677, %v4271
      %v4623 = vmax.f32 %v3685, %v4273
      %v4624 = vmax.f32 %v3684, %v4275
      %v4625 = vmax.f32 %v3686, %v4277
      %v4626 = vmax.f32 %v3694, %v4279
      %v4627 = vmax.f32 %v3702, %v4281
      %v4628 = vmax.f32 %v3701, %v4283
      %v4629 = vmax.f32 %v3703, %v4285
      %v4630 = vmax.f32 %v3711, %v4287
      %v4631 = vmax.f32 %v3719, %v4289
      %v4632 = vmax.f32 %v3718, %v4291
      %v4633 = vmax.f32 %v3720, %v4293
      %v4634 = vmax.f32 %v3728, %v4295
      %v4635 = vmax.f32 %v3736, %v4297
      %v4636 = vmax.f32 %v3735, %v4299
      %v4637 = vmax.f32 %v3737, %v4301
      %v4638 = vmax.f32 %v3745, %v4303
      %v4639 = vmax.f32 %v3753, %v4305
      %v4640 = vmax.f32 %v3752, %v4307
      %v4641 = vmax.f32 %v3754, %v4309
      %v4642 = vmax.f32 %v3762, %v4311
      %v4643 = vmax.f32 %v3770, %v4313
      %v4644 = vmax.f32 %v3769, %v4315
      %v4645 = vmax.f32 %v3771, %v4317
      %v4646 = vmax.f32 %v3779, %v4319
      %v4647 = vmax.f32 %v3787, %v4321
      %v4648 = vmax.f32 %v3786, %v4323
      %v4649 = vmax.f32 %v3788, %v4325
      %v4650 = vmax.f32 %v3796, %v4327
      %v4651 = vmax.f32 %v3804, %v4329
      %v4652 = vmax.f32 %v3803, %v4331
      %v4653 = vmax.f32 %v3805, %v4333
      %v4654 = vmax.f32 %v3813, %v4335
      %v4655 = vmax.f32 %v3821, %v4337
      %v4656 = vmax.f32 %v3820, %v4339
      %v4657 = vmax.f32 %v3822, %v4341
      %v4658 = vmax.f32 %v3830, %v4343
      %v4659 = vmax.f32 %v3838, %v4345
      %v4660 = vmax.f32 %v3837, %v4347
      %v4661 = vmax.f32 %v3839, %v4349
      %v4662 = vmax.f32 %v3847, %v4351
      %v4663 = vmax.f32 %v3855, %v4353
      %v4664 = vmax.f32 %v3854, %v4355
      %v4665 = vmax.f32 %v3856, %v4357
      %v4666 = vmax.f32 %v3864, %v4359
      %v4667 = vmax.f32 %v3872, %v4361
      %v4668 = vmax.f32 %v3871, %v4363
      %v4669 = vmax.f32 %v3873, %v4365
      %v4670 = vmax.f32 %v3881, %v4367
      %v4671 = vmax.f32 %v3889, %v4369
      %v4672 = vmax.f32 %v3888, %v4371
      %v4673 = vmax.f32 %v3890, %v4373
      %v4674 = vmax.f32 %v3898, %v4375
      %v4675 = vmax.f32 %v3906, %v4377
      %v4676 = vmax.f32 %v3905, %v4379
      %v4677 = vmax.f32 %v3907, %v4381
      %v4678 = vmax.f32 %v3915, %v4383
      %v4679 = vmax.f32 %v3923, %v4385
      %v4680 = vmax.f32 %v3922, %v4387
      %v4681 = vmax.f32 %v3924, %v4389
      %v4682 = vmax.f32 %v3932, %v4391
      %v4683 = vmax.f32 %v3940, %v4393
      %v4684 = vmax.f32 %v3939, %v4395
      %v4685 = vmax.f32 %v3941, %v4397
      %v4686 = vmax.f32 %v3949, %v4399
      %v4687 = vmax.f32 %v3957, %v4401
      %v4688 = vmax.f32 %v3956, %v4403
      %v4689 = vmax.f32 %v3958, %v4405
      %v4690 = vmax.f32 %v3966, %v4407
      %v4691 = vmax.f32 %v3974, %v4409
      %v4692 = vmax.f32 %v3973, %v4411
      %v4693 = vmax.f32 %v3975, %v4413
      %v4694 = vmax.f32 %v3983, %v4415
      %v4695 = vmax.f32 %v3991, %v4417
      %v4696 = vmax.f32 %v3990, %v4419
      %v4697 = vmax.f32 %v3992, %v4421
      %v4698 = vmax.f32 %v4000, %v4423
      %v4699 = vmax.f32 %v4008, %v4425
      %v4700 = vmax.f32 %v4007, %v4427
      %v4701 = vmax.f32 %v4009, %v4429
      %v4702 = vmax.f32 %v4017, %v4431
      %v4703 = vmax.f32 %v4025, %v4433
      %v4704 = vmax.f32 %v4024, %v4435
      %v4705 = vmax.f32 %v4026, %v4437
      %v4706 = vmax.f32 %v4034, %v4439
      %v4707 = vmax.f32 %v4042, %v4441
      %v4708 = vmax.f32 %v4041, %v4443
      %v4709 = vmax.f32 %v4043, %v4445
      %v4710 = vmax.f32 %v4051, %v4447
      %v4711 = vmax.f32 %v4059, %v4449
      %v4712 = vmax.f32 %v4058, %v4451
      %v4713 = vmax.f32 %v4060, %v4453
      %v4714 = vmax.f32 %v4068, %v4455
      %v4715 = vmax.f32 %v4076, %v4457
      %v4716 = vmax.f32 %v4075, %v4459
      %v4717 = vmax.f32 %v4077, %v4461
      %v4718 = vmax.f32 %v4590, %v4598
      %v4719 = vmax.f32 %v4591, %v4599
      %v4720 = vmax.f32 %v4592, %v4600
      %v4721 = vmax.f32 %v4593, %v4601
      %v4722 = vmax.f32 %v4594, %v4602
      %v4723 = vmax.f32 %v4595, %v4603
      %v4724 = vmax.f32 %v4596, %v4604
      %v4725 = vmax.f32 %v4597, %v4605
      %v4726 = vmax.f32 %v4606, %v4614
      %v4727 = vmax.f32 %v4607, %v4615
      %v4728 = vmax.f32 %v4608, %v4616
      %v4729 = vmax.f32 %v4609, %v4617
      %v4730 = vmax.f32 %v4610, %v4618
      %v4731 = vmax.f32 %v4611, %v4619
      %v4732 = vmax.f32 %v4612, %v4620
      %v4733 = vmax.f32 %v4613, %v4621
      %v4734 = vmax.f32 %v4622, %v4630
      %v4735 = vmax.f32 %v4623, %v4631
      %v4736 = vmax.f32 %v4624, %v4632
      %v4737 = vmax.f32 %v4625, %v4633
      %v4738 = vmax.f32 %v4626, %v4634
      %v4739 = vmax.f32 %v4627, %v4635
      %v4740 = vmax.f32 %v4628, %v4636
      %v4741 = vmax.f32 %v4629, %v4637
      %v4742 = vmax.f32 %v4638, %v4646
      %v4743 = vmax.f32 %v4639, %v4647
      %v4744 = vmax.f32 %v4640, %v4648
      %v4745 = vmax.f32 %v4641, %v4649
      %v4746 = vmax.f32 %v4642, %v4650
      %v4747 = vmax.f32 %v4643, %v4651
      %v4748 = vmax.f32 %v4644, %v4652
      %v4749 = vmax.f32 %v4645, %v4653
      %v4750 = vmax.f32 %v4654, %v4662
      %v4751 = vmax.f32 %v4655, %v4663
      %v4752 = vmax.f32 %v4656, %v4664
      %v4753 = vmax.f32 %v4657, %v4665
      %v4754 = vmax.f32 %v4658, %v4666
      %v4755 = vmax.f32 %v4659, %v4667
      %v4756 = vmax.f32 %v4660, %v4668
      %v4757 = vmax.f32 %v4661, %v4669
      %v4758 = vmax.f32 %v4670, %v4678
      %v4759 = vmax.f32 %v4671, %v4679
      %v4760 = vmax.f32 %v4672, %v4680
      %v4761 = vmax.f32 %v4673, %v4681
      %v4762 = vmax.f32 %v4674, %v4682
      %v4763 = vmax.f32 %v4675, %v4683
      %v4764 = vmax.f32 %v4676, %v4684
      %v4765 = vmax.f32 %v4677, %v4685
      %v4766 = vmax.f32 %v4686, %v4694
      %v4767 = vmax.f32 %v4687, %v4695
      %v4768 = vmax.f32 %v4688, %v4696
      %v4769 = vmax.f32 %v4689, %v4697
      %v4770 = vmax.f32 %v4690, %v4698
      %v4771 = vmax.f32 %v4691, %v4699
      %v4772 = vmax.f32 %v4692, %v4700
      %v4773 = vmax.f32 %v4693, %v4701
      %v4774 = vmax.f32 %v4702, %v4710
      %v4775 = vmax.f32 %v4703, %v4711
      %v4776 = vmax.f32 %v4704, %v4712
      %v4777 = vmax.f32 %v4705, %v4713
      %v4778 = vmax.f32 %v4706, %v4714
      %v4779 = vmax.f32 %v4707, %v4715
      %v4780 = vmax.f32 %v4708, %v4716
      %v4781 = vmax.f32 %v4709, %v4717
      %v4846 = vlaneseq
      %v4847 = vshrl.u32 %v4846, 7
      %v4848 = vsub.s32 0, %v4847
      %v4849 = vrot.slane %v4718, %v4848
      %v4850 = vlaneseq
      %v4851 = vshrl.u32 %v4850, 7
      %v4852 = vsub.s32 0, %v4851
      %v4853 = vrot.slane %v4719, %v4852
      %v4854 = vlaneseq
      %v4855 = vshrl.u32 %v4854, 7
      %v4856 = vsub.s32 0, %v4855
      %v4857 = vrot.slane %v4720, %v4856
      %v4858 = vlaneseq
      %v4859 = vshrl.u32 %v4858, 7
      %v4860 = vsub.s32 0, %v4859
      %v4861 = vrot.slane %v4721, %v4860
      %v4862 = vlaneseq
      %v4863 = vshrl.u32 %v4862, 7
      %v4864 = vsub.s32 0, %v4863
      %v4865 = vrot.slane %v4722, %v4864
      %v4866 = vlaneseq
      %v4867 = vshrl.u32 %v4866, 7
      %v4868 = vsub.s32 0, %v4867
      %v4869 = vrot.slane %v4723, %v4868
      %v4870 = vlaneseq
      %v4871 = vshrl.u32 %v4870, 7
      %v4872 = vsub.s32 0, %v4871
      %v4873 = vrot.slane %v4724, %v4872
      %v4874 = vlaneseq
      %v4875 = vshrl.u32 %v4874, 7
      %v4876 = vsub.s32 0, %v4875
      %v4877 = vrot.slane %v4725, %v4876
      %v4878 = vlaneseq
      %v4879 = vshrl.u32 %v4878, 7
      %v4880 = vsub.s32 0, %v4879
      %v4881 = vrot.slane %v4726, %v4880
      %v4882 = vlaneseq
      %v4883 = vshrl.u32 %v4882, 7
      %v4884 = vsub.s32 0, %v4883
      %v4885 = vrot.slane %v4727, %v4884
      %v4886 = vlaneseq
      %v4887 = vshrl.u32 %v4886, 7
      %v4888 = vsub.s32 0, %v4887
      %v4889 = vrot.slane %v4728, %v4888
      %v4890 = vlaneseq
      %v4891 = vshrl.u32 %v4890, 7
      %v4892 = vsub.s32 0, %v4891
      %v4893 = vrot.slane %v4729, %v4892
      %v4894 = vlaneseq
      %v4895 = vshrl.u32 %v4894, 7
      %v4896 = vsub.s32 0, %v4895
      %v4897 = vrot.slane %v4730, %v4896
      %v4898 = vlaneseq
      %v4899 = vshrl.u32 %v4898, 7
      %v4900 = vsub.s32 0, %v4899
      %v4901 = vrot.slane %v4731, %v4900
      %v4902 = vlaneseq
      %v4903 = vshrl.u32 %v4902, 7
      %v4904 = vsub.s32 0, %v4903
      %v4905 = vrot.slane %v4732, %v4904
      %v4906 = vlaneseq
      %v4907 = vshrl.u32 %v4906, 7
      %v4908 = vsub.s32 0, %v4907
      %v4909 = vrot.slane %v4733, %v4908
      %v4910 = vlaneseq
      %v4911 = vshrl.u32 %v4910, 7
      %v4912 = vsub.s32 0, %v4911
      %v4913 = vrot.slane %v4734, %v4912
      %v4914 = vlaneseq
      %v4915 = vshrl.u32 %v4914, 7
      %v4916 = vsub.s32 0, %v4915
      %v4917 = vrot.slane %v4735, %v4916
      %v4918 = vlaneseq
      %v4919 = vshrl.u32 %v4918, 7
      %v4920 = vsub.s32 0, %v4919
      %v4921 = vrot.slane %v4736, %v4920
      %v4922 = vlaneseq
      %v4923 = vshrl.u32 %v4922, 7
      %v4924 = vsub.s32 0, %v4923
      %v4925 = vrot.slane %v4737, %v4924
      %v4926 = vlaneseq
      %v4927 = vshrl.u32 %v4926, 7
      %v4928 = vsub.s32 0, %v4927
      %v4929 = vrot.slane %v4738, %v4928
      %v4930 = vlaneseq
      %v4931 = vshrl.u32 %v4930, 7
      %v4932 = vsub.s32 0, %v4931
      %v4933 = vrot.slane %v4739, %v4932
      %v4934 = vlaneseq
      %v4935 = vshrl.u32 %v4934, 7
      %v4936 = vsub.s32 0, %v4935
      %v4937 = vrot.slane %v4740, %v4936
      %v4938 = vlaneseq
      %v4939 = vshrl.u32 %v4938, 7
      %v4940 = vsub.s32 0, %v4939
      %v4941 = vrot.slane %v4741, %v4940
      %v4942 = vlaneseq
      %v4943 = vshrl.u32 %v4942, 7
      %v4944 = vsub.s32 0, %v4943
      %v4945 = vrot.slane %v4742, %v4944
      %v4946 = vlaneseq
      %v4947 = vshrl.u32 %v4946, 7
      %v4948 = vsub.s32 0, %v4947
      %v4949 = vrot.slane %v4743, %v4948
      %v4950 = vlaneseq
      %v4951 = vshrl.u32 %v4950, 7
      %v4952 = vsub.s32 0, %v4951
      %v4953 = vrot.slane %v4744, %v4952
      %v4954 = vlaneseq
      %v4955 = vshrl.u32 %v4954, 7
      %v4956 = vsub.s32 0, %v4955
      %v4957 = vrot.slane %v4745, %v4956
      %v4958 = vlaneseq
      %v4959 = vshrl.u32 %v4958, 7
      %v4960 = vsub.s32 0, %v4959
      %v4961 = vrot.slane %v4746, %v4960
      %v4962 = vlaneseq
      %v4963 = vshrl.u32 %v4962, 7
      %v4964 = vsub.s32 0, %v4963
      %v4965 = vrot.slane %v4747, %v4964
      %v4966 = vlaneseq
      %v4967 = vshrl.u32 %v4966, 7
      %v4968 = vsub.s32 0, %v4967
      %v4969 = vrot.slane %v4748, %v4968
      %v4970 = vlaneseq
      %v4971 = vshrl.u32 %v4970, 7
      %v4972 = vsub.s32 0, %v4971
      %v4973 = vrot.slane %v4749, %v4972
      %v4974 = vlaneseq
      %v4975 = vshrl.u32 %v4974, 7
      %v4976 = vsub.s32 0, %v4975
      %v4977 = vrot.slane %v4750, %v4976
      %v4978 = vlaneseq
      %v4979 = vshrl.u32 %v4978, 7
      %v4980 = vsub.s32 0, %v4979
      %v4981 = vrot.slane %v4751, %v4980
      %v4982 = vlaneseq
      %v4983 = vshrl.u32 %v4982, 7
      %v4984 = vsub.s32 0, %v4983
      %v4985 = vrot.slane %v4752, %v4984
      %v4986 = vlaneseq
      %v4987 = vshrl.u32 %v4986, 7
      %v4988 = vsub.s32 0, %v4987
      %v4989 = vrot.slane %v4753, %v4988
      %v4990 = vlaneseq
      %v4991 = vshrl.u32 %v4990, 7
      %v4992 = vsub.s32 0, %v4991
      %v4993 = vrot.slane %v4754, %v4992
      %v4994 = vlaneseq
      %v4995 = vshrl.u32 %v4994, 7
      %v4996 = vsub.s32 0, %v4995
      %v4997 = vrot.slane %v4755, %v4996
      %v4998 = vlaneseq
      %v4999 = vshrl.u32 %v4998, 7
      %v5000 = vsub.s32 0, %v4999
      %v5001 = vrot.slane %v4756, %v5000
      %v5002 = vlaneseq
      %v5003 = vshrl.u32 %v5002, 7
      %v5004 = vsub.s32 0, %v5003
      %v5005 = vrot.slane %v4757, %v5004
      %v5006 = vlaneseq
      %v5007 = vshrl.u32 %v5006, 7
      %v5008 = vsub.s32 0, %v5007
      %v5009 = vrot.slane %v4758, %v5008
      %v5010 = vlaneseq
      %v5011 = vshrl.u32 %v5010, 7
      %v5012 = vsub.s32 0, %v5011
      %v5013 = vrot.slane %v4759, %v5012
      %v5014 = vlaneseq
      %v5015 = vshrl.u32 %v5014, 7
      %v5016 = vsub.s32 0, %v5015
      %v5017 = vrot.slane %v4760, %v5016
      %v5018 = vlaneseq
      %v5019 = vshrl.u32 %v5018, 7
      %v5020 = vsub.s32 0, %v5019
      %v5021 = vrot.slane %v4761, %v5020
      %v5022 = vlaneseq
      %v5023 = vshrl.u32 %v5022, 7
      %v5024 = vsub.s32 0, %v5023
      %v5025 = vrot.slane %v4762, %v5024
      %v5026 = vlaneseq
      %v5027 = vshrl.u32 %v5026, 7
      %v5028 = vsub.s32 0, %v5027
      %v5029 = vrot.slane %v4763, %v5028
      %v5030 = vlaneseq
      %v5031 = vshrl.u32 %v5030, 7
      %v5032 = vsub.s32 0, %v5031
      %v5033 = vrot.slane %v4764, %v5032
      %v5034 = vlaneseq
      %v5035 = vshrl.u32 %v5034, 7
      %v5036 = vsub.s32 0, %v5035
      %v5037 = vrot.slane %v4765, %v5036
      %v5038 = vlaneseq
      %v5039 = vshrl.u32 %v5038, 7
      %v5040 = vsub.s32 0, %v5039
      %v5041 = vrot.slane %v4766, %v5040
      %v5042 = vlaneseq
      %v5043 = vshrl.u32 %v5042, 7
      %v5044 = vsub.s32 0, %v5043
      %v5045 = vrot.slane %v4767, %v5044
      %v5046 = vlaneseq
      %v5047 = vshrl.u32 %v5046, 7
      %v5048 = vsub.s32 0, %v5047
      %v5049 = vrot.slane %v4768, %v5048
      %v5050 = vlaneseq
      %v5051 = vshrl.u32 %v5050, 7
      %v5052 = vsub.s32 0, %v5051
      %v5053 = vrot.slane %v4769, %v5052
      %v5054 = vlaneseq
      %v5055 = vshrl.u32 %v5054, 7
      %v5056 = vsub.s32 0, %v5055
      %v5057 = vrot.slane %v4770, %v5056
      %v5058 = vlaneseq
      %v5059 = vshrl.u32 %v5058, 7
      %v5060 = vsub.s32 0, %v5059
      %v5061 = vrot.slane %v4771, %v5060
      %v5062 = vlaneseq
      %v5063 = vshrl.u32 %v5062, 7
      %v5064 = vsub.s32 0, %v5063
      %v5065 = vrot.slane %v4772, %v5064
      %v5066 = vlaneseq
      %v5067 = vshrl.u32 %v5066, 7
      %v5068 = vsub.s32 0, %v5067
      %v5069 = vrot.slane %v4773, %v5068
      %v5070 = vlaneseq
      %v5071 = vshrl.u32 %v5070, 7
      %v5072 = vsub.s32 0, %v5071
      %v5073 = vrot.slane %v4774, %v5072
      %v5074 = vlaneseq
      %v5075 = vshrl.u32 %v5074, 7
      %v5076 = vsub.s32 0, %v5075
      %v5077 = vrot.slane %v4775, %v5076
      %v5078 = vlaneseq
      %v5079 = vshrl.u32 %v5078, 7
      %v5080 = vsub.s32 0, %v5079
      %v5081 = vrot.slane %v4776, %v5080
      %v5082 = vlaneseq
      %v5083 = vshrl.u32 %v5082, 7
      %v5084 = vsub.s32 0, %v5083
      %v5085 = vrot.slane %v4777, %v5084
      %v5086 = vlaneseq
      %v5087 = vshrl.u32 %v5086, 7
      %v5088 = vsub.s32 0, %v5087
      %v5089 = vrot.slane %v4778, %v5088
      %v5090 = vlaneseq
      %v5091 = vshrl.u32 %v5090, 7
      %v5092 = vsub.s32 0, %v5091
      %v5093 = vrot.slane %v4779, %v5092
      %v5094 = vlaneseq
      %v5095 = vshrl.u32 %v5094, 7
      %v5096 = vsub.s32 0, %v5095
      %v5097 = vrot.slane %v4780, %v5096
      %v5098 = vlaneseq
      %v5099 = vshrl.u32 %v5098, 7
      %v5100 = vsub.s32 0, %v5099
      %v5101 = vrot.slane %v4781, %v5100
      %vm5102 = vcmask 1041409
      %v5103 = vsel %vm5102, %v4853, %v4849
      %vm5104 = vcmask 1042434
      %v5105 = vsel %vm5104, %v4857, %v5103
      %vm5106 = vcmask 1043459
      %v5107 = vsel %vm5106, %v4861, %v5105
      %vm5108 = vcmask 1044484
      %v5109 = vsel %vm5108, %v4865, %v5107
      %vm5110 = vcmask 1045509
      %v5111 = vsel %vm5110, %v4869, %v5109
      %vm5112 = vcmask 1046534
      %v5113 = vsel %vm5112, %v4873, %v5111
      %vm5114 = vcmask 1047559
      %v5115 = vsel %vm5114, %v4877, %v5113
      %v5116 = vsel %vm5102, %v4885, %v4881
      %v5117 = vsel %vm5104, %v4889, %v5116
      %v5118 = vsel %vm5106, %v4893, %v5117
      %v5119 = vsel %vm5108, %v4897, %v5118
      %v5120 = vsel %vm5110, %v4901, %v5119
      %v5121 = vsel %vm5112, %v4905, %v5120
      %v5122 = vsel %vm5114, %v4909, %v5121
      %v5123 = vsel %vm5102, %v4917, %v4913
      %v5124 = vsel %vm5104, %v4921, %v5123
      %v5125 = vsel %vm5106, %v4925, %v5124
      %v5126 = vsel %vm5108, %v4929, %v5125
      %v5127 = vsel %vm5110, %v4933, %v5126
      %v5128 = vsel %vm5112, %v4937, %v5127
      %v5129 = vsel %vm5114, %v4941, %v5128
      %v5130 = vsel %vm5102, %v4949, %v4945
      %v5131 = vsel %vm5104, %v4953, %v5130
      %v5132 = vsel %vm5106, %v4957, %v5131
      %v5133 = vsel %vm5108, %v4961, %v5132
      %v5134 = vsel %vm5110, %v4965, %v5133
      %v5135 = vsel %vm5112, %v4969, %v5134
      %v5136 = vsel %vm5114, %v4973, %v5135
      %v5137 = vsel %vm5102, %v4981, %v4977
      %v5138 = vsel %vm5104, %v4985, %v5137
      %v5139 = vsel %vm5106, %v4989, %v5138
      %v5140 = vsel %vm5108, %v4993, %v5139
      %v5141 = vsel %vm5110, %v4997, %v5140
      %v5142 = vsel %vm5112, %v5001, %v5141
      %v5143 = vsel %vm5114, %v5005, %v5142
      %v5144 = vsel %vm5102, %v5013, %v5009
      %v5145 = vsel %vm5104, %v5017, %v5144
      %v5146 = vsel %vm5106, %v5021, %v5145
      %v5147 = vsel %vm5108, %v5025, %v5146
      %v5148 = vsel %vm5110, %v5029, %v5147
      %v5149 = vsel %vm5112, %v5033, %v5148
      %v5150 = vsel %vm5114, %v5037, %v5149
      %v5151 = vsel %vm5102, %v5045, %v5041
      %v5152 = vsel %vm5104, %v5049, %v5151
      %v5153 = vsel %vm5106, %v5053, %v5152
      %v5154 = vsel %vm5108, %v5057, %v5153
      %v5155 = vsel %vm5110, %v5061, %v5154
      %v5156 = vsel %vm5112, %v5065, %v5155
      %v5157 = vsel %vm5114, %v5069, %v5156
      %v5158 = vsel %vm5102, %v5077, %v5073
      %v5159 = vsel %vm5104, %v5081, %v5158
      %v5160 = vsel %vm5106, %v5085, %v5159
      %v5161 = vsel %vm5108, %v5089, %v5160
      %v5162 = vsel %vm5110, %v5093, %v5161
      %v5163 = vsel %vm5112, %v5097, %v5162
      %v5164 = vsel %vm5114, %v5101, %v5163
      %5173 = vst [vmem:[%s170] sm:$0xff] %v5115
      %5174 = vst [vmem:[%s170 + $0x8] sm:$0xff] %v5122
      %5175 = vst [vmem:[%s170 + $0x10] sm:$0xff] %v5129
      %5176 = vst [vmem:[%s170 + $0x18] sm:$0xff] %v5136
      %5177 = vst [vmem:[%s170 + $0x20] sm:$0xff] %v5143
      %5178 = vst [vmem:[%s170 + $0x28] sm:$0xff] %v5150
      %5179 = vst [vmem:[%s170 + $0x30] sm:$0xff] %v5157
      %5180 = vst [vmem:[%s170 + $0x38] sm:$0xff] %v5164
      %p5181 = scmp.lt.s32.totalorder %s14, 1
      %s5182 = scalar_select %p5181, %s14, 1
      %s5183 = smul.addr %s5182, 8
      %s5184 = smul.addr %s5183, 8
      %s5185 = scalar_lea.vmem %s3, %s5184
      // Predicated region
      $region33: #{vgg_block_forward.1} parent=31 // pred_check
        %p5186 = pneg %p100
      $region34: #{vgg_block_forward.1} parent=31 // pred_check_branch
        %5188 = sbr.rel (%p5186) target = $region36
      $region35: #{vgg_block_forward.1} parent=31 // pred_region
        _
      $region36: #{vgg_block_forward.1} parent=31 // pred_fallthru
        _
    $region32: #{vgg_block_forward.1} parent=5 // pred_fallthru
      _
    %p5189 = scmp.le.s32.totalorder 2, %s9
    // Predicated region
    $region37: #{vgg_block_forward.1} parent=5 // pred_check
      %p5190 = pneg %p5189
    $region38: #{vgg_block_forward.1} parent=5 // pred_check_branch
      %5192 = sbr.rel (%p5190) target = $region40
    $region39: #{vgg_block_forward.1} parent=5 // pred_region
      %s5193 = ssub.s32 %s9, 2
      // Predicated region
      $region41: #{vgg_block_forward.1} parent=39 // pred_check
        %p5194 = pneg %p106
      $region42: #{vgg_block_forward.1} parent=39 // pred_check_branch
        %5196 = sbr.rel (%p5194) target = $region44
      $region43: #{vgg_block_forward.1} parent=39 // pred_region
        %p5197 = scmp.lt.s32.totalorder %s15, 1
        %s5198 = scalar_select %p5197, %s15, 1
        %s5199 = smul.addr %s5198, 8
        %s5200 = smul.addr %s5199, 8
        %s5201 = scalar_lea.vmem %s3, %s5200
      $region44: #{vgg_block_forward.1} parent=39 // pred_fallthru
        _
    $region40: #{vgg_block_forward.1} parent=5 // pred_fallthru
      _
  $region6: #{vgg_block_forward.1} parent=0 // loop_footer
    %s13 = sadd.s32 1, %s9
  $region7: #{vgg_block_forward.1} parent=0 // loop_footer_branch
    %8 = sbr.rel target = $region3
  $region8: #{vgg_block_forward.1} parent=0 // loop_exit
    _

</llo_original>
